<compile_context>
chip_gen: v6e
topology: v6e:2x2x1
jax: 0.10.0
libtpu: 0.0.40
codegen_flags: <defaults>
</compile_context>

<pallas_src>
import functools

import jax
import jax.numpy as jnp
from jax import lax
from jax.experimental import pallas as pl
from jax.experimental.pallas import tpu as pltpu


def _round_up(v, m):
    return (v + m - 1) // m * m


# ----------------------------------------------------------------------------
# Fused kernel: grid = (nadjs, n_edge_tiles)
#   axis 0: one AttentionAggregator per step (sequential -> shared scratch)
#   axis 1: edge tiles, accumulated into per-aggregator scratch
#   encoder MLP runs fused on the very last grid step
# ----------------------------------------------------------------------------
def _sigat_kernel(xT_ref, x_ref, src_ref, dst_ref, w_ref, bcol_ref, aT_ref,
                  w1_ref, b1_ref, w2_ref, b2_ref,
                  o_ref,
                  nb_ref, embT_ref, asrc_ref,
                  *, f, slope):
    """
    xT_ref   : [Fp, Np] f32   node features, transposed (resident)
    x_ref    : [Np, Fp] f32   node features (encoder only, resident)
    src_ref  : [1, TE]  int32 edge sources for (aggregator i, edge tile t)
    dst_ref  : [1, TE]  int32 edge targets;   padded edges hold index Np (inert)
    w_ref    : [Fp, Fp] f32   out_linear_layer weight, torch [out, in] layout
    bcol_ref : [Fp, 1]  f32   out_linear_layer bias (column)
    aT_ref   : [2, Fp]  f32   attention vector rows [a_src ; a_dst]
    w1_ref   : [nadjs+1, Fp, Fp] encoder layer-1 weight blocks (resident)
    b1_ref   : [1, Fp], w2_ref: [Fp, Dp], b2_ref: [1, Dp]
    o_ref    : [Np, Dp]       final embeddings (written on the last step)
    nb_ref   : [nadjs, Np, Fp] f32  scratch: per-aggregator num (col f = den)
    embT_ref : [Fp, Np] bf16  scratch: emb^T, row Fp-1 = alpha_dst per node
    asrc_ref : [1, Np]  bf16  scratch: alpha_src per node
    """
    i = pl.program_id(0)                 # aggregator index
    t = pl.program_id(1)                 # edge-tile index
    n_et = pl.num_programs(1)
    fp, n_pad = embT_ref.shape
    e_tile = src_ref.shape[1]

    # ---- per-aggregator setup on its first edge tile ------------------------
    @pl.when(t == 0)
    def _():
        # new_emb^T = W @ x^T + b  (torch Linear, transposed orientation)
        embT = jnp.dot(w_ref[...], xT_ref[...],
                       preferred_element_type=jnp.float32) + bcol_ref[...]
        # per-node attention logits: row 0 = <emb, a_src>, row 1 = <emb, a_dst>
        alphas = jnp.dot(aT_ref[...], embT,
                         preferred_element_type=jnp.float32)          # [2, Np]
        # stash alpha_dst into the (zero) spare feature row Fp-1 so the dst
        # gather returns values AND the dst logit in a single MXU pass
        last_row = (lax.broadcasted_iota(jnp.int32, (fp, 1), 0) == fp - 1
                    ).astype(jnp.float32)
        embT_ref[...] = (embT + last_row * alphas[1:2, :]).astype(jnp.bfloat16)
        asrc_ref[...] = alphas[0:1, :].astype(jnp.bfloat16)
        nb_ref[i] = jnp.zeros((n_pad, fp), jnp.float32)

    # ---- edge-tile work ------------------------------------------------------
    srcr = src_ref[...]                                            # [1, TE]
    dstr = dst_ref[...]                                            # [1, TE]
    niota = lax.broadcasted_iota(jnp.int32, (n_pad, e_tile), 0)
    # exact 0/1 indicators in bf16 (fast MXU path); padded edges -> all-zero col
    src_ohT = jnp.where(srcr == niota, 1.0, 0.0).astype(jnp.bfloat16)  # [Np,TE]
    dst_ohT = jnp.where(dstr == niota, 1.0, 0.0).astype(jnp.bfloat16)  # [Np,TE]

    # gather new_emb[dst] (rows < f) and alpha_dst[dst] (row Fp-1) in one pass
    hT = jnp.dot(embT_ref[...], dst_ohT,
                 preferred_element_type=jnp.float32)               # [Fp, TE]
    s_src = jnp.dot(asrc_ref[...], src_ohT,
                    preferred_element_type=jnp.float32)            # [1, TE]

    score = s_src + hT[fp - 1:fp, :]                               # [1, TE]
    score = jnp.where(score > 0, score, slope * score)             # LeakyReLU 0.1
    eh = jnp.exp(score)                                            # as reference

    # denominator rides in spare zero feature row f -> one fused scatter matmul
    den_row = (lax.broadcasted_iota(jnp.int32, (fp, 1), 0) == f
               ).astype(jnp.float32)
    payloadT = (eh * (hT + den_row)).astype(jnp.bfloat16)          # [Fp, TE]

    # scatter-add over source nodes: src_ohT [Np,TE] @ payloadT^T -> [Np,Fp]
    contrib = lax.dot_general(src_ohT, payloadT,
                              dimension_numbers=(((1,), (1,)), ((), ())),
                              preferred_element_type=jnp.float32)
    nb_ref[i] = nb_ref[i] + contrib

    # ---- normalise this aggregator on its last edge tile ---------------------
    @pl.when(t == n_et - 1)
    def _():
        acc = nb_ref[i]
        den = acc[:, f:f + 1]
        nb_ref[i] = acc / (den + 1e-12)        # exact division, eps as reference

    # ---- fused encoder MLP on the very last grid step -------------------------
    @pl.when(jnp.logical_and(i == pl.num_programs(0) - 1, t == n_et - 1))
    def _():
        h = jnp.dot(x_ref[...], w1_ref[0],
                    preferred_element_type=jnp.float32) + b1_ref[...]
        for k in range(nb_ref.shape[0]):
            h = h + jnp.dot(nb_ref[k], w1_ref[k + 1],
                            preferred_element_type=jnp.float32)
        h = jnp.tanh(h)
        o_ref[...] = jnp.dot(h, w2_ref[...],
                             preferred_element_type=jnp.float32) + b2_ref[...]


# ----------------------------------------------------------------------------
# Host wrapper: padding / layout prep + the single fused pallas_call
# ----------------------------------------------------------------------------
def sigat_forward(params, x, pos_edge_index, neg_edge_index, *, e_tile_max=512):
    """SiGAT forward (nadjs = 4).  Returns [N, embedding_dim]."""
    nadjs = len(params["aggs"])
    n, f = x.shape
    d = params["enc"]["w2_t"].shape[1]

    fp = _round_up(f + 1, 128)     # >= f+1: spare column f for the denominator
    dp = _round_up(d, 128)
    n_pad = _round_up(n, 128)      # lane axis of emb^T / MXU contraction dim

    edge_lists = [
        (pos_edge_index[0], pos_edge_index[1]),
        (pos_edge_index[1], pos_edge_index[0]),
        (neg_edge_index[0], neg_edge_index[1]),
        (neg_edge_index[1], neg_edge_index[0]),
    ]
    max_e = max(int(s.shape[0]) for s, _ in edge_lists)
    e_tile = min(e_tile_max, _round_up(max_e, 128))
    e_pad = _round_up(max_e, e_tile)
    n_et = e_pad // e_tile

    # Padded edges get the out-of-range sentinel n_pad -> all-zero one-hot
    # column, so they contribute nothing (no mask array needed).
    src_rows, dst_rows = [], []
    for s_arr, d_arr in edge_lists:
        e = int(s_arr.shape[0])
        src_rows.append(jnp.pad(s_arr.astype(jnp.int32), (0, e_pad - e),
                                constant_values=n_pad).reshape(1, e_pad))
        dst_rows.append(jnp.pad(d_arr.astype(jnp.int32), (0, e_pad - e),
                                constant_values=n_pad).reshape(1, e_pad))
    src_all = jnp.stack(src_rows)          # [nadjs, 1, Ep]
    dst_all = jnp.stack(dst_rows)          # [nadjs, 1, Ep]

    # Zero-pad features / weights to lane width 128 (mathematically exact).
    x32 = x.astype(jnp.float32)
    x_pad = jnp.zeros((n_pad, fp), jnp.float32).at[:n, :f].set(x32)
    xT_pad = jnp.zeros((fp, n_pad), jnp.float32).at[:f, :n].set(x32.T)

    w_all = jnp.zeros((nadjs, fp, fp), jnp.float32)
    bcol_all = jnp.zeros((nadjs, fp, 1), jnp.float32)
    aT_all = jnp.zeros((nadjs, 2, fp), jnp.float32)
    for k, agg in enumerate(params["aggs"]):
        w_all = w_all.at[k, :f, :f].set(agg["w_t"].T)          # torch [out, in]
        bcol_all = bcol_all.at[k, :f, 0].set(agg["b"][0])
        aT_all = aT_all.at[k, 0, :f].set(agg["a"][:f, 0])
        aT_all = aT_all.at[k, 1, :f].set(agg["a"][f:, 0])

    enc = params["enc"]
    w1_blocks = enc["w1_t"].reshape(nadjs + 1, f, f)
    w1_pad = jnp.zeros((nadjs + 1, fp, fp), jnp.float32).at[:, :f, :f].set(w1_blocks)
    b1_pad = jnp.zeros((1, fp), jnp.float32).at[0, :f].set(enc["b1"][0])
    w2_pad = jnp.zeros((fp, dp), jnp.float32).at[:f, :d].set(enc["w2_t"])
    b2_pad = jnp.zeros((1, dp), jnp.float32).at[0, :d].set(enc["b2"][0])

    kernel = functools.partial(_sigat_kernel, f=f, slope=0.1)

    out_pad = pl.pallas_call(
        kernel,
        out_shape=jax.ShapeDtypeStruct((n_pad, dp), jnp.float32),
        grid=(nadjs, n_et),
        in_specs=[
            pl.BlockSpec((fp, n_pad), lambda i, t: (0, 0)),             # x^T
            pl.BlockSpec((n_pad, fp), lambda i, t: (0, 0)),             # x
            pl.BlockSpec((None, 1, e_tile), lambda i, t: (i, 0, t)),    # src row
            pl.BlockSpec((None, 1, e_tile), lambda i, t: (i, 0, t)),    # dst row
            pl.BlockSpec((None, fp, fp), lambda i, t: (i, 0, 0)),       # W_i
            pl.BlockSpec((None, fp, 1), lambda i, t: (i, 0, 0)),        # b_i col
            pl.BlockSpec((None, 2, fp), lambda i, t: (i, 0, 0)),        # [a_src;a_dst]
            pl.BlockSpec((nadjs + 1, fp, fp), lambda i, t: (0, 0, 0)),  # W1 blocks
            pl.BlockSpec((1, fp), lambda i, t: (0, 0)),                 # b1
            pl.BlockSpec((fp, dp), lambda i, t: (0, 0)),                # W2
            pl.BlockSpec((1, dp), lambda i, t: (0, 0)),                 # b2
        ],
        out_specs=pl.BlockSpec((n_pad, dp), lambda i, t: (0, 0)),
        scratch_shapes=[
            pltpu.VMEM((nadjs, n_pad, fp), jnp.float32),   # aggregator outputs
            pltpu.VMEM((fp, n_pad), jnp.bfloat16),         # emb^T (+ alpha_dst row)
            pltpu.VMEM((1, n_pad), jnp.bfloat16),          # alpha_src row
        ],
        compiler_params=pltpu.CompilerParams(
            # Both axes stay sequential: edge tiles accumulate into scratch and
            # the fused encoder reads every aggregator's scratch on the last step.
            dimension_semantics=("arbitrary", "arbitrary"),
        ),
    )(xT_pad, x_pad, src_all, dst_all, w_all, bcol_all, aT_all,
      w1_pad, b1_pad, w2_pad, b2_pad)

    return out_pad[:n, :d]


# ----------------------------------------------------------------------------
# Pure-JAX reference (mirrors the PyTorch module) for a correctness check
# ----------------------------------------------------------------------------
def sigat_reference(params, x, pos_edge_index, neg_edge_index):
    def agg_fwd(p, x, src, dst):
        new_emb = x @ p["w_t"] + p["b"]                                  # [N,F]
        h2 = jnp.concatenate([new_emb[src], new_emb[dst]], axis=1)       # [E,2F]
        score = h2 @ p["a"]                                              # [E,1]
        score = jnp.where(score > 0, score, 0.1 * score)
        e_h = jnp.exp(score)
        n = x.shape[0]
        row_sum = jnp.zeros((n, 1), jnp.float32).at[src].add(e_h)
        results = jnp.zeros_like(new_emb).at[src].add(e_h * new_emb[dst])
        return results / (row_sum + 1e-12)

    edge_lists = [
        (pos_edge_index[0], pos_edge_index[1]),
        (pos_edge_index[1], pos_edge_index[0]),
        (neg_edge_index[0], neg_edge_index[1]),
        (neg_edge_index[1], neg_edge_index[0]),
    ]
    feats = [agg_fwd(p, x, s, d) for p, (s, d) in zip(params["aggs"], edge_lists)]
    comb = jnp.concatenate([x] + feats, axis=1)
    enc = params["enc"]
    h = jnp.tanh(comb @ enc["w1_t"] + enc["b1"])
    return h @ enc["w2_t"] + enc["b2"]


# ----------------------------------------------------------------------------
# Deterministic parameter init (shapes mirror the PyTorch module __init__)
# ----------------------------------------------------------------------------
def init_params(key, node_feat_size, embedding_dim, nadjs=4):
    f = node_feat_size
    d = embedding_dim
    keys = jax.random.split(key, 3 * nadjs + 2)
    aggs = []
    for i in range(nadjs):
        k_w, k_b, k_a = keys[3 * i], keys[3 * i + 1], keys[3 * i + 2]
        # out_linear_layer: Linear(F, F); stored transposed as [in, out]
        w_t = jax.random.normal(k_w, (f, f), jnp.float32) * (2.0 / f) ** 0.5
        b = jax.random.normal(k_b, (1, f), jnp.float32) * 0.01
        # a: [2F, 1], kaiming-normal style
        a = jax.random.normal(k_a, (2 * f, 1), jnp.float32) * (2.0 / (2 * f)) ** 0.5
        aggs.append({"w_t": w_t, "b": b, "a": a})
    k1, k2 = keys[-2], keys[-1]
    w1_t = jax.random.normal(k1, (f * (nadjs + 1), f), jnp.float32) * (
        2.0 / (f * (nadjs + 1))
    ) ** 0.5
    b1 = jnp.full((1, f), 0.01, jnp.float32)
    w2_t = jax.random.normal(k2, (f, d), jnp.float32) * (2.0 / f) ** 0.5
    b2 = jnp.full((1, d), 0.01, jnp.float32)
    return {"aggs": aggs, "enc": {"w1_t": w1_t, "b1": b1, "w2_t": w2_t, "b2": b2}}


# ----------------------------------------------------------------------------
# Demo
# ----------------------------------------------------------------------------
if __name__ == "__main__":
    NADJS = 4
    N_NODES = 16
    FEAT = 8
    EMB = 4
    E_POS = 24
    E_NEG = 20

    key = jax.random.PRNGKey(0)
    k_x, k_pe, k_ne, k_params = jax.random.split(key, 4)

    x = jax.random.normal(k_x, (N_NODES, FEAT), jnp.float32)
    pos_edge_index = jax.random.randint(k_pe, (2, E_POS), 0, N_NODES, jnp.int32)
    neg_edge_index = jax.random.randint(k_ne, (2, E_NEG), 0, N_NODES, jnp.int32)

    params = init_params(k_params, FEAT, EMB, NADJS)

    fwd = jax.jit(sigat_forward)
    out = jax.block_until_ready(fwd(params, x, pos_edge_index, neg_edge_index))

    assert out.shape == (N_NODES, EMB), out.shape
    assert bool(jnp.all(jnp.isfinite(out)))

    # Sanity-check against the pure-JAX reference (tolerance covers the bf16
    # rounding of gathered/scattered values; indicators themselves are exact).
    ref = sigat_reference(params, x, pos_edge_index, neg_edge_index)
    err = float(jnp.max(jnp.abs(out - ref)))
    assert err < 5e-2, f"max |err| vs reference = {err}"

    print("KERNEL_OK")
</pallas_src>

<mosaic_0001>
module attributes {stable_mosaic.version = 11 : i64} {
  func.func @_sigat_kernel(%arg0: i32, %arg1: i32, %arg2: memref<128x128xf32, #tpu.memory_space<vmem>>, %arg3: memref<128x128xf32, #tpu.memory_space<vmem>>, %arg4: memref<1x1x128xi32, #tpu.memory_space<vmem>>, %arg5: memref<1x1x128xi32, #tpu.memory_space<vmem>>, %arg6: memref<1x128x128xf32, #tpu.memory_space<vmem>>, %arg7: memref<1x128x1xf32, #tpu.memory_space<vmem>>, %arg8: memref<1x2x128xf32, #tpu.memory_space<vmem>>, %arg9: memref<5x128x128xf32, #tpu.memory_space<vmem>>, %arg10: memref<1x128xf32, #tpu.memory_space<vmem>>, %arg11: memref<128x128xf32, #tpu.memory_space<vmem>>, %arg12: memref<1x128xf32, #tpu.memory_space<vmem>>, %arg13: memref<128x128xf32, #tpu.memory_space<vmem>>, %arg14: memref<4x128x128xf32, #tpu.memory_space<vmem>>, %arg15: memref<128x128xbf16, #tpu.memory_space<vmem>>, %arg16: memref<1x128xbf16, #tpu.memory_space<vmem>>) attributes {dimension_semantics = [#tpu.dimension_semantics<arbitrary>, #tpu.dimension_semantics<arbitrary>], iteration_bounds = array<i64: 4, 1>, scalar_prefetch = 0 : i64, scratch_operands = 3 : i64, tpu.core_type = #tpu.core_type<tc>, window_params = [{pipeline_mode = #tpu.pipeline_mode<synchronous>, transform_indices = @transform_0, window_bounds = array<i64: 128, 128>}, {pipeline_mode = #tpu.pipeline_mode<synchronous>, transform_indices = @transform_1, window_bounds = array<i64: 128, 128>}, {transform_indices = @transform_2, window_bounds = array<i64: 1, 1, 128>}, {transform_indices = @transform_3, window_bounds = array<i64: 1, 1, 128>}, {transform_indices = @transform_4, window_bounds = array<i64: 1, 128, 128>}, {transform_indices = @transform_5, window_bounds = array<i64: 1, 128, 1>}, {transform_indices = @transform_6, window_bounds = array<i64: 1, 2, 128>}, {pipeline_mode = #tpu.pipeline_mode<synchronous>, transform_indices = @transform_7, window_bounds = array<i64: 5, 128, 128>}, {pipeline_mode = #tpu.pipeline_mode<synchronous>, transform_indices = @transform_8, window_bounds = array<i64: 1, 128>}, {pipeline_mode = #tpu.pipeline_mode<synchronous>, transform_indices = @transform_9, window_bounds = array<i64: 128, 128>}, {pipeline_mode = #tpu.pipeline_mode<synchronous>, transform_indices = @transform_10, window_bounds = array<i64: 1, 128>}, {pipeline_mode = #tpu.pipeline_mode<synchronous>, transform_indices = @transform_11, window_bounds = array<i64: 128, 128>}]} {
    %c0_i32 = arith.constant 0 : i32
    %0 = arith.cmpi eq, %arg1, %c0_i32 : i32
    %1 = arith.extui %0 : i1 to i32
    %c0_i32_0 = arith.constant 0 : i32
    %2 = arith.cmpi ne, %1, %c0_i32_0 : i32
    scf.if %2 {
      %c0_26 = arith.constant 0 : index
      %c0_27 = arith.constant 0 : index
      %c0_28 = arith.constant 0 : index
      %59 = vector.load %arg6[%c0_26, %c0_27, %c0_28] : memref<1x128x128xf32, #tpu.memory_space<vmem>>, vector<1x128x128xf32>
      %60 = vector.shape_cast %59 : vector<1x128x128xf32> to vector<128x128xf32>
      %c0_29 = arith.constant 0 : index
      %c0_30 = arith.constant 0 : index
      %61 = vector.load %arg2[%c0_29, %c0_30] : memref<128x128xf32, #tpu.memory_space<vmem>>, vector<128x128xf32>
      %cst_31 = arith.constant dense<0.000000e+00> : vector<128x128xf32>
      %62 = tpu.matmul %60, %61, %cst_31 {dimension_numbers = #tpu.dot_dimension_numbers<[1], [0], [0], [1], [0, 0, 1, 1], [], []>} : vector<128x128xf32>, vector<128x128xf32>, vector<128x128xf32> -> vector<128x128xf32>
      %c0_32 = arith.constant 0 : index
      %c0_33 = arith.constant 0 : index
      %c0_34 = arith.constant 0 : index
      %63 = vector.load %arg7[%c0_32, %c0_33, %c0_34] : memref<1x128x1xf32, #tpu.memory_space<vmem>>, vector<1x128x1xf32>
      %64 = vector.shape_cast %63 : vector<1x128x1xf32> to vector<128x1xf32>
      %65 = vector.broadcast %64 : vector<128x1xf32> to vector<128x128xf32>
      %66 = arith.addf %62, %65 : vector<128x128xf32>
      %c0_35 = arith.constant 0 : index
      %c0_36 = arith.constant 0 : index
      %c0_37 = arith.constant 0 : index
      %67 = vector.load %arg8[%c0_35, %c0_36, %c0_37] : memref<1x2x128xf32, #tpu.memory_space<vmem>>, vector<1x2x128xf32>
      %68 = vector.shape_cast %67 : vector<1x2x128xf32> to vector<2x128xf32>
      %cst_38 = arith.constant dense<0.000000e+00> : vector<2x128xf32>
      %69 = tpu.matmul %68, %66, %cst_38 {dimension_numbers = #tpu.dot_dimension_numbers<[1], [0], [0], [1], [0, 0, 1, 1], [], []>} : vector<2x128xf32>, vector<128x128xf32>, vector<2x128xf32> -> vector<2x128xf32>
      %70 = tpu.iota {dimensions = array<i32: 0>} : vector<128x1xi32>
      %c127_i32 = arith.constant 127 : i32
      %71 = vector.broadcast %c127_i32 : i32 to vector<128x1xi32>
      %72 = arith.cmpi eq, %70, %71 : vector<128x1xi32>
      %73 = arith.extui %72 : vector<128x1xi1> to vector<128x1xi32>
      %74 = arith.sitofp %73 : vector<128x1xi32> to vector<128x1xf32>
      %75 = vector.extract_strided_slice %69 {offsets = [1, 0], sizes = [1, 128], strides = [1, 1]} : vector<2x128xf32> to vector<1x128xf32>
      %76 = vector.broadcast %74 : vector<128x1xf32> to vector<128x128xf32>
      %77 = vector.broadcast %75 : vector<1x128xf32> to vector<128x128xf32>
      %78 = arith.mulf %76, %77 : vector<128x128xf32>
      %79 = arith.addf %66, %78 : vector<128x128xf32>
      %80 = arith.truncf %79 : vector<128x128xf32> to vector<128x128xbf16>
      %c0_39 = arith.constant 0 : index
      %c0_40 = arith.constant 0 : index
      %81 = vector.load %arg15[%c0_39, %c0_40] : memref<128x128xbf16, #tpu.memory_space<vmem>>, vector<128x128xbf16>
      tpu.vector_store %arg15[%c0_39, %c0_40], %80 {strides = array<i32>} : memref<128x128xbf16, #tpu.memory_space<vmem>>, vector<128x128xbf16>,
      %82 = vector.extract_strided_slice %69 {offsets = [0, 0], sizes = [1, 128], strides = [1, 1]} : vector<2x128xf32> to vector<1x128xf32>
      %83 = arith.truncf %82 : vector<1x128xf32> to vector<1x128xbf16>
      %c0_41 = arith.constant 0 : index
      %c0_42 = arith.constant 0 : index
      %84 = vector.load %arg16[%c0_41, %c0_42] : memref<1x128xbf16, #tpu.memory_space<vmem>>, vector<1x128xbf16>
      tpu.vector_store %arg16[%c0_41, %c0_42], %83 {strides = array<i32>} : memref<1x128xbf16, #tpu.memory_space<vmem>>, vector<1x128xbf16>,
      %cst_43 = arith.constant 0.000000e+00 : f32
      %85 = vector.broadcast %cst_43 : f32 to vector<128x128xf32>
      %86 = arith.index_cast %arg0 : i32 to index
      %c0_44 = arith.constant 0 : index
      %c0_45 = arith.constant 0 : index
      %87 = vector.load %arg14[%86, %c0_44, %c0_45] : memref<4x128x128xf32, #tpu.memory_space<vmem>>, vector<1x128x128xf32>
      %88 = vector.shape_cast %87 : vector<1x128x128xf32> to vector<128x128xf32>
      %89 = vector.shape_cast %85 : vector<128x128xf32> to vector<1x128x128xf32>
      tpu.vector_store %arg14[%86, %c0_44, %c0_45], %89 {strides = array<i32>} : memref<4x128x128xf32, #tpu.memory_space<vmem>>, vector<1x128x128xf32>,
    } else {
    }
    %c0 = arith.constant 0 : index
    %c0_1 = arith.constant 0 : index
    %c0_2 = arith.constant 0 : index
    %3 = vector.load %arg4[%c0, %c0_1, %c0_2] : memref<1x1x128xi32, #tpu.memory_space<vmem>>, vector<1x1x128xi32>
    %4 = vector.shape_cast %3 : vector<1x1x128xi32> to vector<1x128xi32>
    %c0_3 = arith.constant 0 : index
    %c0_4 = arith.constant 0 : index
    %c0_5 = arith.constant 0 : index
    %5 = vector.load %arg5[%c0_3, %c0_4, %c0_5] : memref<1x1x128xi32, #tpu.memory_space<vmem>>, vector<1x1x128xi32>
    %6 = vector.shape_cast %5 : vector<1x1x128xi32> to vector<1x128xi32>
    %7 = tpu.iota {dimensions = array<i32: 0>} : vector<128x128xi32>
    %8 = vector.broadcast %4 : vector<1x128xi32> to vector<128x128xi32>
    %9 = arith.cmpi eq, %8, %7 : vector<128x128xi32>
    %cst = arith.constant 1.000000e+00 : f32
    %cst_6 = arith.constant 0.000000e+00 : f32
    %10 = vector.broadcast %cst : f32 to vector<128x128xf32>
    %11 = vector.broadcast %cst_6 : f32 to vector<128x128xf32>
    %12 = arith.select %9, %10, %11 : vector<128x128xi1>, vector<128x128xf32>
    %13 = arith.truncf %12 : vector<128x128xf32> to vector<128x128xbf16>
    %14 = vector.broadcast %6 : vector<1x128xi32> to vector<128x128xi32>
    %15 = arith.cmpi eq, %14, %7 : vector<128x128xi32>
    %cst_7 = arith.constant 1.000000e+00 : f32
    %cst_8 = arith.constant 0.000000e+00 : f32
    %16 = vector.broadcast %cst_7 : f32 to vector<128x128xf32>
    %17 = vector.broadcast %cst_8 : f32 to vector<128x128xf32>
    %18 = arith.select %15, %16, %17 : vector<128x128xi1>, vector<128x128xf32>
    %19 = arith.truncf %18 : vector<128x128xf32> to vector<128x128xbf16>
    %c0_9 = arith.constant 0 : index
    %c0_10 = arith.constant 0 : index
    %20 = vector.load %arg15[%c0_9, %c0_10] : memref<128x128xbf16, #tpu.memory_space<vmem>>, vector<128x128xbf16>
    %cst_11 = arith.constant dense<0.000000e+00> : vector<128x128xf32>
    %21 = tpu.matmul %20, %19, %cst_11 {dimension_numbers = #tpu.dot_dimension_numbers<[1], [0], [0], [1], [0, 0, 1, 1], [], []>} : vector<128x128xbf16>, vector<128x128xbf16>, vector<128x128xf32> -> vector<128x128xf32>
    %c0_12 = arith.constant 0 : index
    %c0_13 = arith.constant 0 : index
    %22 = vector.load %arg16[%c0_12, %c0_13] : memref<1x128xbf16, #tpu.memory_space<vmem>>, vector<1x128xbf16>
    %cst_14 = arith.constant dense<0.000000e+00> : vector<1x128xf32>
    %23 = tpu.matmul %22, %13, %cst_14 {dimension_numbers = #tpu.dot_dimension_numbers<[1], [0], [0], [1], [0, 0, 1, 1], [], []>} : vector<1x128xbf16>, vector<128x128xbf16>, vector<1x128xf32> -> vector<1x128xf32>
    %24 = vector.extract_strided_slice %21 {offsets = [127, 0], sizes = [1, 128], strides = [1, 1]} : vector<128x128xf32> to vector<1x128xf32>
    %25 = arith.addf %23, %24 : vector<1x128xf32>
    %cst_15 = arith.constant 0.000000e+00 : f32
    %26 = vector.broadcast %cst_15 : f32 to vector<1x128xf32>
    %27 = arith.cmpf ogt, %25, %26 : vector<1x128xf32>
    %cst_16 = arith.constant 1.000000e-01 : f32
    %28 = vector.broadcast %cst_16 : f32 to vector<1x128xf32>
    %29 = arith.mulf %28, %25 : vector<1x128xf32>
    %30 = arith.select %27, %25, %29 : vector<1x128xi1>, vector<1x128xf32>
    %31 = math.exp %30 : vector<1x128xf32>
    %32 = tpu.iota {dimensions = array<i32: 0>} : vector<128x1xi32>
    %c8_i32 = arith.constant 8 : i32
    %33 = vector.broadcast %c8_i32 : i32 to vector<128x1xi32>
    %34 = arith.cmpi eq, %32, %33 : vector<128x1xi32>
    %35 = arith.extui %34 : vector<128x1xi1> to vector<128x1xi32>
    %36 = arith.sitofp %35 : vector<128x1xi32> to vector<128x1xf32>
    %37 = vector.broadcast %36 : vector<128x1xf32> to vector<128x128xf32>
    %38 = arith.addf %21, %37 : vector<128x128xf32>
    %39 = vector.broadcast %31 : vector<1x128xf32> to vector<128x128xf32>
    %40 = arith.mulf %39, %38 : vector<128x128xf32>
    %41 = arith.truncf %40 : vector<128x128xf32> to vector<128x128xbf16>
    %cst_17 = arith.constant dense<0.000000e+00> : vector<128x128xf32>
    %42 = tpu.matmul %13, %41, %cst_17 {dimension_numbers = #tpu.dot_dimension_numbers<[1], [1], [0], [0], [0, 0, 1, 0], [], []>} : vector<128x128xbf16>, vector<128x128xbf16>, vector<128x128xf32> -> vector<128x128xf32>
    %43 = arith.index_cast %arg0 : i32 to index
    %c0_18 = arith.constant 0 : index
    %c0_19 = arith.constant 0 : index
    %44 = vector.load %arg14[%43, %c0_18, %c0_19] : memref<4x128x128xf32, #tpu.memory_space<vmem>>, vector<1x128x128xf32>
    %45 = vector.shape_cast %44 : vector<1x128x128xf32> to vector<128x128xf32>
    %46 = arith.addf %45, %42 : vector<128x128xf32>
    %47 = arith.index_cast %arg0 : i32 to index
    %c0_20 = arith.constant 0 : index
    %c0_21 = arith.constant 0 : index
    %48 = vector.load %arg14[%47, %c0_20, %c0_21] : memref<4x128x128xf32, #tpu.memory_space<vmem>>, vector<1x128x128xf32>
    %49 = vector.shape_cast %48 : vector<1x128x128xf32> to vector<128x128xf32>
    %50 = vector.shape_cast %46 : vector<128x128xf32> to vector<1x128x128xf32>
    tpu.vector_store %arg14[%47, %c0_20, %c0_21], %50 {strides = array<i32>} : memref<4x128x128xf32, #tpu.memory_space<vmem>>, vector<1x128x128xf32>,
    %c0_i32_22 = arith.constant 0 : i32
    %51 = arith.cmpi eq, %arg1, %c0_i32_22 : i32
    %52 = arith.extui %51 : i1 to i32
    %c0_i32_23 = arith.constant 0 : i32
    %53 = arith.cmpi ne, %52, %c0_i32_23 : i32
    scf.if %53 {
      %59 = arith.index_cast %arg0 : i32 to index
      %c0_26 = arith.constant 0 : index
      %c0_27 = arith.constant 0 : index
      %60 = vector.load %arg14[%59, %c0_26, %c0_27] : memref<4x128x128xf32, #tpu.memory_space<vmem>>, vector<1x128x128xf32>
      %61 = vector.shape_cast %60 : vector<1x128x128xf32> to vector<128x128xf32>
      %62 = vector.extract_strided_slice %61 {offsets = [0, 8], sizes = [128, 1], strides = [1, 1]} : vector<128x128xf32> to vector<128x1xf32>
      %cst_28 = arith.constant 9.99999996E-13 : f32
      %63 = vector.broadcast %cst_28 : f32 to vector<128x1xf32>
      %64 = arith.addf %62, %63 : vector<128x1xf32>
      %65 = vector.broadcast %64 : vector<128x1xf32> to vector<128x128xf32>
      %66 = arith.divf %61, %65 : vector<128x128xf32>
      %67 = arith.index_cast %arg0 : i32 to index
      %c0_29 = arith.constant 0 : index
      %c0_30 = arith.constant 0 : index
      %68 = vector.load %arg14[%67, %c0_29, %c0_30] : memref<4x128x128xf32, #tpu.memory_space<vmem>>, vector<1x128x128xf32>
      %69 = vector.shape_cast %68 : vector<1x128x128xf32> to vector<128x128xf32>
      %70 = vector.shape_cast %66 : vector<128x128xf32> to vector<1x128x128xf32>
      tpu.vector_store %arg14[%67, %c0_29, %c0_30], %70 {strides = array<i32>} : memref<4x128x128xf32, #tpu.memory_space<vmem>>, vector<1x128x128xf32>,
    } else {
    }
    %c3_i32 = arith.constant 3 : i32
    %54 = arith.cmpi eq, %arg0, %c3_i32 : i32
    %c0_i32_24 = arith.constant 0 : i32
    %55 = arith.cmpi eq, %arg1, %c0_i32_24 : i32
    %56 = arith.andi %54, %55 : i1
    %57 = arith.extui %56 : i1 to i32
    %c0_i32_25 = arith.constant 0 : i32
    %58 = arith.cmpi ne, %57, %c0_i32_25 : i32
    scf.if %58 {
      %c0_26 = arith.constant 0 : index
      %c0_27 = arith.constant 0 : index
      %59 = vector.load %arg3[%c0_26, %c0_27] : memref<128x128xf32, #tpu.memory_space<vmem>>, vector<128x128xf32>
      %c0_28 = arith.constant 0 : index
      %c0_29 = arith.constant 0 : index
      %c0_30 = arith.constant 0 : index
      %60 = vector.load %arg9[%c0_28, %c0_29, %c0_30] : memref<5x128x128xf32, #tpu.memory_space<vmem>>, vector<1x128x128xf32>
      %61 = vector.shape_cast %60 : vector<1x128x128xf32> to vector<128x128xf32>
      %cst_31 = arith.constant dense<0.000000e+00> : vector<128x128xf32>
      %62 = tpu.matmul %59, %61, %cst_31 {dimension_numbers = #tpu.dot_dimension_numbers<[1], [0], [0], [1], [0, 0, 1, 1], [], []>} : vector<128x128xf32>, vector<128x128xf32>, vector<128x128xf32> -> vector<128x128xf32>
      %c0_32 = arith.constant 0 : index
      %c0_33 = arith.constant 0 : index
      %63 = vector.load %arg10[%c0_32, %c0_33] : memref<1x128xf32, #tpu.memory_space<vmem>>, vector<1x128xf32>
      %64 = vector.broadcast %63 : vector<1x128xf32> to vector<128x128xf32>
      %65 = arith.addf %62, %64 : vector<128x128xf32>
      %c0_34 = arith.constant 0 : index
      %c0_35 = arith.constant 0 : index
      %c0_36 = arith.constant 0 : index
      %66 = vector.load %arg14[%c0_34, %c0_35, %c0_36] : memref<4x128x128xf32, #tpu.memory_space<vmem>>, vector<1x128x128xf32>
      %67 = vector.shape_cast %66 : vector<1x128x128xf32> to vector<128x128xf32>
      %c1 = arith.constant 1 : index
      %c0_37 = arith.constant 0 : index
      %c0_38 = arith.constant 0 : index
      %68 = vector.load %arg9[%c1, %c0_37, %c0_38] : memref<5x128x128xf32, #tpu.memory_space<vmem>>, vector<1x128x128xf32>
      %69 = vector.shape_cast %68 : vector<1x128x128xf32> to vector<128x128xf32>
      %cst_39 = arith.constant dense<0.000000e+00> : vector<128x128xf32>
      %70 = tpu.matmul %67, %69, %cst_39 {dimension_numbers = #tpu.dot_dimension_numbers<[1], [0], [0], [1], [0, 0, 1, 1], [], []>} : vector<128x128xf32>, vector<128x128xf32>, vector<128x128xf32> -> vector<128x128xf32>
      %71 = arith.addf %65, %70 : vector<128x128xf32>
      %c1_40 = arith.constant 1 : index
      %c0_41 = arith.constant 0 : index
      %c0_42 = arith.constant 0 : index
      %72 = vector.load %arg14[%c1_40, %c0_41, %c0_42] : memref<4x128x128xf32, #tpu.memory_space<vmem>>, vector<1x128x128xf32>
      %73 = vector.shape_cast %72 : vector<1x128x128xf32> to vector<128x128xf32>
      %c2 = arith.constant 2 : index
      %c0_43 = arith.constant 0 : index
      %c0_44 = arith.constant 0 : index
      %74 = vector.load %arg9[%c2, %c0_43, %c0_44] : memref<5x128x128xf32, #tpu.memory_space<vmem>>, vector<1x128x128xf32>
      %75 = vector.shape_cast %74 : vector<1x128x128xf32> to vector<128x128xf32>
      %cst_45 = arith.constant dense<0.000000e+00> : vector<128x128xf32>
      %76 = tpu.matmul %73, %75, %cst_45 {dimension_numbers = #tpu.dot_dimension_numbers<[1], [0], [0], [1], [0, 0, 1, 1], [], []>} : vector<128x128xf32>, vector<128x128xf32>, vector<128x128xf32> -> vector<128x128xf32>
      %77 = arith.addf %71, %76 : vector<128x128xf32>
      %c2_46 = arith.constant 2 : index
      %c0_47 = arith.constant 0 : index
      %c0_48 = arith.constant 0 : index
      %78 = vector.load %arg14[%c2_46, %c0_47, %c0_48] : memref<4x128x128xf32, #tpu.memory_space<vmem>>, vector<1x128x128xf32>
      %79 = vector.shape_cast %78 : vector<1x128x128xf32> to vector<128x128xf32>
      %c3 = arith.constant 3 : index
      %c0_49 = arith.constant 0 : index
      %c0_50 = arith.constant 0 : index
      %80 = vector.load %arg9[%c3, %c0_49, %c0_50] : memref<5x128x128xf32, #tpu.memory_space<vmem>>, vector<1x128x128xf32>
      %81 = vector.shape_cast %80 : vector<1x128x128xf32> to vector<128x128xf32>
      %cst_51 = arith.constant dense<0.000000e+00> : vector<128x128xf32>
      %82 = tpu.matmul %79, %81, %cst_51 {dimension_numbers = #tpu.dot_dimension_numbers<[1], [0], [0], [1], [0, 0, 1, 1], [], []>} : vector<128x128xf32>, vector<128x128xf32>, vector<128x128xf32> -> vector<128x128xf32>
      %83 = arith.addf %77, %82 : vector<128x128xf32>
      %c3_52 = arith.constant 3 : index
      %c0_53 = arith.constant 0 : index
      %c0_54 = arith.constant 0 : index
      %84 = vector.load %arg14[%c3_52, %c0_53, %c0_54] : memref<4x128x128xf32, #tpu.memory_space<vmem>>, vector<1x128x128xf32>
      %85 = vector.shape_cast %84 : vector<1x128x128xf32> to vector<128x128xf32>
      %c4 = arith.constant 4 : index
      %c0_55 = arith.constant 0 : index
      %c0_56 = arith.constant 0 : index
      %86 = vector.load %arg9[%c4, %c0_55, %c0_56] : memref<5x128x128xf32, #tpu.memory_space<vmem>>, vector<1x128x128xf32>
      %87 = vector.shape_cast %86 : vector<1x128x128xf32> to vector<128x128xf32>
      %cst_57 = arith.constant dense<0.000000e+00> : vector<128x128xf32>
      %88 = tpu.matmul %85, %87, %cst_57 {dimension_numbers = #tpu.dot_dimension_numbers<[1], [0], [0], [1], [0, 0, 1, 1], [], []>} : vector<128x128xf32>, vector<128x128xf32>, vector<128x128xf32> -> vector<128x128xf32>
      %89 = arith.addf %83, %88 : vector<128x128xf32>
      %90 = math.tanh %89 : vector<128x128xf32>
      %c0_58 = arith.constant 0 : index
      %c0_59 = arith.constant 0 : index
      %91 = vector.load %arg11[%c0_58, %c0_59] : memref<128x128xf32, #tpu.memory_space<vmem>>, vector<128x128xf32>
      %cst_60 = arith.constant dense<0.000000e+00> : vector<128x128xf32>
      %92 = tpu.matmul %90, %91, %cst_60 {dimension_numbers = #tpu.dot_dimension_numbers<[1], [0], [0], [1], [0, 0, 1, 1], [], []>} : vector<128x128xf32>, vector<128x128xf32>, vector<128x128xf32> -> vector<128x128xf32>
      %c0_61 = arith.constant 0 : index
      %c0_62 = arith.constant 0 : index
      %93 = vector.load %arg12[%c0_61, %c0_62] : memref<1x128xf32, #tpu.memory_space<vmem>>, vector<1x128xf32>
      %94 = vector.broadcast %93 : vector<1x128xf32> to vector<128x128xf32>
      %95 = arith.addf %92, %94 : vector<128x128xf32>
      %c0_63 = arith.constant 0 : index
      %c0_64 = arith.constant 0 : index
      %96 = vector.load %arg13[%c0_63, %c0_64] : memref<128x128xf32, #tpu.memory_space<vmem>>, vector<128x128xf32>
      tpu.vector_store %arg13[%c0_63, %c0_64], %95 {strides = array<i32>} : memref<128x128xf32, #tpu.memory_space<vmem>>, vector<128x128xf32>,
    } else {
    }
    return
  }
  func.func @transform_0(%arg0: i32, %arg1: i32) -> (i32, i32) {
    %c0_i32 = arith.constant 0 : i32
    %c0_i32_0 = arith.constant 0 : i32
    %c0_i32_1 = arith.constant 0 : i32
    return %c0_i32, %c0_i32_0 : i32, i32
  }
  func.func @transform_1(%arg0: i32, %arg1: i32) -> (i32, i32) {
    %c0_i32 = arith.constant 0 : i32
    %c0_i32_0 = arith.constant 0 : i32
    %c0_i32_1 = arith.constant 0 : i32
    return %c0_i32, %c0_i32_0 : i32, i32
  }
  func.func @transform_2(%arg0: i32, %arg1: i32) -> (i32, i32, i32) {
    %c0_i32 = arith.constant 0 : i32
    %c0_i32_0 = arith.constant 0 : i32
    return %arg0, %c0_i32, %arg1 : i32, i32, i32
  }
  func.func @transform_3(%arg0: i32, %arg1: i32) -> (i32, i32, i32) {
    %c0_i32 = arith.constant 0 : i32
    %c0_i32_0 = arith.constant 0 : i32
    return %arg0, %c0_i32, %arg1 : i32, i32, i32
  }
  func.func @transform_4(%arg0: i32, %arg1: i32) -> (i32, i32, i32) {
    %c0_i32 = arith.constant 0 : i32
    %c0_i32_0 = arith.constant 0 : i32
    %c0_i32_1 = arith.constant 0 : i32
    return %arg0, %c0_i32, %c0_i32_0 : i32, i32, i32
  }
  func.func @transform_5(%arg0: i32, %arg1: i32) -> (i32, i32, i32) {
    %c0_i32 = arith.constant 0 : i32
    %c0_i32_0 = arith.constant 0 : i32
    %c0_i32_1 = arith.constant 0 : i32
    return %arg0, %c0_i32, %c0_i32_0 : i32, i32, i32
  }
  func.func @transform_6(%arg0: i32, %arg1: i32) -> (i32, i32, i32) {
    %c0_i32 = arith.constant 0 : i32
    %c0_i32_0 = arith.constant 0 : i32
    %c0_i32_1 = arith.constant 0 : i32
    return %arg0, %c0_i32, %c0_i32_0 : i32, i32, i32
  }
  func.func @transform_7(%arg0: i32, %arg1: i32) -> (i32, i32, i32) {
    %c0_i32 = arith.constant 0 : i32
    %c0_i32_0 = arith.constant 0 : i32
    %c0_i32_1 = arith.constant 0 : i32
    %c0_i32_2 = arith.constant 0 : i32
    return %c0_i32, %c0_i32_0, %c0_i32_1 : i32, i32, i32
  }
  func.func @transform_8(%arg0: i32, %arg1: i32) -> (i32, i32) {
    %c0_i32 = arith.constant 0 : i32
    %c0_i32_0 = arith.constant 0 : i32
    %c0_i32_1 = arith.constant 0 : i32
    return %c0_i32, %c0_i32_0 : i32, i32
  }
  func.func @transform_9(%arg0: i32, %arg1: i32) -> (i32, i32) {
    %c0_i32 = arith.constant 0 : i32
    %c0_i32_0 = arith.constant 0 : i32
    %c0_i32_1 = arith.constant 0 : i32
    return %c0_i32, %c0_i32_0 : i32, i32
  }
  func.func @transform_10(%arg0: i32, %arg1: i32) -> (i32, i32) {
    %c0_i32 = arith.constant 0 : i32
    %c0_i32_0 = arith.constant 0 : i32
    %c0_i32_1 = arith.constant 0 : i32
    return %c0_i32, %c0_i32_0 : i32, i32
  }
  func.func @transform_11(%arg0: i32, %arg1: i32) -> (i32, i32) {
    %c0_i32 = arith.constant 0 : i32
    %c0_i32_0 = arith.constant 0 : i32
    %c0_i32_1 = arith.constant 0 : i32
    return %c0_i32, %c0_i32_0 : i32, i32
  }
}

</mosaic_0001>

<llo_original>
// kernel: sigat_forward.1
$region0: #{sigat_forward.1}
  #allocation0 [shape = 'u32[]', space=smem, size = 0x4, offset = 0x4, fixed_abs, tag = 'smem constant byte address 0x4 - core index']
  #allocation1 [shape = 'u32[144,128]{1,0:T(1,128)}', space=vmem, size = 0x12000, scoped, tag = 'internal scratch']
  #allocation2 [shape = 'f32[4,128,128]{2,1,0:T(8,128)}', space=vmem, size = 0x40000, scoped, tag = 'scratch operand']
  #allocation3 [shape = 'bf16[128,128]{1,0:T(8,128)(2,1)}', space=vmem, size = 0x8000, scoped, tag = 'scratch operand']
  #allocation4 [shape = 'bf16[1,128]{1,0:T(2,128)(2,1)}', space=vmem, size = 0x200, scoped, tag = 'scratch operand']
  %s0 = inlined_call_operand.vmem [shape: f32[128,128], index: 0, kind: input, shape index: {}]
  %s1 = inlined_call_operand.vmem [shape: f32[128,128], index: 1, kind: input, shape index: {}]
  %s2 = inlined_call_operand.vmem [shape: s32[4,1,128], index: 2, kind: input, shape index: {}]
  %s3 = inlined_call_operand.vmem [shape: s32[4,1,128], index: 3, kind: input, shape index: {}]
  %s4 = inlined_call_operand.vmem [shape: f32[4,128,128], index: 4, kind: input, shape index: {}]
  %s5 = inlined_call_operand.vmem [shape: f32[4,128,1], index: 5, kind: input, shape index: {}]
  %s6 = inlined_call_operand.vmem [shape: f32[4,2,128], index: 6, kind: input, shape index: {}]
  %s7 = inlined_call_operand.vmem [shape: f32[5,128,128], index: 7, kind: input, shape index: {}]
  %s8 = inlined_call_operand.vmem [shape: f32[1,128], index: 8, kind: input, shape index: {}]
  %s9 = inlined_call_operand.vmem [shape: f32[128,128], index: 9, kind: input, shape index: {}]
  %s10 = inlined_call_operand.vmem [shape: f32[1,128], index: 10, kind: input, shape index: {}]
  %s11 = inlined_call_operand.vmem [shape: f32[128,128], index: 11, kind: output, shape index: {}]
  %s12 = sld [smem:[#allocation0]]
  $region89: #{sigat_forward.1} parent=0
    _
  %s14 = ssub.s32 1, %s12
  %s15 = scalar_select 0, %s14, %s12
  loop: start=0, step=1, limit=6
  $region2: #{sigat_forward.1} parent=0 // loop_pre_header
    _
  $region3: #{sigat_forward.1} parent=0 // loop_header
    %s17 = sphi 0, %s21
    %p18 = scmp.ge.s32.totalorder %s17, 6
    %s24 = sphi 0, %s36
    %s25 = sphi 0, %s32
    %s26 = sphi 0, %s24
    %s27 = sphi 0, %s25
    %s28 = sphi 0, %s26
    %s29 = sphi 0, %s27
    %s37 = sphi 0, %s37
    %s39 = sphi 0, %s37
    %s40 = sphi 0, %s39
    %s54 = sphi 0, %s40
    %s58 = sphi 0, %s58
    %s60 = sphi 0, %s58
    %s61 = sphi 0, %s60
    %s75 = sphi 0, %s61
    %s83 = sphi 0, %s85
    %s86 = sphi 0, %s83
    %s87 = sphi 0, %s86
    %s103 = sphi 0, %s87
    %s111 = sphi 0, %s113
    %s114 = sphi 0, %s111
    %s115 = sphi 0, %s114
    %s131 = sphi 0, %s115
    %s137 = sphi 0, %s139
    %s140 = sphi 0, %s137
    %s141 = sphi 0, %s140
    %s157 = sphi 0, %s141
    %s163 = sphi 0, %s165
    %s166 = sphi 0, %s163
    %s167 = sphi 0, %s166
    %s183 = sphi 0, %s167
    %s189 = sphi 0, %s191
    %s192 = sphi 0, %s189
    %s193 = sphi 0, %s192
    %s209 = sphi 0, %s193
    %s213 = sphi 0, %s213
    %s215 = sphi 0, %s213
    %s216 = sphi 0, %s215
    %s230 = sphi 0, %s216
    %s234 = sphi 0, %s234
    %s236 = sphi 0, %s234
    %s237 = sphi 0, %s236
    %s251 = sphi 0, %s237
    %s255 = sphi 0, %s255
    %s257 = sphi 0, %s255
    %s258 = sphi 0, %s257
    %s272 = sphi 0, %s258
    %s276 = sphi 0, %s276
    %s278 = sphi 0, %s276
    %s279 = sphi 0, %s278
    %s293 = sphi 0, %s279
    %s297 = sphi 0, %s297
    %s299 = sphi 0, %s297
    %s300 = sphi 0, %s299
    %s314 = sphi 0, %s300
  $region4: #{sigat_forward.1} parent=0 // loop_header_branch
    %20 = sbr.rel (%p18) target = $region8
  $region5: #{sigat_forward.1} parent=0 // loop_body
    %s22 = ssub.s32 %s17, 1
    %s23 = ssub.s32 %s17, 2
    %s30 = sadd.s32 1, %s25
    %p31 = scmp.ge.s32.totalorder %s30, 1
    %s32 = scalar_select %p31, 0, %s30
    %s33 = sadd.s32 1, %s24
    %s34 = scalar_select %p31, %s33, %s24
    %p35 = scmp.ge.s32.totalorder %s34, 4
    %s36 = scalar_select %p35, 0, %s34
    %s38 = sadd.s32 %s37, 1
    %p41 = scmp.eq.s32.totalorder %s17, 3
    %p42 = scmp.ne.s32.totalorder %s37, %s39
    %p43 = scmp.eq.s32.totalorder %s17, 0
    %p44 = por %p42, %p43
    %p45 = scmp.ne.s32.totalorder %s37, %s39
    %p46 = scmp.eq.s32.totalorder %s22, 3
    %p47 = por %p45, %p46
    %p48 = scmp.ne.s32.totalorder %s39, %s40
    %p49 = scmp.eq.s32.totalorder %s22, 0
    %p50 = por %p48, %p49
    %p51 = scmp.ne.s32.totalorder %s39, %s40
    %p52 = scmp.eq.s32.totalorder %s23, 3
    %p53 = por %p51, %p52
    %p55 = scmp.ne.s32.totalorder %s40, %s54
    %p56 = scmp.eq.s32.totalorder %s23, 0
    %p57 = por %p55, %p56
    %s59 = sadd.s32 %s58, 1
    %p62 = scmp.eq.s32.totalorder %s17, 3
    %p63 = scmp.ne.s32.totalorder %s58, %s60
    %p64 = scmp.eq.s32.totalorder %s17, 0
    %p65 = por %p63, %p64
    %p66 = scmp.ne.s32.totalorder %s58, %s60
    %p67 = scmp.eq.s32.totalorder %s22, 3
    %p68 = por %p66, %p67
    %p69 = scmp.ne.s32.totalorder %s60, %s61
    %p70 = scmp.eq.s32.totalorder %s22, 0
    %p71 = por %p69, %p70
    %p72 = scmp.ne.s32.totalorder %s60, %s61
    %p73 = scmp.eq.s32.totalorder %s23, 3
    %p74 = por %p72, %p73
    %p76 = scmp.ne.s32.totalorder %s61, %s75
    %p77 = scmp.eq.s32.totalorder %s23, 0
    %p78 = por %p76, %p77
    %s79 = ssub.s32 %s24, %s36
    %s80 = ssub.s32 %s25, %s32
    %s81 = sor.u32 %s79, %s80
    %p82 = scmp.eq.s32.totalorder %s81, 0
    %s84 = sadd.s32 %s83, 1
    %s85 = scalar_select %p82, %s83, %s84
    %p88 = pneg %p82
    %p89 = scmp.eq.s32.totalorder %s17, 3
    %p90 = por %p88, %p89
    %p91 = scmp.ne.s32.totalorder %s83, %s86
    %p92 = scmp.eq.s32.totalorder %s17, 0
    %p93 = por %p91, %p92
    %p94 = scmp.ne.s32.totalorder %s83, %s86
    %p95 = scmp.eq.s32.totalorder %s22, 3
    %p96 = por %p94, %p95
    %p97 = scmp.ne.s32.totalorder %s86, %s87
    %p98 = scmp.eq.s32.totalorder %s22, 0
    %p99 = por %p97, %p98
    %p100 = scmp.ne.s32.totalorder %s86, %s87
    %p101 = scmp.eq.s32.totalorder %s23, 3
    %p102 = por %p100, %p101
    %p104 = scmp.ne.s32.totalorder %s87, %s103
    %p105 = scmp.eq.s32.totalorder %s23, 0
    %p106 = por %p104, %p105
    %s107 = ssub.s32 %s24, %s36
    %s108 = ssub.s32 %s25, %s32
    %s109 = sor.u32 %s107, %s108
    %p110 = scmp.eq.s32.totalorder %s109, 0
    %s112 = sadd.s32 %s111, 1
    %s113 = scalar_select %p110, %s111, %s112
    %p116 = pneg %p110
    %p117 = scmp.eq.s32.totalorder %s17, 3
    %p118 = por %p116, %p117
    %p119 = scmp.ne.s32.totalorder %s111, %s114
    %p120 = scmp.eq.s32.totalorder %s17, 0
    %p121 = por %p119, %p120
    %p122 = scmp.ne.s32.totalorder %s111, %s114
    %p123 = scmp.eq.s32.totalorder %s22, 3
    %p124 = por %p122, %p123
    %p125 = scmp.ne.s32.totalorder %s114, %s115
    %p126 = scmp.eq.s32.totalorder %s22, 0
    %p127 = por %p125, %p126
    %p128 = scmp.ne.s32.totalorder %s114, %s115
    %p129 = scmp.eq.s32.totalorder %s23, 3
    %p130 = por %p128, %p129
    %p132 = scmp.ne.s32.totalorder %s115, %s131
    %p133 = scmp.eq.s32.totalorder %s23, 0
    %p134 = por %p132, %p133
    %s135 = ssub.s32 %s24, %s36
    %p136 = scmp.eq.s32.totalorder %s135, 0
    %s138 = sadd.s32 %s137, 1
    %s139 = scalar_select %p136, %s137, %s138
    %p142 = pneg %p136
    %p143 = scmp.eq.s32.totalorder %s17, 3
    %p144 = por %p142, %p143
    %p145 = scmp.ne.s32.totalorder %s137, %s140
    %p146 = scmp.eq.s32.totalorder %s17, 0
    %p147 = por %p145, %p146
    %p148 = scmp.ne.s32.totalorder %s137, %s140
    %p149 = scmp.eq.s32.totalorder %s22, 3
    %p150 = por %p148, %p149
    %p151 = scmp.ne.s32.totalorder %s140, %s141
    %p152 = scmp.eq.s32.totalorder %s22, 0
    %p153 = por %p151, %p152
    %p154 = scmp.ne.s32.totalorder %s140, %s141
    %p155 = scmp.eq.s32.totalorder %s23, 3
    %p156 = por %p154, %p155
    %p158 = scmp.ne.s32.totalorder %s141, %s157
    %p159 = scmp.eq.s32.totalorder %s23, 0
    %p160 = por %p158, %p159
    %s161 = ssub.s32 %s24, %s36
    %p162 = scmp.eq.s32.totalorder %s161, 0
    %s164 = sadd.s32 %s163, 1
    %s165 = scalar_select %p162, %s163, %s164
    %p168 = pneg %p162
    %p169 = scmp.eq.s32.totalorder %s17, 3
    %p170 = por %p168, %p169
    %p171 = scmp.ne.s32.totalorder %s163, %s166
    %p172 = scmp.eq.s32.totalorder %s17, 0
    %p173 = por %p171, %p172
    %p174 = scmp.ne.s32.totalorder %s163, %s166
    %p175 = scmp.eq.s32.totalorder %s22, 3
    %p176 = por %p174, %p175
    %p177 = scmp.ne.s32.totalorder %s166, %s167
    %p178 = scmp.eq.s32.totalorder %s22, 0
    %p179 = por %p177, %p178
    %p180 = scmp.ne.s32.totalorder %s166, %s167
    %p181 = scmp.eq.s32.totalorder %s23, 3
    %p182 = por %p180, %p181
    %p184 = scmp.ne.s32.totalorder %s167, %s183
    %p185 = scmp.eq.s32.totalorder %s23, 0
    %p186 = por %p184, %p185
    %s187 = ssub.s32 %s24, %s36
    %p188 = scmp.eq.s32.totalorder %s187, 0
    %s190 = sadd.s32 %s189, 1
    %s191 = scalar_select %p188, %s189, %s190
    %p194 = pneg %p188
    %p195 = scmp.eq.s32.totalorder %s17, 3
    %p196 = por %p194, %p195
    %p197 = scmp.ne.s32.totalorder %s189, %s192
    %p198 = scmp.eq.s32.totalorder %s17, 0
    %p199 = por %p197, %p198
    %p200 = scmp.ne.s32.totalorder %s189, %s192
    %p201 = scmp.eq.s32.totalorder %s22, 3
    %p202 = por %p200, %p201
    %p203 = scmp.ne.s32.totalorder %s192, %s193
    %p204 = scmp.eq.s32.totalorder %s22, 0
    %p205 = por %p203, %p204
    %p206 = scmp.ne.s32.totalorder %s192, %s193
    %p207 = scmp.eq.s32.totalorder %s23, 3
    %p208 = por %p206, %p207
    %p210 = scmp.ne.s32.totalorder %s193, %s209
    %p211 = scmp.eq.s32.totalorder %s23, 0
    %p212 = por %p210, %p211
    %s214 = sadd.s32 %s213, 1
    %p217 = scmp.eq.s32.totalorder %s17, 3
    %p218 = scmp.ne.s32.totalorder %s213, %s215
    %p219 = scmp.eq.s32.totalorder %s17, 0
    %p220 = por %p218, %p219
    %p221 = scmp.ne.s32.totalorder %s213, %s215
    %p222 = scmp.eq.s32.totalorder %s22, 3
    %p223 = por %p221, %p222
    %p224 = scmp.ne.s32.totalorder %s215, %s216
    %p225 = scmp.eq.s32.totalorder %s22, 0
    %p226 = por %p224, %p225
    %p227 = scmp.ne.s32.totalorder %s215, %s216
    %p228 = scmp.eq.s32.totalorder %s23, 3
    %p229 = por %p227, %p228
    %p231 = scmp.ne.s32.totalorder %s216, %s230
    %p232 = scmp.eq.s32.totalorder %s23, 0
    %p233 = por %p231, %p232
    %s235 = sadd.s32 %s234, 1
    %p238 = scmp.eq.s32.totalorder %s17, 3
    %p239 = scmp.ne.s32.totalorder %s234, %s236
    %p240 = scmp.eq.s32.totalorder %s17, 0
    %p241 = por %p239, %p240
    %p242 = scmp.ne.s32.totalorder %s234, %s236
    %p243 = scmp.eq.s32.totalorder %s22, 3
    %p244 = por %p242, %p243
    %p245 = scmp.ne.s32.totalorder %s236, %s237
    %p246 = scmp.eq.s32.totalorder %s22, 0
    %p247 = por %p245, %p246
    %p248 = scmp.ne.s32.totalorder %s236, %s237
    %p249 = scmp.eq.s32.totalorder %s23, 3
    %p250 = por %p248, %p249
    %p252 = scmp.ne.s32.totalorder %s237, %s251
    %p253 = scmp.eq.s32.totalorder %s23, 0
    %p254 = por %p252, %p253
    %s256 = sadd.s32 %s255, 1
    %p259 = scmp.eq.s32.totalorder %s17, 3
    %p260 = scmp.ne.s32.totalorder %s255, %s257
    %p261 = scmp.eq.s32.totalorder %s17, 0
    %p262 = por %p260, %p261
    %p263 = scmp.ne.s32.totalorder %s255, %s257
    %p264 = scmp.eq.s32.totalorder %s22, 3
    %p265 = por %p263, %p264
    %p266 = scmp.ne.s32.totalorder %s257, %s258
    %p267 = scmp.eq.s32.totalorder %s22, 0
    %p268 = por %p266, %p267
    %p269 = scmp.ne.s32.totalorder %s257, %s258
    %p270 = scmp.eq.s32.totalorder %s23, 3
    %p271 = por %p269, %p270
    %p273 = scmp.ne.s32.totalorder %s258, %s272
    %p274 = scmp.eq.s32.totalorder %s23, 0
    %p275 = por %p273, %p274
    %s277 = sadd.s32 %s276, 1
    %p280 = scmp.eq.s32.totalorder %s17, 3
    %p281 = scmp.ne.s32.totalorder %s276, %s278
    %p282 = scmp.eq.s32.totalorder %s17, 0
    %p283 = por %p281, %p282
    %p284 = scmp.ne.s32.totalorder %s276, %s278
    %p285 = scmp.eq.s32.totalorder %s22, 3
    %p286 = por %p284, %p285
    %p287 = scmp.ne.s32.totalorder %s278, %s279
    %p288 = scmp.eq.s32.totalorder %s22, 0
    %p289 = por %p287, %p288
    %p290 = scmp.ne.s32.totalorder %s278, %s279
    %p291 = scmp.eq.s32.totalorder %s23, 3
    %p292 = por %p290, %p291
    %p294 = scmp.ne.s32.totalorder %s279, %s293
    %p295 = scmp.eq.s32.totalorder %s23, 0
    %p296 = por %p294, %p295
    %s298 = sadd.s32 %s297, 1
    %p301 = scmp.eq.s32.totalorder %s17, 3
    %p302 = scmp.ne.s32.totalorder %s297, %s299
    %p303 = scmp.eq.s32.totalorder %s17, 0
    %p304 = por %p302, %p303
    %p305 = scmp.ne.s32.totalorder %s297, %s299
    %p306 = scmp.eq.s32.totalorder %s22, 3
    %p307 = por %p305, %p306
    %p308 = scmp.ne.s32.totalorder %s299, %s300
    %p309 = scmp.eq.s32.totalorder %s22, 0
    %p310 = por %p308, %p309
    %p311 = scmp.ne.s32.totalorder %s299, %s300
    %p312 = scmp.eq.s32.totalorder %s23, 3
    %p313 = por %p311, %p312
    %p315 = scmp.ne.s32.totalorder %s300, %s314
    %p316 = scmp.eq.s32.totalorder %s23, 0
    %p317 = por %p315, %p316
    %p318 = scmp.le.s32.totalorder 1, %s17
    %p319 = scmp.lt.s32.totalorder %s17, 5
    %p320 = pnand %p318, %p319
    %p321 = pneg %p320
    // Predicated region
    $region9: #{sigat_forward.1} parent=5 // pred_check
      _
    $region10: #{sigat_forward.1} parent=5 // pred_check_branch
      %323 = sbr.rel (%p320) target = $region12
    $region11: #{sigat_forward.1} parent=5 // pred_region
      %s324 = ssub.s32 %s17, 1
      // Predicated region
      $region13: #{sigat_forward.1} parent=11 // pred_check
        %p325 = pneg %p50
      $region14: #{sigat_forward.1} parent=11 // pred_check_branch
        %327 = sbr.rel (%p325) target = $region16
      $region15: #{sigat_forward.1} parent=11 // pred_region
        _
      $region16: #{sigat_forward.1} parent=11 // pred_fallthru
        _
      // Predicated region
      $region17: #{sigat_forward.1} parent=11 // pred_check
        %p328 = pneg %p71
      $region18: #{sigat_forward.1} parent=11 // pred_check_branch
        %330 = sbr.rel (%p328) target = $region20
      $region19: #{sigat_forward.1} parent=11 // pred_region
        _
      $region20: #{sigat_forward.1} parent=11 // pred_fallthru
        _
      // Predicated region
      $region21: #{sigat_forward.1} parent=11 // pred_check
        %p331 = pneg %p226
      $region22: #{sigat_forward.1} parent=11 // pred_check_branch
        %333 = sbr.rel (%p331) target = $region24
      $region23: #{sigat_forward.1} parent=11 // pred_region
        _
      $region24: #{sigat_forward.1} parent=11 // pred_fallthru
        _
      // Predicated region
      $region25: #{sigat_forward.1} parent=11 // pred_check
        %p334 = pneg %p247
      $region26: #{sigat_forward.1} parent=11 // pred_check_branch
        %336 = sbr.rel (%p334) target = $region28
      $region27: #{sigat_forward.1} parent=11 // pred_region
        _
      $region28: #{sigat_forward.1} parent=11 // pred_fallthru
        _
      // Predicated region
      $region29: #{sigat_forward.1} parent=11 // pred_check
        %p337 = pneg %p268
      $region30: #{sigat_forward.1} parent=11 // pred_check_branch
        %339 = sbr.rel (%p337) target = $region32
      $region31: #{sigat_forward.1} parent=11 // pred_region
        _
      $region32: #{sigat_forward.1} parent=11 // pred_fallthru
        _
      // Predicated region
      $region33: #{sigat_forward.1} parent=11 // pred_check
        %p340 = pneg %p289
      $region34: #{sigat_forward.1} parent=11 // pred_check_branch
        %342 = sbr.rel (%p340) target = $region36
      $region35: #{sigat_forward.1} parent=11 // pred_region
        _
      $region36: #{sigat_forward.1} parent=11 // pred_fallthru
        _
    $region12: #{sigat_forward.1} parent=5 // pred_fallthru
      _
    %p343 = scmp.lt.s32.totalorder %s17, 4
    // Predicated region
    $region37: #{sigat_forward.1} parent=5 // pred_check
      %p344 = pneg %p343
    $region38: #{sigat_forward.1} parent=5 // pred_check_branch
      %346 = sbr.rel (%p344) target = $region40
    $region39: #{sigat_forward.1} parent=5 // pred_region
      // Predicated region
      $region41: #{sigat_forward.1} parent=39 // pred_check
        %p347 = pneg %p93
      $region42: #{sigat_forward.1} parent=39 // pred_check_branch
        %349 = sbr.rel (%p347) target = $region44
      $region43: #{sigat_forward.1} parent=39 // pred_region
        %p350 = scmp.lt.s32.totalorder %s24, 3
        %s351 = scalar_select %p350, %s24, 3
        %p352 = scmp.lt.s32.totalorder %s25, 0
        %s353 = scalar_select %p352, %s25, 0
        %s354 = sadd.s32 %s353, %s351
        %s355 = scalar_lea.vmem %s2, %s354
      $region44: #{sigat_forward.1} parent=39 // pred_fallthru
        _
      // Predicated region
      $region45: #{sigat_forward.1} parent=39 // pred_check
        %p356 = pneg %p121
      $region46: #{sigat_forward.1} parent=39 // pred_check_branch
        %358 = sbr.rel (%p356) target = $region48
      $region47: #{sigat_forward.1} parent=39 // pred_region
        %p359 = scmp.lt.s32.totalorder %s24, 3
        %s360 = scalar_select %p359, %s24, 3
        %p361 = scmp.lt.s32.totalorder %s25, 0
        %s362 = scalar_select %p361, %s25, 0
        %s363 = sadd.s32 %s362, %s360
        %s364 = scalar_lea.vmem %s3, %s363
      $region48: #{sigat_forward.1} parent=39 // pred_fallthru
        _
      // Predicated region
      $region49: #{sigat_forward.1} parent=39 // pred_check
        %p365 = pneg %p147
      $region50: #{sigat_forward.1} parent=39 // pred_check_branch
        %367 = sbr.rel (%p365) target = $region52
      $region51: #{sigat_forward.1} parent=39 // pred_region
        %p368 = scmp.lt.s32.totalorder %s24, 3
        %s369 = scalar_select %p368, %s24, 3
        %s370 = smul.addr %s369, 16
        %s371 = smul.addr %s370, 8
        %s372 = scalar_lea.vmem %s4, %s371
      $region52: #{sigat_forward.1} parent=39 // pred_fallthru
        _
      // Predicated region
      $region53: #{sigat_forward.1} parent=39 // pred_check
        %p373 = pneg %p173
      $region54: #{sigat_forward.1} parent=39 // pred_check_branch
        %375 = sbr.rel (%p373) target = $region56
      $region55: #{sigat_forward.1} parent=39 // pred_region
        %p376 = scmp.lt.s32.totalorder %s24, 3
        %s377 = scalar_select %p376, %s24, 3
        %s378 = smul.addr %s377, 16
        %s379 = smul.addr %s378, 8
        %s380 = scalar_lea.vmem %s5, %s379
      $region56: #{sigat_forward.1} parent=39 // pred_fallthru
        _
      // Predicated region
      $region57: #{sigat_forward.1} parent=39 // pred_check
        %p381 = pneg %p199
      $region58: #{sigat_forward.1} parent=39 // pred_check_branch
        %383 = sbr.rel (%p381) target = $region60
      $region59: #{sigat_forward.1} parent=39 // pred_region
        %p384 = scmp.lt.s32.totalorder %s24, 3
        %s385 = scalar_select %p384, %s24, 3
        %s386 = smul.addr %s385, 2
        %s387 = scalar_lea.vmem %s6, %s386
      $region60: #{sigat_forward.1} parent=39 // pred_fallthru
        _
    $region40: #{sigat_forward.1} parent=5 // pred_fallthru
      _
    %p388 = scmp.le.s32.totalorder 1, %s17
    %p389 = scmp.lt.s32.totalorder %s17, 5
    %p390 = pnand %p388, %p389
    %p391 = pneg %p390
    // Predicated region
    $region61: #{sigat_forward.1} parent=5 // pred_check
      _
    $region62: #{sigat_forward.1} parent=5 // pred_check_branch
      %393 = sbr.rel (%p390) target = $region64
    $region63: #{sigat_forward.1} parent=5 // pred_region
      %s394 = ssub.s32 %s17, 1
      %p395 = pneg %p50
      %p396 = pneg %p47
      %p397 = pneg %p71
      %p398 = pneg %p68
      %p399 = scmp.lt.s32.totalorder %s26, 3
      %s400 = scalar_select %p399, %s26, 3
      %p401 = scmp.lt.s32.totalorder %s27, 0
      %s402 = scalar_select %p401, %s27, 0
      %s403 = sadd.s32 %s402, %s400
      %s404 = scalar_lea.vmem %s2, %s403
      %p405 = pneg %p99
      %p406 = pneg %p96
      %p407 = scmp.lt.s32.totalorder %s26, 3
      %s408 = scalar_select %p407, %s26, 3
      %p409 = scmp.lt.s32.totalorder %s27, 0
      %s410 = scalar_select %p409, %s27, 0
      %s411 = sadd.s32 %s410, %s408
      %s412 = scalar_lea.vmem %s3, %s411
      %p413 = pneg %p127
      %p414 = pneg %p124
      %p415 = scmp.lt.s32.totalorder %s26, 3
      %s416 = scalar_select %p415, %s26, 3
      %s417 = smul.addr %s416, 16
      %s418 = smul.addr %s417, 8
      %s419 = scalar_lea.vmem %s4, %s418
      %p420 = pneg %p153
      %p421 = pneg %p150
      %p422 = scmp.lt.s32.totalorder %s26, 3
      %s423 = scalar_select %p422, %s26, 3
      %s424 = smul.addr %s423, 16
      %s425 = smul.addr %s424, 8
      %s426 = scalar_lea.vmem %s5, %s425
      %p427 = pneg %p179
      %p428 = pneg %p176
      %p429 = scmp.lt.s32.totalorder %s26, 3
      %s430 = scalar_select %p429, %s26, 3
      %s431 = smul.addr %s430, 2
      %s432 = scalar_lea.vmem %s6, %s431
      %p433 = pneg %p205
      %p434 = pneg %p202
      %p435 = pneg %p226
      %p436 = pneg %p223
      %p437 = pneg %p247
      %p438 = pneg %p244
      %p439 = pneg %p268
      %p440 = pneg %p265
      %p441 = pneg %p289
      %p442 = pneg %p286
      %p443 = pneg %p310
      %p444 = pneg %p307
      %p445 = scmp.lt.s32.totalorder %s26, 3
      %s446 = scalar_select %p445, %s26, 3
      %p447 = scmp.lt.s32.totalorder %s27, 0
      %s448 = scalar_select %p447, %s27, 0
      %s449 = sadd.s32 %s448, %s446
      %s450 = scalar_lea.vmem %s2, %s449
      %p451 = scmp.lt.s32.totalorder %s26, 3
      %s452 = scalar_select %p451, %s26, 3
      %p453 = scmp.lt.s32.totalorder %s27, 0
      %s454 = scalar_select %p453, %s27, 0
      %s455 = sadd.s32 %s454, %s452
      %s456 = scalar_lea.vmem %s3, %s455
      %p457 = scmp.lt.s32.totalorder %s26, 3
      %s458 = scalar_select %p457, %s26, 3
      %s459 = smul.addr %s458, 16
      %s460 = smul.addr %s459, 8
      %s461 = scalar_lea.vmem %s4, %s460
      %p462 = scmp.lt.s32.totalorder %s26, 3
      %s463 = scalar_select %p462, %s26, 3
      %s464 = smul.addr %s463, 16
      %s465 = smul.addr %s464, 8
      %s466 = scalar_lea.vmem %s5, %s465
      %p467 = scmp.lt.s32.totalorder %s26, 3
      %s468 = scalar_select %p467, %s26, 3
      %s469 = smul.addr %s468, 2
      %s470 = scalar_lea.vmem %s6, %s469
      %p472 = scmp.eq.s32.totalorder %s27, 0
      // Predicated region
      $region65: #{sigat_forward.1} parent=63 // pred_check
        %p473 = pneg %p472
      $region66: #{sigat_forward.1} parent=63 // pred_check_branch
        %475 = sbr.rel (%p473) target = $region68
      $region67: #{sigat_forward.1} parent=63 // pred_region
        %v476 = vld [vmem:[%s461] sm:$0xff]
        %v477 = vld [vmem:[%s461 + $0x8] sm:$0xff]
        %v478 = vld [vmem:[%s461 + $0x10] sm:$0xff]
        %v479 = vld [vmem:[%s461 + $0x18] sm:$0xff]
        %v480 = vld [vmem:[%s461 + $0x20] sm:$0xff]
        %v481 = vld [vmem:[%s461 + $0x28] sm:$0xff]
        %v482 = vld [vmem:[%s461 + $0x30] sm:$0xff]
        %v483 = vld [vmem:[%s461 + $0x38] sm:$0xff]
        %v484 = vld [vmem:[%s461 + $0x40] sm:$0xff]
        %v485 = vld [vmem:[%s461 + $0x48] sm:$0xff]
        %v486 = vld [vmem:[%s461 + $0x50] sm:$0xff]
        %v487 = vld [vmem:[%s461 + $0x58] sm:$0xff]
        %v488 = vld [vmem:[%s461 + $0x60] sm:$0xff]
        %v489 = vld [vmem:[%s461 + $0x68] sm:$0xff]
        %v490 = vld [vmem:[%s461 + $0x70] sm:$0xff]
        %v491 = vld [vmem:[%s461 + $0x78] sm:$0xff]
        %v492 = vld [vmem:[%s0] sm:$0xff]
        %v493 = vld [vmem:[%s0 + $0x8] sm:$0xff]
        %v494 = vld [vmem:[%s0 + $0x10] sm:$0xff]
        %v495 = vld [vmem:[%s0 + $0x18] sm:$0xff]
        %v496 = vld [vmem:[%s0 + $0x20] sm:$0xff]
        %v497 = vld [vmem:[%s0 + $0x28] sm:$0xff]
        %v498 = vld [vmem:[%s0 + $0x30] sm:$0xff]
        %v499 = vld [vmem:[%s0 + $0x38] sm:$0xff]
        %v500 = vld [vmem:[%s0 + $0x40] sm:$0xff]
        %v501 = vld [vmem:[%s0 + $0x48] sm:$0xff]
        %v502 = vld [vmem:[%s0 + $0x50] sm:$0xff]
        %v503 = vld [vmem:[%s0 + $0x58] sm:$0xff]
        %v504 = vld [vmem:[%s0 + $0x60] sm:$0xff]
        %v505 = vld [vmem:[%s0 + $0x68] sm:$0xff]
        %v506 = vld [vmem:[%s0 + $0x70] sm:$0xff]
        %v507 = vld [vmem:[%s0 + $0x78] sm:$0xff]
        %v508 = vld [vmem:[%s466] sm:$0xff]
        %v509 = vld [vmem:[%s466 + $0x8] sm:$0xff]
        %v510 = vld [vmem:[%s466 + $0x10] sm:$0xff]
        %v511 = vld [vmem:[%s466 + $0x18] sm:$0xff]
        %v512 = vld [vmem:[%s466 + $0x20] sm:$0xff]
        %v513 = vld [vmem:[%s466 + $0x28] sm:$0xff]
        %v514 = vld [vmem:[%s466 + $0x30] sm:$0xff]
        %v515 = vld [vmem:[%s466 + $0x38] sm:$0xff]
        %v516 = vld [vmem:[%s466 + $0x40] sm:$0xff]
        %v517 = vld [vmem:[%s466 + $0x48] sm:$0xff]
        %v518 = vld [vmem:[%s466 + $0x50] sm:$0xff]
        %v519 = vld [vmem:[%s466 + $0x58] sm:$0xff]
        %v520 = vld [vmem:[%s466 + $0x60] sm:$0xff]
        %v521 = vld [vmem:[%s466 + $0x68] sm:$0xff]
        %v522 = vld [vmem:[%s466 + $0x70] sm:$0xff]
        %v523 = vld [vmem:[%s466 + $0x78] sm:$0xff]
        %525 = vset.pattern.permute.xlu0 0
        %526 = vperm.xlu0 %525, %v508
        %v527 = vpop.permute.xlu0 %526
        %530 = vset.pattern.permute.xlu0 0
        %531 = vperm.xlu0 %530, %v509
        %v532 = vpop.permute.xlu0 %531
        %535 = vset.pattern.permute.xlu0 0
        %536 = vperm.xlu0 %535, %v510
        %v537 = vpop.permute.xlu0 %536
        %540 = vset.pattern.permute.xlu0 0
        %541 = vperm.xlu0 %540, %v511
        %v542 = vpop.permute.xlu0 %541
        %545 = vset.pattern.permute.xlu0 0
        %546 = vperm.xlu0 %545, %v512
        %v547 = vpop.permute.xlu0 %546
        %550 = vset.pattern.permute.xlu0 0
        %551 = vperm.xlu0 %550, %v513
        %v552 = vpop.permute.xlu0 %551
        %555 = vset.pattern.permute.xlu0 0
        %556 = vperm.xlu0 %555, %v514
        %v557 = vpop.permute.xlu0 %556
        %560 = vset.pattern.permute.xlu0 0
        %561 = vperm.xlu0 %560, %v515
        %v562 = vpop.permute.xlu0 %561
        %565 = vset.pattern.permute.xlu0 0
        %566 = vperm.xlu0 %565, %v516
        %v567 = vpop.permute.xlu0 %566
        %570 = vset.pattern.permute.xlu0 0
        %571 = vperm.xlu0 %570, %v517
        %v572 = vpop.permute.xlu0 %571
        %575 = vset.pattern.permute.xlu0 0
        %576 = vperm.xlu0 %575, %v518
        %v577 = vpop.permute.xlu0 %576
        %580 = vset.pattern.permute.xlu0 0
        %581 = vperm.xlu0 %580, %v519
        %v582 = vpop.permute.xlu0 %581
        %585 = vset.pattern.permute.xlu0 0
        %586 = vperm.xlu0 %585, %v520
        %v587 = vpop.permute.xlu0 %586
        %590 = vset.pattern.permute.xlu0 0
        %591 = vperm.xlu0 %590, %v521
        %v592 = vpop.permute.xlu0 %591
        %595 = vset.pattern.permute.xlu0 0
        %596 = vperm.xlu0 %595, %v522
        %v597 = vpop.permute.xlu0 %596
        %600 = vset.pattern.permute.xlu0 0
        %601 = vperm.xlu0 %600, %v523
        %v602 = vpop.permute.xlu0 %601
        %604 = vmatprep.subr.mxu0 0.0
        %605 = vmatpush1.msra.mxu0 %v507
        %606 = vmatprep.subr.mxu0 0.0
        %607 = vmatpush1.msra.mxu0 %v506
        %608 = vmatprep.subr.mxu0 0.0
        %609 = vmatpush1.msra.mxu0 %v505
        %610 = vmatprep.subr.mxu0 0.0
        %611 = vmatpush1.msra.mxu0 %v504
        %612 = vmatprep.subr.mxu0 0.0
        %613 = vmatpush1.msra.mxu0 %v503
        %614 = vmatprep.subr.mxu0 0.0
        %615 = vmatpush1.msra.mxu0 %v502
        %616 = vmatprep.subr.mxu0 0.0
        %617 = vmatpush1.msra.mxu0 %v501
        %618 = vmatprep.subr.mxu0 0.0
        %619 = vmatpush1.msra.mxu0 %v500
        %620 = vmatprep.subr.mxu0 0.0
        %621 = vmatpush1.msra.mxu0 %v499
        %622 = vmatprep.subr.mxu0 0.0
        %623 = vmatpush1.msra.mxu0 %v498
        %624 = vmatprep.subr.mxu0 0.0
        %625 = vmatpush1.msra.mxu0 %v497
        %626 = vmatprep.subr.mxu0 0.0
        %627 = vmatpush1.msra.mxu0 %v496
        %628 = vmatprep.subr.mxu0 0.0
        %629 = vmatpush1.msra.mxu0 %v495
        %630 = vmatprep.subr.mxu0 0.0
        %631 = vmatpush1.msra.mxu0 %v494
        %632 = vmatprep.subr.mxu0 0.0
        %633 = vmatpush1.msra.mxu0 %v493
        %634 = vmatprep.subr.mxu0 0.0
        %635 = vmatpush1.msra.mxu0 %v492
        %636 = vmatprep.subr.mxu0 0.0
        %637 = vmatpush2.msra.mxu0 0.0
        %638 = vmatprep.subr.mxu0 0.0
        %639 = vmatpush2.msra.mxu0 0.0
        %640 = vmatprep.subr.mxu0 0.0
        %641 = vmatpush2.msra.mxu0 0.0
        %642 = vmatprep.subr.mxu0 0.0
        %643 = vmatpush2.msra.mxu0 0.0
        %644 = vmatprep.subr.mxu0 0.0
        %645 = vmatpush2.msra.mxu0 0.0
        %646 = vmatprep.subr.mxu0 0.0
        %647 = vmatpush2.msra.mxu0 0.0
        %648 = vmatprep.subr.mxu0 0.0
        %649 = vmatpush2.msra.mxu0 0.0
        %650 = vmatprep.subr.mxu0 0.0
        %651 = vmatpush2.msra.mxu0 0.0
        %652 = vmatprep.subr.mxu0 0.0
        %653 = vmatpush2.msra.mxu0 0.0
        %654 = vmatprep.subr.mxu0 0.0
        %655 = vmatpush2.msra.mxu0 0.0
        %656 = vmatprep.subr.mxu0 0.0
        %657 = vmatpush2.msra.mxu0 0.0
        %658 = vmatprep.subr.mxu0 0.0
        %659 = vmatpush2.msra.mxu0 0.0
        %660 = vmatprep.subr.mxu0 0.0
        %661 = vmatpush2.msra.mxu0 0.0
        %662 = vmatprep.subr.mxu0 0.0
        %663 = vmatpush2.msra.mxu0 0.0
        %664 = vmatprep.subr.mxu0 0.0
        %665 = vmatpush2.msra.mxu0 0.0
        %666 = vmatprep.subr.mxu0 0.0
        %667 = vmatpush2.msra.mxu0 0.0
        %668 = vmatprep.mubr.f32.mxu0 0.0
        %669 = vmatmul.mubr.f32.gmra.mxu0 %v476
        %v670 = vpop.f32.mrf.mxu0
        %v671 = vadd.f32 %v527, %v670
        %v672 = vpop.f32.mrf.mxu0
        %673 = vmatprep.mubr.f32.mxu0 0.0
        %674 = vmatmul.mubr.f32.gmra.mxu0 %v477
        %v675 = vpop.f32.mrf.mxu0
        %v676 = vadd.f32 %v532, %v675
        %v677 = vpop.f32.mrf.mxu0
        %678 = vmatprep.mubr.f32.mxu0 0.0
        %679 = vmatmul.mubr.f32.gmra.mxu0 %v478
        %v680 = vpop.f32.mrf.mxu0
        %v681 = vadd.f32 %v537, %v680
        %v682 = vpop.f32.mrf.mxu0
        %683 = vmatprep.mubr.f32.mxu0 0.0
        %684 = vmatmul.mubr.f32.gmra.mxu0 %v479
        %v685 = vpop.f32.mrf.mxu0
        %v686 = vadd.f32 %v542, %v685
        %v687 = vpop.f32.mrf.mxu0
        %688 = vmatprep.mubr.f32.mxu0 0.0
        %689 = vmatmul.mubr.f32.gmra.mxu0 %v480
        %v690 = vpop.f32.mrf.mxu0
        %v691 = vadd.f32 %v547, %v690
        %v692 = vpop.f32.mrf.mxu0
        %693 = vmatprep.mubr.f32.mxu0 0.0
        %694 = vmatmul.mubr.f32.gmra.mxu0 %v481
        %v695 = vpop.f32.mrf.mxu0
        %v696 = vadd.f32 %v552, %v695
        %v697 = vpop.f32.mrf.mxu0
        %698 = vmatprep.mubr.f32.mxu0 0.0
        %699 = vmatmul.mubr.f32.gmra.mxu0 %v482
        %v700 = vpop.f32.mrf.mxu0
        %v701 = vadd.f32 %v557, %v700
        %v702 = vpop.f32.mrf.mxu0
        %703 = vmatprep.mubr.f32.mxu0 0.0
        %704 = vmatmul.mubr.f32.gmra.mxu0 %v483
        %v705 = vpop.f32.mrf.mxu0
        %v706 = vadd.f32 %v562, %v705
        %v707 = vpop.f32.mrf.mxu0
        %708 = vmatprep.mubr.f32.mxu0 0.0
        %709 = vmatmul.mubr.f32.gmra.mxu0 %v484
        %v710 = vpop.f32.mrf.mxu0
        %v711 = vadd.f32 %v567, %v710
        %v712 = vpop.f32.mrf.mxu0
        %713 = vmatprep.mubr.f32.mxu0 0.0
        %714 = vmatmul.mubr.f32.gmra.mxu0 %v485
        %v715 = vpop.f32.mrf.mxu0
        %v716 = vadd.f32 %v572, %v715
        %v717 = vpop.f32.mrf.mxu0
        %718 = vmatprep.mubr.f32.mxu0 0.0
        %719 = vmatmul.mubr.f32.gmra.mxu0 %v486
        %v720 = vpop.f32.mrf.mxu0
        %v721 = vadd.f32 %v577, %v720
        %v722 = vpop.f32.mrf.mxu0
        %723 = vmatprep.mubr.f32.mxu0 0.0
        %724 = vmatmul.mubr.f32.gmra.mxu0 %v487
        %v725 = vpop.f32.mrf.mxu0
        %v726 = vadd.f32 %v582, %v725
        %v727 = vpop.f32.mrf.mxu0
        %728 = vmatprep.mubr.f32.mxu0 0.0
        %729 = vmatmul.mubr.f32.gmra.mxu0 %v488
        %v730 = vpop.f32.mrf.mxu0
        %v731 = vadd.f32 %v587, %v730
        %v732 = vpop.f32.mrf.mxu0
        %733 = vmatprep.mubr.f32.mxu0 0.0
        %734 = vmatmul.mubr.f32.gmra.mxu0 %v489
        %v735 = vpop.f32.mrf.mxu0
        %v736 = vadd.f32 %v592, %v735
        %v737 = vpop.f32.mrf.mxu0
        %738 = vmatprep.mubr.f32.mxu0 0.0
        %739 = vmatmul.mubr.f32.gmra.mxu0 %v490
        %v740 = vpop.f32.mrf.mxu0
        %v741 = vadd.f32 %v597, %v740
        %v742 = vpop.f32.mrf.mxu0
        %743 = vmatprep.mubr.f32.mxu0 0.0
        %744 = vmatmul.mubr.f32.gmra.mxu0 %v491
        %v745 = vpop.f32.mrf.mxu0
        %v746 = vadd.f32 %v602, %v745
        %v747 = vpop.f32.mrf.mxu0
        %748 = vdwg.mxu0
        %v749 = vld [vmem:[%s470] sm:$0x3]
        %750 = vmatprep.subr.mxu0 0.0
        %751 = vmatpush1.msra.mxu0 %v746
        %752 = vmatprep.subr.mxu0 0.0
        %753 = vmatpush1.msra.mxu0 %v741
        %754 = vmatprep.subr.mxu0 0.0
        %755 = vmatpush1.msra.mxu0 %v736
        %756 = vmatprep.subr.mxu0 0.0
        %757 = vmatpush1.msra.mxu0 %v731
        %758 = vmatprep.subr.mxu0 0.0
        %759 = vmatpush1.msra.mxu0 %v726
        %760 = vmatprep.subr.mxu0 0.0
        %761 = vmatpush1.msra.mxu0 %v721
        %762 = vmatprep.subr.mxu0 0.0
        %763 = vmatpush1.msra.mxu0 %v716
        %764 = vmatprep.subr.mxu0 0.0
        %765 = vmatpush1.msra.mxu0 %v711
        %766 = vmatprep.subr.mxu0 0.0
        %767 = vmatpush1.msra.mxu0 %v706
        %768 = vmatprep.subr.mxu0 0.0
        %769 = vmatpush1.msra.mxu0 %v701
        %770 = vmatprep.subr.mxu0 0.0
        %771 = vmatpush1.msra.mxu0 %v696
        %772 = vmatprep.subr.mxu0 0.0
        %773 = vmatpush1.msra.mxu0 %v691
        %774 = vmatprep.subr.mxu0 0.0
        %775 = vmatpush1.msra.mxu0 %v686
        %776 = vmatprep.subr.mxu0 0.0
        %777 = vmatpush1.msra.mxu0 %v681
        %778 = vmatprep.subr.mxu0 0.0
        %779 = vmatpush1.msra.mxu0 %v676
        %780 = vmatprep.subr.mxu0 0.0
        %781 = vmatpush1.msra.mxu0 %v671
        %782 = vmatprep.subr.mxu0 0.0
        %783 = vmatpush2.msra.mxu0 0.0
        %784 = vmatprep.subr.mxu0 0.0
        %785 = vmatpush2.msra.mxu0 0.0
        %786 = vmatprep.subr.mxu0 0.0
        %787 = vmatpush2.msra.mxu0 0.0
        %788 = vmatprep.subr.mxu0 0.0
        %789 = vmatpush2.msra.mxu0 0.0
        %790 = vmatprep.subr.mxu0 0.0
        %791 = vmatpush2.msra.mxu0 0.0
        %792 = vmatprep.subr.mxu0 0.0
        %793 = vmatpush2.msra.mxu0 0.0
        %794 = vmatprep.subr.mxu0 0.0
        %795 = vmatpush2.msra.mxu0 0.0
        %796 = vmatprep.subr.mxu0 0.0
        %797 = vmatpush2.msra.mxu0 0.0
        %798 = vmatprep.subr.mxu0 0.0
        %799 = vmatpush2.msra.mxu0 0.0
        %800 = vmatprep.subr.mxu0 0.0
        %801 = vmatpush2.msra.mxu0 0.0
        %802 = vmatprep.subr.mxu0 0.0
        %803 = vmatpush2.msra.mxu0 0.0
        %804 = vmatprep.subr.mxu0 0.0
        %805 = vmatpush2.msra.mxu0 0.0
        %806 = vmatprep.subr.mxu0 0.0
        %807 = vmatpush2.msra.mxu0 0.0
        %808 = vmatprep.subr.mxu0 0.0
        %809 = vmatpush2.msra.mxu0 0.0
        %810 = vmatprep.subr.mxu0 0.0
        %811 = vmatpush2.msra.mxu0 0.0
        %812 = vmatprep.subr.mxu0 0.0
        %813 = vmatpush2.msra.mxu0 0.0
        %814 = vmatprep.mubr.f32.mxu0 0.0
        %815 = vmatmul.mubr.f32.gmra.mxu0 %v749
        %v816 = vpop.f32.mrf.mxu0
        %v817 = vadd.f32 0.0, %v816
        %v818 = vpop.f32.mrf.mxu0
        %819 = vdwg.mxu0
        %v820 = vlaneseq
        %v821 = vshrl.u32 %v820, 7
        %v822 = vadd.s32 %v821, 8
        %v823 = vadd.s32 %v821, 16
        %v824 = vadd.s32 %v821, 24
        %v825 = vadd.s32 %v821, 32
        %v826 = vadd.s32 %v821, 40
        %v827 = vadd.s32 %v821, 48
        %v828 = vadd.s32 %v821, 56
        %v829 = vadd.s32 %v821, 64
        %v830 = vadd.s32 %v821, 72
        %v831 = vadd.s32 %v821, 80
        %v832 = vadd.s32 %v821, 88
        %v833 = vadd.s32 %v821, 96
        %v834 = vadd.s32 %v821, 104
        %v835 = vadd.s32 %v821, 112
        %v836 = vadd.s32 %v821, 120
        %vm837 = vcmp.eq.s32.totalorder %v821, 127
        %vm838 = vcmp.eq.s32.totalorder %v822, 127
        %vm839 = vcmp.eq.s32.totalorder %v823, 127
        %vm840 = vcmp.eq.s32.totalorder %v824, 127
        %vm841 = vcmp.eq.s32.totalorder %v825, 127
        %vm842 = vcmp.eq.s32.totalorder %v826, 127
        %vm843 = vcmp.eq.s32.totalorder %v827, 127
        %vm844 = vcmp.eq.s32.totalorder %v828, 127
        %vm845 = vcmp.eq.s32.totalorder %v829, 127
        %vm846 = vcmp.eq.s32.totalorder %v830, 127
        %vm847 = vcmp.eq.s32.totalorder %v831, 127
        %vm848 = vcmp.eq.s32.totalorder %v832, 127
        %vm849 = vcmp.eq.s32.totalorder %v833, 127
        %vm850 = vcmp.eq.s32.totalorder %v834, 127
        %vm851 = vcmp.eq.s32.totalorder %v835, 127
        %vm852 = vcmp.eq.s32.totalorder %v836, 127
        %v853 = vsel %vm837, 1, 0
        %v854 = vsel %vm838, 1, 0
        %v855 = vsel %vm839, 1, 0
        %v856 = vsel %vm840, 1, 0
        %v857 = vsel %vm841, 1, 0
        %v858 = vsel %vm842, 1, 0
        %v859 = vsel %vm843, 1, 0
        %v860 = vsel %vm844, 1, 0
        %v861 = vsel %vm845, 1, 0
        %v862 = vsel %vm846, 1, 0
        %v863 = vsel %vm847, 1, 0
        %v864 = vsel %vm848, 1, 0
        %v865 = vsel %vm849, 1, 0
        %v866 = vsel %vm850, 1, 0
        %v867 = vsel %vm851, 1, 0
        %v868 = vsel %vm852, 1, 0
        %v869 = vcvt.s32.f32 %v853
        %v870 = vcvt.s32.f32 %v854
        %v871 = vcvt.s32.f32 %v855
        %v872 = vcvt.s32.f32 %v856
        %v873 = vcvt.s32.f32 %v857
        %v874 = vcvt.s32.f32 %v858
        %v875 = vcvt.s32.f32 %v859
        %v876 = vcvt.s32.f32 %v860
        %v877 = vcvt.s32.f32 %v861
        %v878 = vcvt.s32.f32 %v862
        %v879 = vcvt.s32.f32 %v863
        %v880 = vcvt.s32.f32 %v864
        %v881 = vcvt.s32.f32 %v865
        %v882 = vcvt.s32.f32 %v866
        %v883 = vcvt.s32.f32 %v867
        %v884 = vcvt.s32.f32 %v868
        %v885 = vlaneseq
        %v886 = vshrl.u32 %v885, 7
        %v887 = vsub.s32 1, %v886
        %v888 = vrot.slane %v817, %v887
        %v889 = vmul.f32 %v869, %v888
        %v890 = vmul.f32 %v870, %v888
        %v891 = vmul.f32 %v871, %v888
        %v892 = vmul.f32 %v872, %v888
        %v893 = vmul.f32 %v873, %v888
        %v894 = vmul.f32 %v874, %v888
        %v895 = vmul.f32 %v875, %v888
        %v896 = vmul.f32 %v876, %v888
        %v897 = vmul.f32 %v877, %v888
        %v898 = vmul.f32 %v878, %v888
        %v899 = vmul.f32 %v879, %v888
        %v900 = vmul.f32 %v880, %v888
        %v901 = vmul.f32 %v881, %v888
        %v902 = vmul.f32 %v882, %v888
        %v903 = vmul.f32 %v883, %v888
        %v904 = vmul.f32 %v884, %v888
        %v905 = vadd.f32 %v671, %v889
        %v906 = vadd.f32 %v676, %v890
        %v907 = vadd.f32 %v681, %v891
        %v908 = vadd.f32 %v686, %v892
        %v909 = vadd.f32 %v691, %v893
        %v910 = vadd.f32 %v696, %v894
        %v911 = vadd.f32 %v701, %v895
        %v912 = vadd.f32 %v706, %v896
        %v913 = vadd.f32 %v711, %v897
        %v914 = vadd.f32 %v716, %v898
        %v915 = vadd.f32 %v721, %v899
        %v916 = vadd.f32 %v726, %v900
        %v917 = vadd.f32 %v731, %v901
        %v918 = vadd.f32 %v736, %v902
        %v919 = vadd.f32 %v741, %v903
        %v920 = vadd.f32 %v746, %v904
        %v921 = vpack.c.bf16 %v906, %v905
        %v922 = vpack.c.bf16 %v908, %v907
        %v923 = vpack.c.bf16 %v910, %v909
        %v924 = vpack.c.bf16 %v912, %v911
        %v925 = vpack.c.bf16 %v914, %v913
        %v926 = vpack.c.bf16 %v916, %v915
        %v927 = vpack.c.bf16 %v918, %v917
        %v928 = vpack.c.bf16 %v920, %v919
        %v937 = vunpack.c.l.b16 %v921
        %v938 = vunpack.c.h.b16 %v921
        %v939 = vunpack.c.l.b16 %v922
        %v940 = vunpack.c.h.b16 %v922
        %v941 = vunpack.c.l.b16 %v923
        %v942 = vunpack.c.h.b16 %v923
        %v943 = vunpack.c.l.b16 %v924
        %v944 = vunpack.c.h.b16 %v924
        %v945 = vunpack.c.l.b16 %v925
        %v946 = vunpack.c.h.b16 %v925
        %v947 = vunpack.c.l.b16 %v926
        %v948 = vunpack.c.h.b16 %v926
        %v949 = vunpack.c.l.b16 %v927
        %v950 = vunpack.c.h.b16 %v927
        %v951 = vunpack.c.l.b16 %v928
        %v952 = vunpack.c.h.b16 %v928
        %v953 = vpack.c.b16 %v937, %v937
        %v954 = vpack.c.b16 %v938, %v938
        %v955 = vpack.c.b16 %v939, %v939
        %v956 = vpack.c.b16 %v940, %v940
        %v957 = vpack.c.b16 %v941, %v941
        %v958 = vpack.c.b16 %v942, %v942
        %v959 = vpack.c.b16 %v943, %v943
        %v960 = vpack.c.b16 %v944, %v944
        %v961 = vpack.c.b16 %v945, %v945
        %v962 = vpack.c.b16 %v946, %v946
        %v963 = vpack.c.b16 %v947, %v947
        %v964 = vpack.c.b16 %v948, %v948
        %v965 = vpack.c.b16 %v949, %v949
        %v966 = vpack.c.b16 %v950, %v950
        %v967 = vpack.c.b16 %v951, %v951
        %v968 = vpack.c.b16 %v952, %v952
        %985 = vst [vmem:[#allocation3] sm:$0xf] %v953
        %986 = vst [vmem:[#allocation3 + $0x4] sm:$0xf] %v954
        %987 = vst [vmem:[#allocation3 + $0x8] sm:$0xf] %v955
        %988 = vst [vmem:[#allocation3 + $0xc] sm:$0xf] %v956
        %989 = vst [vmem:[#allocation3 + $0x10] sm:$0xf] %v957
        %990 = vst [vmem:[#allocation3 + $0x14] sm:$0xf] %v958
        %991 = vst [vmem:[#allocation3 + $0x18] sm:$0xf] %v959
        %992 = vst [vmem:[#allocation3 + $0x1c] sm:$0xf] %v960
        %993 = vst [vmem:[#allocation3 + $0x20] sm:$0xf] %v961
        %994 = vst [vmem:[#allocation3 + $0x24] sm:$0xf] %v962
        %995 = vst [vmem:[#allocation3 + $0x28] sm:$0xf] %v963
        %996 = vst [vmem:[#allocation3 + $0x2c] sm:$0xf] %v964
        %997 = vst [vmem:[#allocation3 + $0x30] sm:$0xf] %v965
        %998 = vst [vmem:[#allocation3 + $0x34] sm:$0xf] %v966
        %999 = vst [vmem:[#allocation3 + $0x38] sm:$0xf] %v967
        %1000 = vst [vmem:[#allocation3 + $0x3c] sm:$0xf] %v968
        %v1001 = vpack.c.bf16 %v817, %v817
        %vm1002 = vcmask 1040384
        %vm1003 = vsmask.f32 256
        %vm1004 = vmand %vm1002, %vm1003
        %v1005 = vld [vmem:[#allocation4] sm:$0x1]
        %v1006 = vsel %vm1004, %v1001, %v1005
        %1007 = vst [vmem:[#allocation4] sm:$0x1] %v1006
        %s1008 = smul.u32 %s26, 128
        %s1009 = scalar_lea.vmem [#allocation2], %s1008
        %1010 = vst [vmem:[%s1009] sm:$0xff] 0.0
        %1011 = vst [vmem:[%s1009 + $0x8] sm:$0xff] 0.0
        %1012 = vst [vmem:[%s1009 + $0x10] sm:$0xff] 0.0
        %1013 = vst [vmem:[%s1009 + $0x18] sm:$0xff] 0.0
        %1014 = vst [vmem:[%s1009 + $0x20] sm:$0xff] 0.0
        %1015 = vst [vmem:[%s1009 + $0x28] sm:$0xff] 0.0
        %1016 = vst [vmem:[%s1009 + $0x30] sm:$0xff] 0.0
        %1017 = vst [vmem:[%s1009 + $0x38] sm:$0xff] 0.0
        %1018 = vst [vmem:[%s1009 + $0x40] sm:$0xff] 0.0
        %1019 = vst [vmem:[%s1009 + $0x48] sm:$0xff] 0.0
        %1020 = vst [vmem:[%s1009 + $0x50] sm:$0xff] 0.0
        %1021 = vst [vmem:[%s1009 + $0x58] sm:$0xff] 0.0
        %1022 = vst [vmem:[%s1009 + $0x60] sm:$0xff] 0.0
        %1023 = vst [vmem:[%s1009 + $0x68] sm:$0xff] 0.0
        %1024 = vst [vmem:[%s1009 + $0x70] sm:$0xff] 0.0
        %1025 = vst [vmem:[%s1009 + $0x78] sm:$0xff] 0.0
      $region68: #{sigat_forward.1} parent=63 // pred_fallthru
        _
      %v1026 = vld [vmem:[%s450] sm:$0x1]
      %v1027 = vld [vmem:[%s456] sm:$0x1]
      %v1028 = vlaneseq
      %v1029 = vshrl.u32 %v1028, 7
      %v1030 = vadd.s32 %v1029, 8
      %v1031 = vadd.s32 %v1029, 16
      %v1032 = vadd.s32 %v1029, 24
      %v1033 = vadd.s32 %v1029, 32
      %v1034 = vadd.s32 %v1029, 40
      %v1035 = vadd.s32 %v1029, 48
      %v1036 = vadd.s32 %v1029, 56
      %v1037 = vadd.s32 %v1029, 64
      %v1038 = vadd.s32 %v1029, 72
      %v1039 = vadd.s32 %v1029, 80
      %v1040 = vadd.s32 %v1029, 88
      %v1041 = vadd.s32 %v1029, 96
      %v1042 = vadd.s32 %v1029, 104
      %v1043 = vadd.s32 %v1029, 112
      %v1044 = vadd.s32 %v1029, 120
      %v1045 = vlaneseq
      %v1046 = vshrl.u32 %v1045, 7
      %v1047 = vsub.s32 0, %v1046
      %v1048 = vrot.slane %v1026, %v1047
      %vm1049 = vcmp.eq.s32.totalorder %v1048, %v1029
      %vm1050 = vcmp.eq.s32.totalorder %v1048, %v1030
      %vm1051 = vcmp.eq.s32.totalorder %v1048, %v1031
      %vm1052 = vcmp.eq.s32.totalorder %v1048, %v1032
      %vm1053 = vcmp.eq.s32.totalorder %v1048, %v1033
      %vm1054 = vcmp.eq.s32.totalorder %v1048, %v1034
      %vm1055 = vcmp.eq.s32.totalorder %v1048, %v1035
      %vm1056 = vcmp.eq.s32.totalorder %v1048, %v1036
      %vm1057 = vcmp.eq.s32.totalorder %v1048, %v1037
      %vm1058 = vcmp.eq.s32.totalorder %v1048, %v1038
      %vm1059 = vcmp.eq.s32.totalorder %v1048, %v1039
      %vm1060 = vcmp.eq.s32.totalorder %v1048, %v1040
      %vm1061 = vcmp.eq.s32.totalorder %v1048, %v1041
      %vm1062 = vcmp.eq.s32.totalorder %v1048, %v1042
      %vm1063 = vcmp.eq.s32.totalorder %v1048, %v1043
      %vm1064 = vcmp.eq.s32.totalorder %v1048, %v1044
      %v1065 = vsel %vm1049, 1.0, 0.0
      %v1066 = vsel %vm1050, 1.0, 0.0
      %v1067 = vsel %vm1051, 1.0, 0.0
      %v1068 = vsel %vm1052, 1.0, 0.0
      %v1069 = vsel %vm1053, 1.0, 0.0
      %v1070 = vsel %vm1054, 1.0, 0.0
      %v1071 = vsel %vm1055, 1.0, 0.0
      %v1072 = vsel %vm1056, 1.0, 0.0
      %v1073 = vsel %vm1057, 1.0, 0.0
      %v1074 = vsel %vm1058, 1.0, 0.0
      %v1075 = vsel %vm1059, 1.0, 0.0
      %v1076 = vsel %vm1060, 1.0, 0.0
      %v1077 = vsel %vm1061, 1.0, 0.0
      %v1078 = vsel %vm1062, 1.0, 0.0
      %v1079 = vsel %vm1063, 1.0, 0.0
      %v1080 = vsel %vm1064, 1.0, 0.0
      %v1081 = vpack.c.bf16 %v1066, %v1065
      %v1082 = vpack.c.bf16 %v1068, %v1067
      %v1083 = vpack.c.bf16 %v1070, %v1069
      %v1084 = vpack.c.bf16 %v1072, %v1071
      %v1085 = vpack.c.bf16 %v1074, %v1073
      %v1086 = vpack.c.bf16 %v1076, %v1075
      %v1087 = vpack.c.bf16 %v1078, %v1077
      %v1088 = vpack.c.bf16 %v1080, %v1079
      %v1089 = vlaneseq
      %v1090 = vshrl.u32 %v1089, 7
      %v1091 = vsub.s32 0, %v1090
      %v1092 = vrot.slane %v1027, %v1091
      %vm1093 = vcmp.eq.s32.totalorder %v1092, %v1029
      %vm1094 = vcmp.eq.s32.totalorder %v1092, %v1030
      %vm1095 = vcmp.eq.s32.totalorder %v1092, %v1031
      %vm1096 = vcmp.eq.s32.totalorder %v1092, %v1032
      %vm1097 = vcmp.eq.s32.totalorder %v1092, %v1033
      %vm1098 = vcmp.eq.s32.totalorder %v1092, %v1034
      %vm1099 = vcmp.eq.s32.totalorder %v1092, %v1035
      %vm1100 = vcmp.eq.s32.totalorder %v1092, %v1036
      %vm1101 = vcmp.eq.s32.totalorder %v1092, %v1037
      %vm1102 = vcmp.eq.s32.totalorder %v1092, %v1038
      %vm1103 = vcmp.eq.s32.totalorder %v1092, %v1039
      %vm1104 = vcmp.eq.s32.totalorder %v1092, %v1040
      %vm1105 = vcmp.eq.s32.totalorder %v1092, %v1041
      %vm1106 = vcmp.eq.s32.totalorder %v1092, %v1042
      %vm1107 = vcmp.eq.s32.totalorder %v1092, %v1043
      %vm1108 = vcmp.eq.s32.totalorder %v1092, %v1044
      %v1109 = vsel %vm1093, 1.0, 0.0
      %v1110 = vsel %vm1094, 1.0, 0.0
      %v1111 = vsel %vm1095, 1.0, 0.0
      %v1112 = vsel %vm1096, 1.0, 0.0
      %v1113 = vsel %vm1097, 1.0, 0.0
      %v1114 = vsel %vm1098, 1.0, 0.0
      %v1115 = vsel %vm1099, 1.0, 0.0
      %v1116 = vsel %vm1100, 1.0, 0.0
      %v1117 = vsel %vm1101, 1.0, 0.0
      %v1118 = vsel %vm1102, 1.0, 0.0
      %v1119 = vsel %vm1103, 1.0, 0.0
      %v1120 = vsel %vm1104, 1.0, 0.0
      %v1121 = vsel %vm1105, 1.0, 0.0
      %v1122 = vsel %vm1106, 1.0, 0.0
      %v1123 = vsel %vm1107, 1.0, 0.0
      %v1124 = vsel %vm1108, 1.0, 0.0
      %v1125 = vpack.c.bf16 %v1110, %v1109
      %v1126 = vpack.c.bf16 %v1112, %v1111
      %v1127 = vpack.c.bf16 %v1114, %v1113
      %v1128 = vpack.c.bf16 %v1116, %v1115
      %v1129 = vpack.c.bf16 %v1118, %v1117
      %v1130 = vpack.c.bf16 %v1120, %v1119
      %v1131 = vpack.c.bf16 %v1122, %v1121
      %v1132 = vpack.c.bf16 %v1124, %v1123
      %v1133 = vld [vmem:[#allocation3] sm:$0xf]
      %v1134 = vld [vmem:[#allocation3 + $0x4] sm:$0xf]
      %v1135 = vld [vmem:[#allocation3 + $0x8] sm:$0xf]
      %v1136 = vld [vmem:[#allocation3 + $0xc] sm:$0xf]
      %v1137 = vld [vmem:[#allocation3 + $0x10] sm:$0xf]
      %v1138 = vld [vmem:[#allocation3 + $0x14] sm:$0xf]
      %v1139 = vld [vmem:[#allocation3 + $0x18] sm:$0xf]
      %v1140 = vld [vmem:[#allocation3 + $0x1c] sm:$0xf]
      %v1141 = vld [vmem:[#allocation3 + $0x20] sm:$0xf]
      %v1142 = vld [vmem:[#allocation3 + $0x24] sm:$0xf]
      %v1143 = vld [vmem:[#allocation3 + $0x28] sm:$0xf]
      %v1144 = vld [vmem:[#allocation3 + $0x2c] sm:$0xf]
      %v1145 = vld [vmem:[#allocation3 + $0x30] sm:$0xf]
      %v1146 = vld [vmem:[#allocation3 + $0x34] sm:$0xf]
      %v1147 = vld [vmem:[#allocation3 + $0x38] sm:$0xf]
      %v1148 = vld [vmem:[#allocation3 + $0x3c] sm:$0xf]
      %v1165 = vunpack.c.l.b16 %v1133
      %v1166 = vunpack.c.l.b16 %v1134
      %v1167 = vunpack.c.l.b16 %v1135
      %v1168 = vunpack.c.l.b16 %v1136
      %v1169 = vunpack.c.l.b16 %v1137
      %v1170 = vunpack.c.l.b16 %v1138
      %v1171 = vunpack.c.l.b16 %v1139
      %v1172 = vunpack.c.l.b16 %v1140
      %v1173 = vunpack.c.l.b16 %v1141
      %v1174 = vunpack.c.l.b16 %v1142
      %v1175 = vunpack.c.l.b16 %v1143
      %v1176 = vunpack.c.l.b16 %v1144
      %v1177 = vunpack.c.l.b16 %v1145
      %v1178 = vunpack.c.l.b16 %v1146
      %v1179 = vunpack.c.l.b16 %v1147
      %v1180 = vunpack.c.l.b16 %v1148
      %v1181 = vpack.c.b16 %v1166, %v1165
      %v1182 = vpack.c.b16 %v1168, %v1167
      %v1183 = vpack.c.b16 %v1170, %v1169
      %v1184 = vpack.c.b16 %v1172, %v1171
      %v1185 = vpack.c.b16 %v1174, %v1173
      %v1186 = vpack.c.b16 %v1176, %v1175
      %v1187 = vpack.c.b16 %v1178, %v1177
      %v1188 = vpack.c.b16 %v1180, %v1179
      %1197 = vmatprep.subr.bf16.mxu0 0
      %1198 = vmatpush1.bf16.msra.mxu0 %v1132
      %1199 = vmatprep.subr.bf16.mxu0 0
      %1200 = vmatpush1.bf16.msra.mxu0 %v1131
      %1201 = vmatprep.subr.bf16.mxu0 0
      %1202 = vmatpush1.bf16.msra.mxu0 %v1130
      %1203 = vmatprep.subr.bf16.mxu0 0
      %1204 = vmatpush1.bf16.msra.mxu0 %v1129
      %1205 = vmatprep.subr.bf16.mxu0 0
      %1206 = vmatpush1.bf16.msra.mxu0 %v1128
      %1207 = vmatprep.subr.bf16.mxu0 0
      %1208 = vmatpush1.bf16.msra.mxu0 %v1127
      %1209 = vmatprep.subr.bf16.mxu0 0
      %1210 = vmatpush1.bf16.msra.mxu0 %v1126
      %1211 = vmatprep.subr.bf16.mxu0 0
      %1212 = vmatpush1.bf16.msra.mxu0 %v1125
      %1213 = vmatprep.subr.bf16.mxu0 0
      %1214 = vmatpush2.bf16.msra.mxu0 0
      %1215 = vmatprep.subr.bf16.mxu0 0
      %1216 = vmatpush2.bf16.msra.mxu0 0
      %1217 = vmatprep.subr.bf16.mxu0 0
      %1218 = vmatpush2.bf16.msra.mxu0 0
      %1219 = vmatprep.subr.bf16.mxu0 0
      %1220 = vmatpush2.bf16.msra.mxu0 0
      %1221 = vmatprep.subr.bf16.mxu0 0
      %1222 = vmatpush2.bf16.msra.mxu0 0
      %1223 = vmatprep.subr.bf16.mxu0 0
      %1224 = vmatpush2.bf16.msra.mxu0 0
      %1225 = vmatprep.subr.bf16.mxu0 0
      %1226 = vmatpush2.bf16.msra.mxu0 0
      %1227 = vmatprep.subr.bf16.mxu0 0
      %1228 = vmatpush2.bf16.msra.mxu0 0
      %1229 = vmatprep.mubr.bf16.mxu0 0
      %1230 = vmatmul.mubr.bf16.gmra.mxu0 %v1181
      %v1231 = vpop.f32.mrf.mxu0
      %v1232 = vadd.f32 0.0, %v1231
      %v1233 = vpop.f32.mrf.mxu0
      %v1234 = vpop.f32.mrf.mxu0
      %v1235 = vadd.f32 0.0, %v1234
      %v1236 = vpop.f32.mrf.mxu0
      %1237 = vmatprep.mubr.bf16.mxu0 0
      %1238 = vmatmul.mubr.bf16.gmra.mxu0 %v1182
      %v1239 = vpop.f32.mrf.mxu0
      %v1240 = vadd.f32 0.0, %v1239
      %v1241 = vpop.f32.mrf.mxu0
      %v1242 = vpop.f32.mrf.mxu0
      %v1243 = vadd.f32 0.0, %v1242
      %v1244 = vpop.f32.mrf.mxu0
      %1245 = vmatprep.mubr.bf16.mxu0 0
      %1246 = vmatmul.mubr.bf16.gmra.mxu0 %v1183
      %v1247 = vpop.f32.mrf.mxu0
      %v1248 = vadd.f32 0.0, %v1247
      %v1249 = vpop.f32.mrf.mxu0
      %v1250 = vpop.f32.mrf.mxu0
      %v1251 = vadd.f32 0.0, %v1250
      %v1252 = vpop.f32.mrf.mxu0
      %1253 = vmatprep.mubr.bf16.mxu0 0
      %1254 = vmatmul.mubr.bf16.gmra.mxu0 %v1184
      %v1255 = vpop.f32.mrf.mxu0
      %v1256 = vadd.f32 0.0, %v1255
      %v1257 = vpop.f32.mrf.mxu0
      %v1258 = vpop.f32.mrf.mxu0
      %v1259 = vadd.f32 0.0, %v1258
      %v1260 = vpop.f32.mrf.mxu0
      %1261 = vmatprep.mubr.bf16.mxu0 0
      %1262 = vmatmul.mubr.bf16.gmra.mxu0 %v1185
      %v1263 = vpop.f32.mrf.mxu0
      %v1264 = vadd.f32 0.0, %v1263
      %v1265 = vpop.f32.mrf.mxu0
      %v1266 = vpop.f32.mrf.mxu0
      %v1267 = vadd.f32 0.0, %v1266
      %v1268 = vpop.f32.mrf.mxu0
      %1269 = vmatprep.mubr.bf16.mxu0 0
      %1270 = vmatmul.mubr.bf16.gmra.mxu0 %v1186
      %v1271 = vpop.f32.mrf.mxu0
      %v1272 = vadd.f32 0.0, %v1271
      %v1273 = vpop.f32.mrf.mxu0
      %v1274 = vpop.f32.mrf.mxu0
      %v1275 = vadd.f32 0.0, %v1274
      %v1276 = vpop.f32.mrf.mxu0
      %1277 = vmatprep.mubr.bf16.mxu0 0
      %1278 = vmatmul.mubr.bf16.gmra.mxu0 %v1187
      %v1279 = vpop.f32.mrf.mxu0
      %v1280 = vadd.f32 0.0, %v1279
      %v1281 = vpop.f32.mrf.mxu0
      %v1282 = vpop.f32.mrf.mxu0
      %v1283 = vadd.f32 0.0, %v1282
      %v1284 = vpop.f32.mrf.mxu0
      %1285 = vmatprep.mubr.bf16.mxu0 0
      %1286 = vmatmul.mubr.bf16.gmra.mxu0 %v1188
      %v1287 = vpop.f32.mrf.mxu0
      %v1288 = vadd.f32 0.0, %v1287
      %v1289 = vpop.f32.mrf.mxu0
      %v1290 = vpop.f32.mrf.mxu0
      %v1291 = vadd.f32 0.0, %v1290
      %v1292 = vpop.f32.mrf.mxu0
      %1293 = vdwg.mxu0
      %v1294 = vld [vmem:[#allocation4] sm:$0x1]
      %v1296 = vrot.slane %v1291, 7
      %1298 = vmatprep.subr.bf16.mxu0 0
      %1299 = vmatpush1.bf16.msra.mxu0 %v1088
      %1300 = vmatprep.subr.bf16.mxu0 0
      %1301 = vmatpush1.bf16.msra.mxu0 %v1087
      %1302 = vmatprep.subr.bf16.mxu0 0
      %1303 = vmatpush1.bf16.msra.mxu0 %v1086
      %1304 = vmatprep.subr.bf16.mxu0 0
      %1305 = vmatpush1.bf16.msra.mxu0 %v1085
      %1306 = vmatprep.subr.bf16.mxu0 0
      %1307 = vmatpush1.bf16.msra.mxu0 %v1084
      %1308 = vmatprep.subr.bf16.mxu0 0
      %1309 = vmatpush1.bf16.msra.mxu0 %v1083
      %1310 = vmatprep.subr.bf16.mxu0 0
      %1311 = vmatpush1.bf16.msra.mxu0 %v1082
      %1312 = vmatprep.subr.bf16.mxu0 0
      %1313 = vmatpush1.bf16.msra.mxu0 %v1081
      %1314 = vmatprep.subr.bf16.mxu0 0
      %1315 = vmatpush2.bf16.msra.mxu0 0
      %1316 = vmatprep.subr.bf16.mxu0 0
      %1317 = vmatpush2.bf16.msra.mxu0 0
      %1318 = vmatprep.subr.bf16.mxu0 0
      %1319 = vmatpush2.bf16.msra.mxu0 0
      %1320 = vmatprep.subr.bf16.mxu0 0
      %1321 = vmatpush2.bf16.msra.mxu0 0
      %1322 = vmatprep.subr.bf16.mxu0 0
      %1323 = vmatpush2.bf16.msra.mxu0 0
      %1324 = vmatprep.subr.bf16.mxu0 0
      %1325 = vmatpush2.bf16.msra.mxu0 0
      %1326 = vmatprep.subr.bf16.mxu0 0
      %1327 = vmatpush2.bf16.msra.mxu0 0
      %1328 = vmatprep.subr.bf16.mxu0 0
      %1329 = vmatpush2.bf16.msra.mxu0 0
      %1330 = vmatprep.mubr.bf16.mxu0 0
      %1331 = vmatmul.mubr.bf16.gmra.mxu0 %v1294
      %v1332 = vpop.f32.mrf.mxu0
      %v1333 = vadd.f32 %v1296, %v1332
      %v1334 = vpop.f32.mrf.mxu0
      %v1335 = vpop.f32.mrf.mxu0
      %v1336 = vpop.f32.mrf.mxu0
      %1337 = vdwg.mxu0
      %vm1338 = vcmp.gt.f32.partialorder %v1333, 0.0
      %v1339 = vmul.f32 %v1333, 0.1
      %v1340 = vsel %vm1338, %v1333, %v1339
      %v1341 = vmul.f32 %v1340, 1.442695
      %v1342 = vpow.pop %v1341
      %vm1343 = vcmp.eq.s32.totalorder %v1029, 8
      %vm1344 = vcmp.eq.s32.totalorder %v1030, 8
      %vm1345 = vcmp.eq.s32.totalorder %v1031, 8
      %vm1346 = vcmp.eq.s32.totalorder %v1032, 8
      %vm1347 = vcmp.eq.s32.totalorder %v1033, 8
      %vm1348 = vcmp.eq.s32.totalorder %v1034, 8
      %vm1349 = vcmp.eq.s32.totalorder %v1035, 8
      %vm1350 = vcmp.eq.s32.totalorder %v1036, 8
      %vm1351 = vcmp.eq.s32.totalorder %v1037, 8
      %vm1352 = vcmp.eq.s32.totalorder %v1038, 8
      %vm1353 = vcmp.eq.s32.totalorder %v1039, 8
      %vm1354 = vcmp.eq.s32.totalorder %v1040, 8
      %vm1355 = vcmp.eq.s32.totalorder %v1041, 8
      %vm1356 = vcmp.eq.s32.totalorder %v1042, 8
      %vm1357 = vcmp.eq.s32.totalorder %v1043, 8
      %vm1358 = vcmp.eq.s32.totalorder %v1044, 8
      %v1359 = vsel %vm1343, 1, 0
      %v1360 = vsel %vm1344, 1, 0
      %v1361 = vsel %vm1345, 1, 0
      %v1362 = vsel %vm1346, 1, 0
      %v1363 = vsel %vm1347, 1, 0
      %v1364 = vsel %vm1348, 1, 0
      %v1365 = vsel %vm1349, 1, 0
      %v1366 = vsel %vm1350, 1, 0
      %v1367 = vsel %vm1351, 1, 0
      %v1368 = vsel %vm1352, 1, 0
      %v1369 = vsel %vm1353, 1, 0
      %v1370 = vsel %vm1354, 1, 0
      %v1371 = vsel %vm1355, 1, 0
      %v1372 = vsel %vm1356, 1, 0
      %v1373 = vsel %vm1357, 1, 0
      %v1374 = vsel %vm1358, 1, 0
      %v1375 = vcvt.s32.f32 %v1359
      %v1376 = vcvt.s32.f32 %v1360
      %v1377 = vcvt.s32.f32 %v1361
      %v1378 = vcvt.s32.f32 %v1362
      %v1379 = vcvt.s32.f32 %v1363
      %v1380 = vcvt.s32.f32 %v1364
      %v1381 = vcvt.s32.f32 %v1365
      %v1382 = vcvt.s32.f32 %v1366
      %v1383 = vcvt.s32.f32 %v1367
      %v1384 = vcvt.s32.f32 %v1368
      %v1385 = vcvt.s32.f32 %v1369
      %v1386 = vcvt.s32.f32 %v1370
      %v1387 = vcvt.s32.f32 %v1371
      %v1388 = vcvt.s32.f32 %v1372
      %v1389 = vcvt.s32.f32 %v1373
      %v1390 = vcvt.s32.f32 %v1374
      %v1391 = vadd.f32 %v1232, %v1375
      %v1392 = vadd.f32 %v1235, %v1376
      %v1393 = vadd.f32 %v1240, %v1377
      %v1394 = vadd.f32 %v1243, %v1378
      %v1395 = vadd.f32 %v1248, %v1379
      %v1396 = vadd.f32 %v1251, %v1380
      %v1397 = vadd.f32 %v1256, %v1381
      %v1398 = vadd.f32 %v1259, %v1382
      %v1399 = vadd.f32 %v1264, %v1383
      %v1400 = vadd.f32 %v1267, %v1384
      %v1401 = vadd.f32 %v1272, %v1385
      %v1402 = vadd.f32 %v1275, %v1386
      %v1403 = vadd.f32 %v1280, %v1387
      %v1404 = vadd.f32 %v1283, %v1388
      %v1405 = vadd.f32 %v1288, %v1389
      %v1406 = vadd.f32 %v1291, %v1390
      %v1407 = vlaneseq
      %v1408 = vshrl.u32 %v1407, 7
      %v1409 = vsub.s32 0, %v1408
      %v1410 = vrot.slane %v1342, %v1409
      %v1411 = vmul.f32 %v1410, %v1391
      %v1412 = vmul.f32 %v1410, %v1392
      %v1413 = vmul.f32 %v1410, %v1393
      %v1414 = vmul.f32 %v1410, %v1394
      %v1415 = vmul.f32 %v1410, %v1395
      %v1416 = vmul.f32 %v1410, %v1396
      %v1417 = vmul.f32 %v1410, %v1397
      %v1418 = vmul.f32 %v1410, %v1398
      %v1419 = vmul.f32 %v1410, %v1399
      %v1420 = vmul.f32 %v1410, %v1400
      %v1421 = vmul.f32 %v1410, %v1401
      %v1422 = vmul.f32 %v1410, %v1402
      %v1423 = vmul.f32 %v1410, %v1403
      %v1424 = vmul.f32 %v1410, %v1404
      %v1425 = vmul.f32 %v1410, %v1405
      %v1426 = vmul.f32 %v1410, %v1406
      %v1427 = vpack.c.bf16 %v1412, %v1411
      %v1428 = vpack.c.bf16 %v1414, %v1413
      %v1429 = vpack.c.bf16 %v1416, %v1415
      %v1430 = vpack.c.bf16 %v1418, %v1417
      %v1431 = vpack.c.bf16 %v1420, %v1419
      %v1432 = vpack.c.bf16 %v1422, %v1421
      %v1433 = vpack.c.bf16 %v1424, %v1423
      %v1434 = vpack.c.bf16 %v1426, %v1425
      %1435 = vmatprep.subr.bf16.mxu0 0
      %1436 = vmatpush1.bf16.xpose.msra.mxu0 %v1434
      %1437 = vmatprep.subr.bf16.mxu0 0
      %1438 = vmatpush1.bf16.xpose.msra.mxu0 %v1433
      %1439 = vmatprep.subr.bf16.mxu0 0
      %1440 = vmatpush1.bf16.xpose.msra.mxu0 %v1432
      %1441 = vmatprep.subr.bf16.mxu0 0
      %1442 = vmatpush1.bf16.xpose.msra.mxu0 %v1431
      %1443 = vmatprep.subr.bf16.mxu0 0
      %1444 = vmatpush1.bf16.xpose.msra.mxu0 %v1430
      %1445 = vmatprep.subr.bf16.mxu0 0
      %1446 = vmatpush1.bf16.xpose.msra.mxu0 %v1429
      %1447 = vmatprep.subr.bf16.mxu0 0
      %1448 = vmatpush1.bf16.xpose.msra.mxu0 %v1428
      %1449 = vmatprep.subr.bf16.mxu0 0
      %1450 = vmatpush1.bf16.xpose.msra.mxu0 %v1427
      %1451 = vmatprep.subr.bf16.mxu0 0
      %1452 = vmatpush2.bf16.xpose.msra.mxu0 0
      %1453 = vmatprep.subr.bf16.mxu0 0
      %1454 = vmatpush2.bf16.xpose.msra.mxu0 0
      %1455 = vmatprep.subr.bf16.mxu0 0
      %1456 = vmatpush2.bf16.xpose.msra.mxu0 0
      %1457 = vmatprep.subr.bf16.mxu0 0
      %1458 = vmatpush2.bf16.xpose.msra.mxu0 0
      %1459 = vmatprep.subr.bf16.mxu0 0
      %1460 = vmatpush2.bf16.xpose.msra.mxu0 0
      %1461 = vmatprep.subr.bf16.mxu0 0
      %1462 = vmatpush2.bf16.xpose.msra.mxu0 0
      %1463 = vmatprep.subr.bf16.mxu0 0
      %1464 = vmatpush2.bf16.xpose.msra.mxu0 0
      %1465 = vmatprep.subr.bf16.mxu0 0
      %1466 = vmatpush2.bf16.xpose.msra.mxu0 0
      %1467 = vmatprep.mubr.bf16.mxu0 0
      %1468 = vmatmul.mubr.bf16.gmra.mxu0 %v1081
      %v1469 = vpop.f32.mrf.mxu0
      %v1470 = vadd.f32 0.0, %v1469
      %v1471 = vpop.f32.mrf.mxu0
      %v1472 = vpop.f32.mrf.mxu0
      %v1473 = vadd.f32 0.0, %v1472
      %v1474 = vpop.f32.mrf.mxu0
      %1475 = vmatprep.mubr.bf16.mxu0 0
      %1476 = vmatmul.mubr.bf16.gmra.mxu0 %v1082
      %v1477 = vpop.f32.mrf.mxu0
      %v1478 = vadd.f32 0.0, %v1477
      %v1479 = vpop.f32.mrf.mxu0
      %v1480 = vpop.f32.mrf.mxu0
      %v1481 = vadd.f32 0.0, %v1480
      %v1482 = vpop.f32.mrf.mxu0
      %1483 = vmatprep.mubr.bf16.mxu0 0
      %1484 = vmatmul.mubr.bf16.gmra.mxu0 %v1083
      %v1485 = vpop.f32.mrf.mxu0
      %v1486 = vadd.f32 0.0, %v1485
      %v1487 = vpop.f32.mrf.mxu0
      %v1488 = vpop.f32.mrf.mxu0
      %v1489 = vadd.f32 0.0, %v1488
      %v1490 = vpop.f32.mrf.mxu0
      %1491 = vmatprep.mubr.bf16.mxu0 0
      %1492 = vmatmul.mubr.bf16.gmra.mxu0 %v1084
      %v1493 = vpop.f32.mrf.mxu0
      %v1494 = vadd.f32 0.0, %v1493
      %v1495 = vpop.f32.mrf.mxu0
      %v1496 = vpop.f32.mrf.mxu0
      %v1497 = vadd.f32 0.0, %v1496
      %v1498 = vpop.f32.mrf.mxu0
      %1499 = vmatprep.mubr.bf16.mxu0 0
      %1500 = vmatmul.mubr.bf16.gmra.mxu0 %v1085
      %v1501 = vpop.f32.mrf.mxu0
      %v1502 = vadd.f32 0.0, %v1501
      %v1503 = vpop.f32.mrf.mxu0
      %v1504 = vpop.f32.mrf.mxu0
      %v1505 = vadd.f32 0.0, %v1504
      %v1506 = vpop.f32.mrf.mxu0
      %1507 = vmatprep.mubr.bf16.mxu0 0
      %1508 = vmatmul.mubr.bf16.gmra.mxu0 %v1086
      %v1509 = vpop.f32.mrf.mxu0
      %v1510 = vadd.f32 0.0, %v1509
      %v1511 = vpop.f32.mrf.mxu0
      %v1512 = vpop.f32.mrf.mxu0
      %v1513 = vadd.f32 0.0, %v1512
      %v1514 = vpop.f32.mrf.mxu0
      %1515 = vmatprep.mubr.bf16.mxu0 0
      %1516 = vmatmul.mubr.bf16.gmra.mxu0 %v1087
      %v1517 = vpop.f32.mrf.mxu0
      %v1518 = vadd.f32 0.0, %v1517
      %v1519 = vpop.f32.mrf.mxu0
      %v1520 = vpop.f32.mrf.mxu0
      %v1521 = vadd.f32 0.0, %v1520
      %v1522 = vpop.f32.mrf.mxu0
      %1523 = vmatprep.mubr.bf16.mxu0 0
      %1524 = vmatmul.mubr.bf16.gmra.mxu0 %v1088
      %v1525 = vpop.f32.mrf.mxu0
      %v1526 = vadd.f32 0.0, %v1525
      %v1527 = vpop.f32.mrf.mxu0
      %v1528 = vpop.f32.mrf.mxu0
      %v1529 = vadd.f32 0.0, %v1528
      %v1530 = vpop.f32.mrf.mxu0
      %1531 = vdwg.mxu0
      %s1532 = smul.u32 %s26, 128
      %s1533 = scalar_lea.vmem [#allocation2], %s1532
      %v1534 = vld [vmem:[%s1533] sm:$0xff]
      %v1535 = vld [vmem:[%s1533 + $0x8] sm:$0xff]
      %v1536 = vld [vmem:[%s1533 + $0x10] sm:$0xff]
      %v1537 = vld [vmem:[%s1533 + $0x18] sm:$0xff]
      %v1538 = vld [vmem:[%s1533 + $0x20] sm:$0xff]
      %v1539 = vld [vmem:[%s1533 + $0x28] sm:$0xff]
      %v1540 = vld [vmem:[%s1533 + $0x30] sm:$0xff]
      %v1541 = vld [vmem:[%s1533 + $0x38] sm:$0xff]
      %v1542 = vld [vmem:[%s1533 + $0x40] sm:$0xff]
      %v1543 = vld [vmem:[%s1533 + $0x48] sm:$0xff]
      %v1544 = vld [vmem:[%s1533 + $0x50] sm:$0xff]
      %v1545 = vld [vmem:[%s1533 + $0x58] sm:$0xff]
      %v1546 = vld [vmem:[%s1533 + $0x60] sm:$0xff]
      %v1547 = vld [vmem:[%s1533 + $0x68] sm:$0xff]
      %v1548 = vld [vmem:[%s1533 + $0x70] sm:$0xff]
      %v1549 = vld [vmem:[%s1533 + $0x78] sm:$0xff]
      %v1550 = vadd.f32 %v1534, %v1470
      %v1551 = vadd.f32 %v1535, %v1473
      %v1552 = vadd.f32 %v1536, %v1478
      %v1553 = vadd.f32 %v1537, %v1481
      %v1554 = vadd.f32 %v1538, %v1486
      %v1555 = vadd.f32 %v1539, %v1489
      %v1556 = vadd.f32 %v1540, %v1494
      %v1557 = vadd.f32 %v1541, %v1497
      %v1558 = vadd.f32 %v1542, %v1502
      %v1559 = vadd.f32 %v1543, %v1505
      %v1560 = vadd.f32 %v1544, %v1510
      %v1561 = vadd.f32 %v1545, %v1513
      %v1562 = vadd.f32 %v1546, %v1518
      %v1563 = vadd.f32 %v1547, %v1521
      %v1564 = vadd.f32 %v1548, %v1526
      %v1565 = vadd.f32 %v1549, %v1529
      %1566 = vst [vmem:[%s1533] sm:$0xff] %v1550
      %1567 = vst [vmem:[%s1533 + $0x8] sm:$0xff] %v1551
      %1568 = vst [vmem:[%s1533 + $0x10] sm:$0xff] %v1552
      %1569 = vst [vmem:[%s1533 + $0x18] sm:$0xff] %v1553
      %1570 = vst [vmem:[%s1533 + $0x20] sm:$0xff] %v1554
      %1571 = vst [vmem:[%s1533 + $0x28] sm:$0xff] %v1555
      %1572 = vst [vmem:[%s1533 + $0x30] sm:$0xff] %v1556
      %1573 = vst [vmem:[%s1533 + $0x38] sm:$0xff] %v1557
      %1574 = vst [vmem:[%s1533 + $0x40] sm:$0xff] %v1558
      %1575 = vst [vmem:[%s1533 + $0x48] sm:$0xff] %v1559
      %1576 = vst [vmem:[%s1533 + $0x50] sm:$0xff] %v1560
      %1577 = vst [vmem:[%s1533 + $0x58] sm:$0xff] %v1561
      %1578 = vst [vmem:[%s1533 + $0x60] sm:$0xff] %v1562
      %1579 = vst [vmem:[%s1533 + $0x68] sm:$0xff] %v1563
      %1580 = vst [vmem:[%s1533 + $0x70] sm:$0xff] %v1564
      %1581 = vst [vmem:[%s1533 + $0x78] sm:$0xff] %v1565
      // Predicated region
      $region69: #{sigat_forward.1} parent=63 // pred_check
        %p1582 = pneg %p472
      $region70: #{sigat_forward.1} parent=63 // pred_check_branch
        %1584 = sbr.rel (%p1582) target = $region72
      $region71: #{sigat_forward.1} parent=63 // pred_region
        %v1585 = vld [vmem:[%s1533] sm:$0xff]
        %v1586 = vld [vmem:[%s1533 + $0x8] sm:$0xff]
        %v1587 = vld [vmem:[%s1533 + $0x10] sm:$0xff]
        %v1588 = vld [vmem:[%s1533 + $0x18] sm:$0xff]
        %v1589 = vld [vmem:[%s1533 + $0x20] sm:$0xff]
        %v1590 = vld [vmem:[%s1533 + $0x28] sm:$0xff]
        %v1591 = vld [vmem:[%s1533 + $0x30] sm:$0xff]
        %v1592 = vld [vmem:[%s1533 + $0x38] sm:$0xff]
        %v1593 = vld [vmem:[%s1533 + $0x40] sm:$0xff]
        %v1594 = vld [vmem:[%s1533 + $0x48] sm:$0xff]
        %v1595 = vld [vmem:[%s1533 + $0x50] sm:$0xff]
        %v1596 = vld [vmem:[%s1533 + $0x58] sm:$0xff]
        %v1597 = vld [vmem:[%s1533 + $0x60] sm:$0xff]
        %v1598 = vld [vmem:[%s1533 + $0x68] sm:$0xff]
        %v1599 = vld [vmem:[%s1533 + $0x70] sm:$0xff]
        %v1600 = vld [vmem:[%s1533 + $0x78] sm:$0xff]
        %v1601 = vadd.f32 %v1585, 1e-12
        %v1602 = vadd.f32 %v1586, 1e-12
        %v1603 = vadd.f32 %v1587, 1e-12
        %v1604 = vadd.f32 %v1588, 1e-12
        %v1605 = vadd.f32 %v1589, 1e-12
        %v1606 = vadd.f32 %v1590, 1e-12
        %v1607 = vadd.f32 %v1591, 1e-12
        %v1608 = vadd.f32 %v1592, 1e-12
        %v1609 = vadd.f32 %v1593, 1e-12
        %v1610 = vadd.f32 %v1594, 1e-12
        %v1611 = vadd.f32 %v1595, 1e-12
        %v1612 = vadd.f32 %v1596, 1e-12
        %v1613 = vadd.f32 %v1597, 1e-12
        %v1614 = vadd.f32 %v1598, 1e-12
        %v1615 = vadd.f32 %v1599, 1e-12
        %v1616 = vadd.f32 %v1600, 1e-12
        %1618 = vset.pattern.permute.xlu0 8
        %1619 = vperm.xlu0 %1618, %v1601
        %v1620 = vpop.permute.xlu0 %1619
        %1623 = vset.pattern.permute.xlu0 8
        %1624 = vperm.xlu0 %1623, %v1602
        %v1625 = vpop.permute.xlu0 %1624
        %1628 = vset.pattern.permute.xlu0 8
        %1629 = vperm.xlu0 %1628, %v1603
        %v1630 = vpop.permute.xlu0 %1629
        %1633 = vset.pattern.permute.xlu0 8
        %1634 = vperm.xlu0 %1633, %v1604
        %v1635 = vpop.permute.xlu0 %1634
        %1638 = vset.pattern.permute.xlu0 8
        %1639 = vperm.xlu0 %1638, %v1605
        %v1640 = vpop.permute.xlu0 %1639
        %1643 = vset.pattern.permute.xlu0 8
        %1644 = vperm.xlu0 %1643, %v1606
        %v1645 = vpop.permute.xlu0 %1644
        %1648 = vset.pattern.permute.xlu0 8
        %1649 = vperm.xlu0 %1648, %v1607
        %v1650 = vpop.permute.xlu0 %1649
        %1653 = vset.pattern.permute.xlu0 8
        %1654 = vperm.xlu0 %1653, %v1608
        %v1655 = vpop.permute.xlu0 %1654
        %1658 = vset.pattern.permute.xlu0 8
        %1659 = vperm.xlu0 %1658, %v1609
        %v1660 = vpop.permute.xlu0 %1659
        %1663 = vset.pattern.permute.xlu0 8
        %1664 = vperm.xlu0 %1663, %v1610
        %v1665 = vpop.permute.xlu0 %1664
        %1668 = vset.pattern.permute.xlu0 8
        %1669 = vperm.xlu0 %1668, %v1611
        %v1670 = vpop.permute.xlu0 %1669
        %1673 = vset.pattern.permute.xlu0 8
        %1674 = vperm.xlu0 %1673, %v1612
        %v1675 = vpop.permute.xlu0 %1674
        %1678 = vset.pattern.permute.xlu0 8
        %1679 = vperm.xlu0 %1678, %v1613
        %v1680 = vpop.permute.xlu0 %1679
        %1683 = vset.pattern.permute.xlu0 8
        %1684 = vperm.xlu0 %1683, %v1614
        %v1685 = vpop.permute.xlu0 %1684
        %1688 = vset.pattern.permute.xlu0 8
        %1689 = vperm.xlu0 %1688, %v1615
        %v1690 = vpop.permute.xlu0 %1689
        %1693 = vset.pattern.permute.xlu0 8
        %1694 = vperm.xlu0 %1693, %v1616
        %v1695 = vpop.permute.xlu0 %1694
        %v1697 = vrcp.pop %v1620
        %v1698 = vmul.f32 %v1585, %v1697
        %v1699 = vrcp.pop %v1625
        %v1700 = vmul.f32 %v1586, %v1699
        %v1701 = vrcp.pop %v1630
        %v1702 = vmul.f32 %v1587, %v1701
        %v1703 = vrcp.pop %v1635
        %v1704 = vmul.f32 %v1588, %v1703
        %v1705 = vrcp.pop %v1640
        %v1706 = vmul.f32 %v1589, %v1705
        %v1707 = vrcp.pop %v1645
        %v1708 = vmul.f32 %v1590, %v1707
        %v1709 = vrcp.pop %v1650
        %v1710 = vmul.f32 %v1591, %v1709
        %v1711 = vrcp.pop %v1655
        %v1712 = vmul.f32 %v1592, %v1711
        %v1713 = vrcp.pop %v1660
        %v1714 = vmul.f32 %v1593, %v1713
        %v1715 = vrcp.pop %v1665
        %v1716 = vmul.f32 %v1594, %v1715
        %v1717 = vrcp.pop %v1670
        %v1718 = vmul.f32 %v1595, %v1717
        %v1719 = vrcp.pop %v1675
        %v1720 = vmul.f32 %v1596, %v1719
        %v1721 = vrcp.pop %v1680
        %v1722 = vmul.f32 %v1597, %v1721
        %v1723 = vrcp.pop %v1685
        %v1724 = vmul.f32 %v1598, %v1723
        %v1725 = vrcp.pop %v1690
        %v1726 = vmul.f32 %v1599, %v1725
        %v1727 = vrcp.pop %v1695
        %v1728 = vmul.f32 %v1600, %v1727
        %1729 = vst [vmem:[%s1533] sm:$0xff] %v1698
        %1730 = vst [vmem:[%s1533 + $0x8] sm:$0xff] %v1700
        %1731 = vst [vmem:[%s1533 + $0x10] sm:$0xff] %v1702
        %1732 = vst [vmem:[%s1533 + $0x18] sm:$0xff] %v1704
        %1733 = vst [vmem:[%s1533 + $0x20] sm:$0xff] %v1706
        %1734 = vst [vmem:[%s1533 + $0x28] sm:$0xff] %v1708
        %1735 = vst [vmem:[%s1533 + $0x30] sm:$0xff] %v1710
        %1736 = vst [vmem:[%s1533 + $0x38] sm:$0xff] %v1712
        %1737 = vst [vmem:[%s1533 + $0x40] sm:$0xff] %v1714
        %1738 = vst [vmem:[%s1533 + $0x48] sm:$0xff] %v1716
        %1739 = vst [vmem:[%s1533 + $0x50] sm:$0xff] %v1718
        %1740 = vst [vmem:[%s1533 + $0x58] sm:$0xff] %v1720
        %1741 = vst [vmem:[%s1533 + $0x60] sm:$0xff] %v1722
        %1742 = vst [vmem:[%s1533 + $0x68] sm:$0xff] %v1724
        %1743 = vst [vmem:[%s1533 + $0x70] sm:$0xff] %v1726
        %1744 = vst [vmem:[%s1533 + $0x78] sm:$0xff] %v1728
      $region72: #{sigat_forward.1} parent=63 // pred_fallthru
        _
      %p1745 = scmp.eq.s32.totalorder %s26, 3
      %p1746 = pnand %p1745, %p472
      %p1747 = pneg %p1746
      // Predicated region
      $region73: #{sigat_forward.1} parent=63 // pred_check
        _
      $region74: #{sigat_forward.1} parent=63 // pred_check_branch
        %1749 = sbr.rel (%p1746) target = $region76
      $region75: #{sigat_forward.1} parent=63 // pred_region
        %v1750 = vld [vmem:[%s1] sm:$0xff]
        %v1751 = vld [vmem:[%s1 + $0x8] sm:$0xff]
        %v1752 = vld [vmem:[%s1 + $0x10] sm:$0xff]
        %v1753 = vld [vmem:[%s1 + $0x18] sm:$0xff]
        %v1754 = vld [vmem:[%s1 + $0x20] sm:$0xff]
        %v1755 = vld [vmem:[%s1 + $0x28] sm:$0xff]
        %v1756 = vld [vmem:[%s1 + $0x30] sm:$0xff]
        %v1757 = vld [vmem:[%s1 + $0x38] sm:$0xff]
        %v1758 = vld [vmem:[%s1 + $0x40] sm:$0xff]
        %v1759 = vld [vmem:[%s1 + $0x48] sm:$0xff]
        %v1760 = vld [vmem:[%s1 + $0x50] sm:$0xff]
        %v1761 = vld [vmem:[%s1 + $0x58] sm:$0xff]
        %v1762 = vld [vmem:[%s1 + $0x60] sm:$0xff]
        %v1763 = vld [vmem:[%s1 + $0x68] sm:$0xff]
        %v1764 = vld [vmem:[%s1 + $0x70] sm:$0xff]
        %v1765 = vld [vmem:[%s1 + $0x78] sm:$0xff]
        %v1766 = vld [vmem:[%s7] sm:$0xff]
        %v1767 = vld [vmem:[%s7 + $0x8] sm:$0xff]
        %v1768 = vld [vmem:[%s7 + $0x10] sm:$0xff]
        %v1769 = vld [vmem:[%s7 + $0x18] sm:$0xff]
        %v1770 = vld [vmem:[%s7 + $0x20] sm:$0xff]
        %v1771 = vld [vmem:[%s7 + $0x28] sm:$0xff]
        %v1772 = vld [vmem:[%s7 + $0x30] sm:$0xff]
        %v1773 = vld [vmem:[%s7 + $0x38] sm:$0xff]
        %v1774 = vld [vmem:[%s7 + $0x40] sm:$0xff]
        %v1775 = vld [vmem:[%s7 + $0x48] sm:$0xff]
        %v1776 = vld [vmem:[%s7 + $0x50] sm:$0xff]
        %v1777 = vld [vmem:[%s7 + $0x58] sm:$0xff]
        %v1778 = vld [vmem:[%s7 + $0x60] sm:$0xff]
        %v1779 = vld [vmem:[%s7 + $0x68] sm:$0xff]
        %v1780 = vld [vmem:[%s7 + $0x70] sm:$0xff]
        %v1781 = vld [vmem:[%s7 + $0x78] sm:$0xff]
        %v1782 = vld [vmem:[%s8] sm:$0x1]
        %v1784 = vlaneseq
        %v1785 = vshrl.u32 %v1784, 7
        %v1786 = vsub.s32 0, %v1785
        %v1787 = vrot.slane %v1782, %v1786
        %1789 = vmatprep.subr.mxu0 0.0
        %1790 = vmatpush1.msra.mxu0 %v1781
        %1791 = vmatprep.subr.mxu0 0.0
        %1792 = vmatpush1.msra.mxu0 %v1780
        %1793 = vmatprep.subr.mxu0 0.0
        %1794 = vmatpush1.msra.mxu0 %v1779
        %1795 = vmatprep.subr.mxu0 0.0
        %1796 = vmatpush1.msra.mxu0 %v1778
        %1797 = vmatprep.subr.mxu0 0.0
        %1798 = vmatpush1.msra.mxu0 %v1777
        %1799 = vmatprep.subr.mxu0 0.0
        %1800 = vmatpush1.msra.mxu0 %v1776
        %1801 = vmatprep.subr.mxu0 0.0
        %1802 = vmatpush1.msra.mxu0 %v1775
        %1803 = vmatprep.subr.mxu0 0.0
        %1804 = vmatpush1.msra.mxu0 %v1774
        %1805 = vmatprep.subr.mxu0 0.0
        %1806 = vmatpush1.msra.mxu0 %v1773
        %1807 = vmatprep.subr.mxu0 0.0
        %1808 = vmatpush1.msra.mxu0 %v1772
        %1809 = vmatprep.subr.mxu0 0.0
        %1810 = vmatpush1.msra.mxu0 %v1771
        %1811 = vmatprep.subr.mxu0 0.0
        %1812 = vmatpush1.msra.mxu0 %v1770
        %1813 = vmatprep.subr.mxu0 0.0
        %1814 = vmatpush1.msra.mxu0 %v1769
        %1815 = vmatprep.subr.mxu0 0.0
        %1816 = vmatpush1.msra.mxu0 %v1768
        %1817 = vmatprep.subr.mxu0 0.0
        %1818 = vmatpush1.msra.mxu0 %v1767
        %1819 = vmatprep.subr.mxu0 0.0
        %1820 = vmatpush1.msra.mxu0 %v1766
        %1821 = vmatprep.subr.mxu0 0.0
        %1822 = vmatpush2.msra.mxu0 0.0
        %1823 = vmatprep.subr.mxu0 0.0
        %1824 = vmatpush2.msra.mxu0 0.0
        %1825 = vmatprep.subr.mxu0 0.0
        %1826 = vmatpush2.msra.mxu0 0.0
        %1827 = vmatprep.subr.mxu0 0.0
        %1828 = vmatpush2.msra.mxu0 0.0
        %1829 = vmatprep.subr.mxu0 0.0
        %1830 = vmatpush2.msra.mxu0 0.0
        %1831 = vmatprep.subr.mxu0 0.0
        %1832 = vmatpush2.msra.mxu0 0.0
        %1833 = vmatprep.subr.mxu0 0.0
        %1834 = vmatpush2.msra.mxu0 0.0
        %1835 = vmatprep.subr.mxu0 0.0
        %1836 = vmatpush2.msra.mxu0 0.0
        %1837 = vmatprep.subr.mxu0 0.0
        %1838 = vmatpush2.msra.mxu0 0.0
        %1839 = vmatprep.subr.mxu0 0.0
        %1840 = vmatpush2.msra.mxu0 0.0
        %1841 = vmatprep.subr.mxu0 0.0
        %1842 = vmatpush2.msra.mxu0 0.0
        %1843 = vmatprep.subr.mxu0 0.0
        %1844 = vmatpush2.msra.mxu0 0.0
        %1845 = vmatprep.subr.mxu0 0.0
        %1846 = vmatpush2.msra.mxu0 0.0
        %1847 = vmatprep.subr.mxu0 0.0
        %1848 = vmatpush2.msra.mxu0 0.0
        %1849 = vmatprep.subr.mxu0 0.0
        %1850 = vmatpush2.msra.mxu0 0.0
        %1851 = vmatprep.subr.mxu0 0.0
        %1852 = vmatpush2.msra.mxu0 0.0
        %1853 = vmatprep.mubr.f32.mxu0 0.0
        %1854 = vmatmul.mubr.f32.gmra.mxu0 %v1750
        %v1855 = vpop.f32.mrf.mxu0
        %v1856 = vadd.f32 %v1787, %v1855
        %v1857 = vpop.f32.mrf.mxu0
        %1858 = vmatprep.mubr.f32.mxu0 0.0
        %1859 = vmatmul.mubr.f32.gmra.mxu0 %v1751
        %v1860 = vpop.f32.mrf.mxu0
        %v1861 = vadd.f32 %v1787, %v1860
        %v1862 = vpop.f32.mrf.mxu0
        %1863 = vmatprep.mubr.f32.mxu0 0.0
        %1864 = vmatmul.mubr.f32.gmra.mxu0 %v1752
        %v1865 = vpop.f32.mrf.mxu0
        %v1866 = vadd.f32 %v1787, %v1865
        %v1867 = vpop.f32.mrf.mxu0
        %1868 = vmatprep.mubr.f32.mxu0 0.0
        %1869 = vmatmul.mubr.f32.gmra.mxu0 %v1753
        %v1870 = vpop.f32.mrf.mxu0
        %v1871 = vadd.f32 %v1787, %v1870
        %v1872 = vpop.f32.mrf.mxu0
        %1873 = vmatprep.mubr.f32.mxu0 0.0
        %1874 = vmatmul.mubr.f32.gmra.mxu0 %v1754
        %v1875 = vpop.f32.mrf.mxu0
        %v1876 = vadd.f32 %v1787, %v1875
        %v1877 = vpop.f32.mrf.mxu0
        %1878 = vmatprep.mubr.f32.mxu0 0.0
        %1879 = vmatmul.mubr.f32.gmra.mxu0 %v1755
        %v1880 = vpop.f32.mrf.mxu0
        %v1881 = vadd.f32 %v1787, %v1880
        %v1882 = vpop.f32.mrf.mxu0
        %1883 = vmatprep.mubr.f32.mxu0 0.0
        %1884 = vmatmul.mubr.f32.gmra.mxu0 %v1756
        %v1885 = vpop.f32.mrf.mxu0
        %v1886 = vadd.f32 %v1787, %v1885
        %v1887 = vpop.f32.mrf.mxu0
        %1888 = vmatprep.mubr.f32.mxu0 0.0
        %1889 = vmatmul.mubr.f32.gmra.mxu0 %v1757
        %v1890 = vpop.f32.mrf.mxu0
        %v1891 = vadd.f32 %v1787, %v1890
        %v1892 = vpop.f32.mrf.mxu0
        %1893 = vmatprep.mubr.f32.mxu0 0.0
        %1894 = vmatmul.mubr.f32.gmra.mxu0 %v1758
        %v1895 = vpop.f32.mrf.mxu0
        %v1896 = vadd.f32 %v1787, %v1895
        %v1897 = vpop.f32.mrf.mxu0
        %1898 = vmatprep.mubr.f32.mxu0 0.0
        %1899 = vmatmul.mubr.f32.gmra.mxu0 %v1759
        %v1900 = vpop.f32.mrf.mxu0
        %v1901 = vadd.f32 %v1787, %v1900
        %v1902 = vpop.f32.mrf.mxu0
        %1903 = vmatprep.mubr.f32.mxu0 0.0
        %1904 = vmatmul.mubr.f32.gmra.mxu0 %v1760
        %v1905 = vpop.f32.mrf.mxu0
        %v1906 = vadd.f32 %v1787, %v1905
        %v1907 = vpop.f32.mrf.mxu0
        %1908 = vmatprep.mubr.f32.mxu0 0.0
        %1909 = vmatmul.mubr.f32.gmra.mxu0 %v1761
        %v1910 = vpop.f32.mrf.mxu0
        %v1911 = vadd.f32 %v1787, %v1910
        %v1912 = vpop.f32.mrf.mxu0
        %1913 = vmatprep.mubr.f32.mxu0 0.0
        %1914 = vmatmul.mubr.f32.gmra.mxu0 %v1762
        %v1915 = vpop.f32.mrf.mxu0
        %v1916 = vadd.f32 %v1787, %v1915
        %v1917 = vpop.f32.mrf.mxu0
        %1918 = vmatprep.mubr.f32.mxu0 0.0
        %1919 = vmatmul.mubr.f32.gmra.mxu0 %v1763
        %v1920 = vpop.f32.mrf.mxu0
        %v1921 = vadd.f32 %v1787, %v1920
        %v1922 = vpop.f32.mrf.mxu0
        %1923 = vmatprep.mubr.f32.mxu0 0.0
        %1924 = vmatmul.mubr.f32.gmra.mxu0 %v1764
        %v1925 = vpop.f32.mrf.mxu0
        %v1926 = vadd.f32 %v1787, %v1925
        %v1927 = vpop.f32.mrf.mxu0
        %1928 = vmatprep.mubr.f32.mxu0 0.0
        %1929 = vmatmul.mubr.f32.gmra.mxu0 %v1765
        %v1930 = vpop.f32.mrf.mxu0
        %v1931 = vadd.f32 %v1787, %v1930
        %v1932 = vpop.f32.mrf.mxu0
        %1933 = vdwg.mxu0
        %v1934 = vld [vmem:[#allocation2] sm:$0xff]
        %v1935 = vld [vmem:[#allocation2 + $0x8] sm:$0xff]
        %v1936 = vld [vmem:[#allocation2 + $0x10] sm:$0xff]
        %v1937 = vld [vmem:[#allocation2 + $0x18] sm:$0xff]
        %v1938 = vld [vmem:[#allocation2 + $0x20] sm:$0xff]
        %v1939 = vld [vmem:[#allocation2 + $0x28] sm:$0xff]
        %v1940 = vld [vmem:[#allocation2 + $0x30] sm:$0xff]
        %v1941 = vld [vmem:[#allocation2 + $0x38] sm:$0xff]
        %v1942 = vld [vmem:[#allocation2 + $0x40] sm:$0xff]
        %v1943 = vld [vmem:[#allocation2 + $0x48] sm:$0xff]
        %v1944 = vld [vmem:[#allocation2 + $0x50] sm:$0xff]
        %v1945 = vld [vmem:[#allocation2 + $0x58] sm:$0xff]
        %v1946 = vld [vmem:[#allocation2 + $0x60] sm:$0xff]
        %v1947 = vld [vmem:[#allocation2 + $0x68] sm:$0xff]
        %v1948 = vld [vmem:[#allocation2 + $0x70] sm:$0xff]
        %v1949 = vld [vmem:[#allocation2 + $0x78] sm:$0xff]
        %s1950 = scalar_lea.vmem %s7, 128
        %v1951 = vld [vmem:[%s1950] sm:$0xff]
        %v1952 = vld [vmem:[%s1950 + $0x8] sm:$0xff]
        %v1953 = vld [vmem:[%s1950 + $0x10] sm:$0xff]
        %v1954 = vld [vmem:[%s1950 + $0x18] sm:$0xff]
        %v1955 = vld [vmem:[%s1950 + $0x20] sm:$0xff]
        %v1956 = vld [vmem:[%s1950 + $0x28] sm:$0xff]
        %v1957 = vld [vmem:[%s1950 + $0x30] sm:$0xff]
        %v1958 = vld [vmem:[%s1950 + $0x38] sm:$0xff]
        %v1959 = vld [vmem:[%s1950 + $0x40] sm:$0xff]
        %v1960 = vld [vmem:[%s1950 + $0x48] sm:$0xff]
        %v1961 = vld [vmem:[%s1950 + $0x50] sm:$0xff]
        %v1962 = vld [vmem:[%s1950 + $0x58] sm:$0xff]
        %v1963 = vld [vmem:[%s1950 + $0x60] sm:$0xff]
        %v1964 = vld [vmem:[%s1950 + $0x68] sm:$0xff]
        %v1965 = vld [vmem:[%s1950 + $0x70] sm:$0xff]
        %v1966 = vld [vmem:[%s1950 + $0x78] sm:$0xff]
        %1967 = vmatprep.subr.mxu0 0.0
        %1968 = vmatpush1.msra.mxu0 %v1966
        %1969 = vmatprep.subr.mxu0 0.0
        %1970 = vmatpush1.msra.mxu0 %v1965
        %1971 = vmatprep.subr.mxu0 0.0
        %1972 = vmatpush1.msra.mxu0 %v1964
        %1973 = vmatprep.subr.mxu0 0.0
        %1974 = vmatpush1.msra.mxu0 %v1963
        %1975 = vmatprep.subr.mxu0 0.0
        %1976 = vmatpush1.msra.mxu0 %v1962
        %1977 = vmatprep.subr.mxu0 0.0
        %1978 = vmatpush1.msra.mxu0 %v1961
        %1979 = vmatprep.subr.mxu0 0.0
        %1980 = vmatpush1.msra.mxu0 %v1960
        %1981 = vmatprep.subr.mxu0 0.0
        %1982 = vmatpush1.msra.mxu0 %v1959
        %1983 = vmatprep.subr.mxu0 0.0
        %1984 = vmatpush1.msra.mxu0 %v1958
        %1985 = vmatprep.subr.mxu0 0.0
        %1986 = vmatpush1.msra.mxu0 %v1957
        %1987 = vmatprep.subr.mxu0 0.0
        %1988 = vmatpush1.msra.mxu0 %v1956
        %1989 = vmatprep.subr.mxu0 0.0
        %1990 = vmatpush1.msra.mxu0 %v1955
        %1991 = vmatprep.subr.mxu0 0.0
        %1992 = vmatpush1.msra.mxu0 %v1954
        %1993 = vmatprep.subr.mxu0 0.0
        %1994 = vmatpush1.msra.mxu0 %v1953
        %1995 = vmatprep.subr.mxu0 0.0
        %1996 = vmatpush1.msra.mxu0 %v1952
        %1997 = vmatprep.subr.mxu0 0.0
        %1998 = vmatpush1.msra.mxu0 %v1951
        %1999 = vmatprep.subr.mxu0 0.0
        %2000 = vmatpush2.msra.mxu0 0.0
        %2001 = vmatprep.subr.mxu0 0.0
        %2002 = vmatpush2.msra.mxu0 0.0
        %2003 = vmatprep.subr.mxu0 0.0
        %2004 = vmatpush2.msra.mxu0 0.0
        %2005 = vmatprep.subr.mxu0 0.0
        %2006 = vmatpush2.msra.mxu0 0.0
        %2007 = vmatprep.subr.mxu0 0.0
        %2008 = vmatpush2.msra.mxu0 0.0
        %2009 = vmatprep.subr.mxu0 0.0
        %2010 = vmatpush2.msra.mxu0 0.0
        %2011 = vmatprep.subr.mxu0 0.0
        %2012 = vmatpush2.msra.mxu0 0.0
        %2013 = vmatprep.subr.mxu0 0.0
        %2014 = vmatpush2.msra.mxu0 0.0
        %2015 = vmatprep.subr.mxu0 0.0
        %2016 = vmatpush2.msra.mxu0 0.0
        %2017 = vmatprep.subr.mxu0 0.0
        %2018 = vmatpush2.msra.mxu0 0.0
        %2019 = vmatprep.subr.mxu0 0.0
        %2020 = vmatpush2.msra.mxu0 0.0
        %2021 = vmatprep.subr.mxu0 0.0
        %2022 = vmatpush2.msra.mxu0 0.0
        %2023 = vmatprep.subr.mxu0 0.0
        %2024 = vmatpush2.msra.mxu0 0.0
        %2025 = vmatprep.subr.mxu0 0.0
        %2026 = vmatpush2.msra.mxu0 0.0
        %2027 = vmatprep.subr.mxu0 0.0
        %2028 = vmatpush2.msra.mxu0 0.0
        %2029 = vmatprep.subr.mxu0 0.0
        %2030 = vmatpush2.msra.mxu0 0.0
        %2031 = vmatprep.mubr.f32.mxu0 0.0
        %2032 = vmatmul.mubr.f32.gmra.mxu0 %v1934
        %v2033 = vpop.f32.mrf.mxu0
        %v2034 = vadd.f32 0.0, %v2033
        %v2035 = vpop.f32.mrf.mxu0
        %2036 = vmatprep.mubr.f32.mxu0 0.0
        %2037 = vmatmul.mubr.f32.gmra.mxu0 %v1935
        %v2038 = vpop.f32.mrf.mxu0
        %v2039 = vadd.f32 0.0, %v2038
        %v2040 = vpop.f32.mrf.mxu0
        %2041 = vmatprep.mubr.f32.mxu0 0.0
        %2042 = vmatmul.mubr.f32.gmra.mxu0 %v1936
        %v2043 = vpop.f32.mrf.mxu0
        %v2044 = vadd.f32 0.0, %v2043
        %v2045 = vpop.f32.mrf.mxu0
        %2046 = vmatprep.mubr.f32.mxu0 0.0
        %2047 = vmatmul.mubr.f32.gmra.mxu0 %v1937
        %v2048 = vpop.f32.mrf.mxu0
        %v2049 = vadd.f32 0.0, %v2048
        %v2050 = vpop.f32.mrf.mxu0
        %2051 = vmatprep.mubr.f32.mxu0 0.0
        %2052 = vmatmul.mubr.f32.gmra.mxu0 %v1938
        %v2053 = vpop.f32.mrf.mxu0
        %v2054 = vadd.f32 0.0, %v2053
        %v2055 = vpop.f32.mrf.mxu0
        %2056 = vmatprep.mubr.f32.mxu0 0.0
        %2057 = vmatmul.mubr.f32.gmra.mxu0 %v1939
        %v2058 = vpop.f32.mrf.mxu0
        %v2059 = vadd.f32 0.0, %v2058
        %v2060 = vpop.f32.mrf.mxu0
        %2061 = vmatprep.mubr.f32.mxu0 0.0
        %2062 = vmatmul.mubr.f32.gmra.mxu0 %v1940
        %v2063 = vpop.f32.mrf.mxu0
        %v2064 = vadd.f32 0.0, %v2063
        %v2065 = vpop.f32.mrf.mxu0
        %2066 = vmatprep.mubr.f32.mxu0 0.0
        %2067 = vmatmul.mubr.f32.gmra.mxu0 %v1941
        %v2068 = vpop.f32.mrf.mxu0
        %v2069 = vadd.f32 0.0, %v2068
        %v2070 = vpop.f32.mrf.mxu0
        %2071 = vmatprep.mubr.f32.mxu0 0.0
        %2072 = vmatmul.mubr.f32.gmra.mxu0 %v1942
        %v2073 = vpop.f32.mrf.mxu0
        %v2074 = vadd.f32 0.0, %v2073
        %v2075 = vpop.f32.mrf.mxu0
        %2076 = vmatprep.mubr.f32.mxu0 0.0
        %2077 = vmatmul.mubr.f32.gmra.mxu0 %v1943
        %v2078 = vpop.f32.mrf.mxu0
        %v2079 = vadd.f32 0.0, %v2078
        %v2080 = vpop.f32.mrf.mxu0
        %2081 = vmatprep.mubr.f32.mxu0 0.0
        %2082 = vmatmul.mubr.f32.gmra.mxu0 %v1944
        %v2083 = vpop.f32.mrf.mxu0
        %v2084 = vadd.f32 0.0, %v2083
        %v2085 = vpop.f32.mrf.mxu0
        %2086 = vmatprep.mubr.f32.mxu0 0.0
        %2087 = vmatmul.mubr.f32.gmra.mxu0 %v1945
        %v2088 = vpop.f32.mrf.mxu0
        %v2089 = vadd.f32 0.0, %v2088
        %v2090 = vpop.f32.mrf.mxu0
        %2091 = vmatprep.mubr.f32.mxu0 0.0
        %2092 = vmatmul.mubr.f32.gmra.mxu0 %v1946
        %v2093 = vpop.f32.mrf.mxu0
        %v2094 = vadd.f32 0.0, %v2093
        %v2095 = vpop.f32.mrf.mxu0
        %2096 = vmatprep.mubr.f32.mxu0 0.0
        %2097 = vmatmul.mubr.f32.gmra.mxu0 %v1947
        %v2098 = vpop.f32.mrf.mxu0
        %v2099 = vadd.f32 0.0, %v2098
        %v2100 = vpop.f32.mrf.mxu0
        %2101 = vmatprep.mubr.f32.mxu0 0.0
        %2102 = vmatmul.mubr.f32.gmra.mxu0 %v1948
        %v2103 = vpop.f32.mrf.mxu0
        %v2104 = vadd.f32 0.0, %v2103
        %v2105 = vpop.f32.mrf.mxu0
        %2106 = vmatprep.mubr.f32.mxu0 0.0
        %2107 = vmatmul.mubr.f32.gmra.mxu0 %v1949
        %v2108 = vpop.f32.mrf.mxu0
        %v2109 = vadd.f32 0.0, %v2108
        %v2110 = vpop.f32.mrf.mxu0
        %2111 = vdwg.mxu0
        %v2112 = vadd.f32 %v1856, %v2034
        %v2113 = vadd.f32 %v1861, %v2039
        %v2114 = vadd.f32 %v1866, %v2044
        %v2115 = vadd.f32 %v1871, %v2049
        %v2116 = vadd.f32 %v1876, %v2054
        %v2117 = vadd.f32 %v1881, %v2059
        %v2118 = vadd.f32 %v1886, %v2064
        %v2119 = vadd.f32 %v1891, %v2069
        %v2120 = vadd.f32 %v1896, %v2074
        %v2121 = vadd.f32 %v1901, %v2079
        %v2122 = vadd.f32 %v1906, %v2084
        %v2123 = vadd.f32 %v1911, %v2089
        %v2124 = vadd.f32 %v1916, %v2094
        %v2125 = vadd.f32 %v1921, %v2099
        %v2126 = vadd.f32 %v1926, %v2104
        %v2127 = vadd.f32 %v1931, %v2109
        %s2128 = scalar_lea.vmem [#allocation2], 128
        %v2129 = vld [vmem:[%s2128] sm:$0xff]
        %v2130 = vld [vmem:[%s2128 + $0x8] sm:$0xff]
        %v2131 = vld [vmem:[%s2128 + $0x10] sm:$0xff]
        %v2132 = vld [vmem:[%s2128 + $0x18] sm:$0xff]
        %v2133 = vld [vmem:[%s2128 + $0x20] sm:$0xff]
        %v2134 = vld [vmem:[%s2128 + $0x28] sm:$0xff]
        %v2135 = vld [vmem:[%s2128 + $0x30] sm:$0xff]
        %v2136 = vld [vmem:[%s2128 + $0x38] sm:$0xff]
        %v2137 = vld [vmem:[%s2128 + $0x40] sm:$0xff]
        %v2138 = vld [vmem:[%s2128 + $0x48] sm:$0xff]
        %v2139 = vld [vmem:[%s2128 + $0x50] sm:$0xff]
        %v2140 = vld [vmem:[%s2128 + $0x58] sm:$0xff]
        %v2141 = vld [vmem:[%s2128 + $0x60] sm:$0xff]
        %v2142 = vld [vmem:[%s2128 + $0x68] sm:$0xff]
        %v2143 = vld [vmem:[%s2128 + $0x70] sm:$0xff]
        %v2144 = vld [vmem:[%s2128 + $0x78] sm:$0xff]
        %s2145 = scalar_lea.vmem %s7, 256
        %v2146 = vld [vmem:[%s2145] sm:$0xff]
        %v2147 = vld [vmem:[%s2145 + $0x8] sm:$0xff]
        %v2148 = vld [vmem:[%s2145 + $0x10] sm:$0xff]
        %v2149 = vld [vmem:[%s2145 + $0x18] sm:$0xff]
        %v2150 = vld [vmem:[%s2145 + $0x20] sm:$0xff]
        %v2151 = vld [vmem:[%s2145 + $0x28] sm:$0xff]
        %v2152 = vld [vmem:[%s2145 + $0x30] sm:$0xff]
        %v2153 = vld [vmem:[%s2145 + $0x38] sm:$0xff]
        %v2154 = vld [vmem:[%s2145 + $0x40] sm:$0xff]
        %v2155 = vld [vmem:[%s2145 + $0x48] sm:$0xff]
        %v2156 = vld [vmem:[%s2145 + $0x50] sm:$0xff]
        %v2157 = vld [vmem:[%s2145 + $0x58] sm:$0xff]
        %v2158 = vld [vmem:[%s2145 + $0x60] sm:$0xff]
        %v2159 = vld [vmem:[%s2145 + $0x68] sm:$0xff]
        %v2160 = vld [vmem:[%s2145 + $0x70] sm:$0xff]
        %v2161 = vld [vmem:[%s2145 + $0x78] sm:$0xff]
        %2162 = vmatprep.subr.mxu0 0.0
        %2163 = vmatpush1.msra.mxu0 %v2161
        %2164 = vmatprep.subr.mxu0 0.0
        %2165 = vmatpush1.msra.mxu0 %v2160
        %2166 = vmatprep.subr.mxu0 0.0
        %2167 = vmatpush1.msra.mxu0 %v2159
        %2168 = vmatprep.subr.mxu0 0.0
        %2169 = vmatpush1.msra.mxu0 %v2158
        %2170 = vmatprep.subr.mxu0 0.0
        %2171 = vmatpush1.msra.mxu0 %v2157
        %2172 = vmatprep.subr.mxu0 0.0
        %2173 = vmatpush1.msra.mxu0 %v2156
        %2174 = vmatprep.subr.mxu0 0.0
        %2175 = vmatpush1.msra.mxu0 %v2155
        %2176 = vmatprep.subr.mxu0 0.0
        %2177 = vmatpush1.msra.mxu0 %v2154
        %2178 = vmatprep.subr.mxu0 0.0
        %2179 = vmatpush1.msra.mxu0 %v2153
        %2180 = vmatprep.subr.mxu0 0.0
        %2181 = vmatpush1.msra.mxu0 %v2152
        %2182 = vmatprep.subr.mxu0 0.0
        %2183 = vmatpush1.msra.mxu0 %v2151
        %2184 = vmatprep.subr.mxu0 0.0
        %2185 = vmatpush1.msra.mxu0 %v2150
        %2186 = vmatprep.subr.mxu0 0.0
        %2187 = vmatpush1.msra.mxu0 %v2149
        %2188 = vmatprep.subr.mxu0 0.0
        %2189 = vmatpush1.msra.mxu0 %v2148
        %2190 = vmatprep.subr.mxu0 0.0
        %2191 = vmatpush1.msra.mxu0 %v2147
        %2192 = vmatprep.subr.mxu0 0.0
        %2193 = vmatpush1.msra.mxu0 %v2146
        %2194 = vmatprep.subr.mxu0 0.0
        %2195 = vmatpush2.msra.mxu0 0.0
        %2196 = vmatprep.subr.mxu0 0.0
        %2197 = vmatpush2.msra.mxu0 0.0
        %2198 = vmatprep.subr.mxu0 0.0
        %2199 = vmatpush2.msra.mxu0 0.0
        %2200 = vmatprep.subr.mxu0 0.0
        %2201 = vmatpush2.msra.mxu0 0.0
        %2202 = vmatprep.subr.mxu0 0.0
        %2203 = vmatpush2.msra.mxu0 0.0
        %2204 = vmatprep.subr.mxu0 0.0
        %2205 = vmatpush2.msra.mxu0 0.0
        %2206 = vmatprep.subr.mxu0 0.0
        %2207 = vmatpush2.msra.mxu0 0.0
        %2208 = vmatprep.subr.mxu0 0.0
        %2209 = vmatpush2.msra.mxu0 0.0
        %2210 = vmatprep.subr.mxu0 0.0
        %2211 = vmatpush2.msra.mxu0 0.0
        %2212 = vmatprep.subr.mxu0 0.0
        %2213 = vmatpush2.msra.mxu0 0.0
        %2214 = vmatprep.subr.mxu0 0.0
        %2215 = vmatpush2.msra.mxu0 0.0
        %2216 = vmatprep.subr.mxu0 0.0
        %2217 = vmatpush2.msra.mxu0 0.0
        %2218 = vmatprep.subr.mxu0 0.0
        %2219 = vmatpush2.msra.mxu0 0.0
        %2220 = vmatprep.subr.mxu0 0.0
        %2221 = vmatpush2.msra.mxu0 0.0
        %2222 = vmatprep.subr.mxu0 0.0
        %2223 = vmatpush2.msra.mxu0 0.0
        %2224 = vmatprep.subr.mxu0 0.0
        %2225 = vmatpush2.msra.mxu0 0.0
        %2226 = vmatprep.mubr.f32.mxu0 0.0
        %2227 = vmatmul.mubr.f32.gmra.mxu0 %v2129
        %v2228 = vpop.f32.mrf.mxu0
        %v2229 = vadd.f32 0.0, %v2228
        %v2230 = vpop.f32.mrf.mxu0
        %2231 = vmatprep.mubr.f32.mxu0 0.0
        %2232 = vmatmul.mubr.f32.gmra.mxu0 %v2130
        %v2233 = vpop.f32.mrf.mxu0
        %v2234 = vadd.f32 0.0, %v2233
        %v2235 = vpop.f32.mrf.mxu0
        %2236 = vmatprep.mubr.f32.mxu0 0.0
        %2237 = vmatmul.mubr.f32.gmra.mxu0 %v2131
        %v2238 = vpop.f32.mrf.mxu0
        %v2239 = vadd.f32 0.0, %v2238
        %v2240 = vpop.f32.mrf.mxu0
        %2241 = vmatprep.mubr.f32.mxu0 0.0
        %2242 = vmatmul.mubr.f32.gmra.mxu0 %v2132
        %v2243 = vpop.f32.mrf.mxu0
        %v2244 = vadd.f32 0.0, %v2243
        %v2245 = vpop.f32.mrf.mxu0
        %2246 = vmatprep.mubr.f32.mxu0 0.0
        %2247 = vmatmul.mubr.f32.gmra.mxu0 %v2133
        %v2248 = vpop.f32.mrf.mxu0
        %v2249 = vadd.f32 0.0, %v2248
        %v2250 = vpop.f32.mrf.mxu0
        %2251 = vmatprep.mubr.f32.mxu0 0.0
        %2252 = vmatmul.mubr.f32.gmra.mxu0 %v2134
        %v2253 = vpop.f32.mrf.mxu0
        %v2254 = vadd.f32 0.0, %v2253
        %v2255 = vpop.f32.mrf.mxu0
        %2256 = vmatprep.mubr.f32.mxu0 0.0
        %2257 = vmatmul.mubr.f32.gmra.mxu0 %v2135
        %v2258 = vpop.f32.mrf.mxu0
        %v2259 = vadd.f32 0.0, %v2258
        %v2260 = vpop.f32.mrf.mxu0
        %2261 = vmatprep.mubr.f32.mxu0 0.0
        %2262 = vmatmul.mubr.f32.gmra.mxu0 %v2136
        %v2263 = vpop.f32.mrf.mxu0
        %v2264 = vadd.f32 0.0, %v2263
        %v2265 = vpop.f32.mrf.mxu0
        %2266 = vmatprep.mubr.f32.mxu0 0.0
        %2267 = vmatmul.mubr.f32.gmra.mxu0 %v2137
        %v2268 = vpop.f32.mrf.mxu0
        %v2269 = vadd.f32 0.0, %v2268
        %v2270 = vpop.f32.mrf.mxu0
        %2271 = vmatprep.mubr.f32.mxu0 0.0
        %2272 = vmatmul.mubr.f32.gmra.mxu0 %v2138
        %v2273 = vpop.f32.mrf.mxu0
        %v2274 = vadd.f32 0.0, %v2273
        %v2275 = vpop.f32.mrf.mxu0
        %2276 = vmatprep.mubr.f32.mxu0 0.0
        %2277 = vmatmul.mubr.f32.gmra.mxu0 %v2139
        %v2278 = vpop.f32.mrf.mxu0
        %v2279 = vadd.f32 0.0, %v2278
        %v2280 = vpop.f32.mrf.mxu0
        %2281 = vmatprep.mubr.f32.mxu0 0.0
        %2282 = vmatmul.mubr.f32.gmra.mxu0 %v2140
        %v2283 = vpop.f32.mrf.mxu0
        %v2284 = vadd.f32 0.0, %v2283
        %v2285 = vpop.f32.mrf.mxu0
        %2286 = vmatprep.mubr.f32.mxu0 0.0
        %2287 = vmatmul.mubr.f32.gmra.mxu0 %v2141
        %v2288 = vpop.f32.mrf.mxu0
        %v2289 = vadd.f32 0.0, %v2288
        %v2290 = vpop.f32.mrf.mxu0
        %2291 = vmatprep.mubr.f32.mxu0 0.0
        %2292 = vmatmul.mubr.f32.gmra.mxu0 %v2142
        %v2293 = vpop.f32.mrf.mxu0
        %v2294 = vadd.f32 0.0, %v2293
        %v2295 = vpop.f32.mrf.mxu0
        %2296 = vmatprep.mubr.f32.mxu0 0.0
        %2297 = vmatmul.mubr.f32.gmra.mxu0 %v2143
        %v2298 = vpop.f32.mrf.mxu0
        %v2299 = vadd.f32 0.0, %v2298
        %v2300 = vpop.f32.mrf.mxu0
        %2301 = vmatprep.mubr.f32.mxu0 0.0
        %2302 = vmatmul.mubr.f32.gmra.mxu0 %v2144
        %v2303 = vpop.f32.mrf.mxu0
        %v2304 = vadd.f32 0.0, %v2303
        %v2305 = vpop.f32.mrf.mxu0
        %2306 = vdwg.mxu0
        %v2307 = vadd.f32 %v2112, %v2229
        %v2308 = vadd.f32 %v2113, %v2234
        %v2309 = vadd.f32 %v2114, %v2239
        %v2310 = vadd.f32 %v2115, %v2244
        %v2311 = vadd.f32 %v2116, %v2249
        %v2312 = vadd.f32 %v2117, %v2254
        %v2313 = vadd.f32 %v2118, %v2259
        %v2314 = vadd.f32 %v2119, %v2264
        %v2315 = vadd.f32 %v2120, %v2269
        %v2316 = vadd.f32 %v2121, %v2274
        %v2317 = vadd.f32 %v2122, %v2279
        %v2318 = vadd.f32 %v2123, %v2284
        %v2319 = vadd.f32 %v2124, %v2289
        %v2320 = vadd.f32 %v2125, %v2294
        %v2321 = vadd.f32 %v2126, %v2299
        %v2322 = vadd.f32 %v2127, %v2304
        %s2323 = scalar_lea.vmem [#allocation2], 256
        %v2324 = vld [vmem:[%s2323] sm:$0xff]
        %v2325 = vld [vmem:[%s2323 + $0x8] sm:$0xff]
        %v2326 = vld [vmem:[%s2323 + $0x10] sm:$0xff]
        %v2327 = vld [vmem:[%s2323 + $0x18] sm:$0xff]
        %v2328 = vld [vmem:[%s2323 + $0x20] sm:$0xff]
        %v2329 = vld [vmem:[%s2323 + $0x28] sm:$0xff]
        %v2330 = vld [vmem:[%s2323 + $0x30] sm:$0xff]
        %v2331 = vld [vmem:[%s2323 + $0x38] sm:$0xff]
        %v2332 = vld [vmem:[%s2323 + $0x40] sm:$0xff]
        %v2333 = vld [vmem:[%s2323 + $0x48] sm:$0xff]
        %v2334 = vld [vmem:[%s2323 + $0x50] sm:$0xff]
        %v2335 = vld [vmem:[%s2323 + $0x58] sm:$0xff]
        %v2336 = vld [vmem:[%s2323 + $0x60] sm:$0xff]
        %v2337 = vld [vmem:[%s2323 + $0x68] sm:$0xff]
        %v2338 = vld [vmem:[%s2323 + $0x70] sm:$0xff]
        %v2339 = vld [vmem:[%s2323 + $0x78] sm:$0xff]
        %s2340 = scalar_lea.vmem %s7, 384
        %v2341 = vld [vmem:[%s2340] sm:$0xff]
        %v2342 = vld [vmem:[%s2340 + $0x8] sm:$0xff]
        %v2343 = vld [vmem:[%s2340 + $0x10] sm:$0xff]
        %v2344 = vld [vmem:[%s2340 + $0x18] sm:$0xff]
        %v2345 = vld [vmem:[%s2340 + $0x20] sm:$0xff]
        %v2346 = vld [vmem:[%s2340 + $0x28] sm:$0xff]
        %v2347 = vld [vmem:[%s2340 + $0x30] sm:$0xff]
        %v2348 = vld [vmem:[%s2340 + $0x38] sm:$0xff]
        %v2349 = vld [vmem:[%s2340 + $0x40] sm:$0xff]
        %v2350 = vld [vmem:[%s2340 + $0x48] sm:$0xff]
        %v2351 = vld [vmem:[%s2340 + $0x50] sm:$0xff]
        %v2352 = vld [vmem:[%s2340 + $0x58] sm:$0xff]
        %v2353 = vld [vmem:[%s2340 + $0x60] sm:$0xff]
        %v2354 = vld [vmem:[%s2340 + $0x68] sm:$0xff]
        %v2355 = vld [vmem:[%s2340 + $0x70] sm:$0xff]
        %v2356 = vld [vmem:[%s2340 + $0x78] sm:$0xff]
        %2357 = vmatprep.subr.mxu0 0.0
        %2358 = vmatpush1.msra.mxu0 %v2356
        %2359 = vmatprep.subr.mxu0 0.0
        %2360 = vmatpush1.msra.mxu0 %v2355
        %2361 = vmatprep.subr.mxu0 0.0
        %2362 = vmatpush1.msra.mxu0 %v2354
        %2363 = vmatprep.subr.mxu0 0.0
        %2364 = vmatpush1.msra.mxu0 %v2353
        %2365 = vmatprep.subr.mxu0 0.0
        %2366 = vmatpush1.msra.mxu0 %v2352
        %2367 = vmatprep.subr.mxu0 0.0
        %2368 = vmatpush1.msra.mxu0 %v2351
        %2369 = vmatprep.subr.mxu0 0.0
        %2370 = vmatpush1.msra.mxu0 %v2350
        %2371 = vmatprep.subr.mxu0 0.0
        %2372 = vmatpush1.msra.mxu0 %v2349
        %2373 = vmatprep.subr.mxu0 0.0
        %2374 = vmatpush1.msra.mxu0 %v2348
        %2375 = vmatprep.subr.mxu0 0.0
        %2376 = vmatpush1.msra.mxu0 %v2347
        %2377 = vmatprep.subr.mxu0 0.0
        %2378 = vmatpush1.msra.mxu0 %v2346
        %2379 = vmatprep.subr.mxu0 0.0
        %2380 = vmatpush1.msra.mxu0 %v2345
        %2381 = vmatprep.subr.mxu0 0.0
        %2382 = vmatpush1.msra.mxu0 %v2344
        %2383 = vmatprep.subr.mxu0 0.0
        %2384 = vmatpush1.msra.mxu0 %v2343
        %2385 = vmatprep.subr.mxu0 0.0
        %2386 = vmatpush1.msra.mxu0 %v2342
        %2387 = vmatprep.subr.mxu0 0.0
        %2388 = vmatpush1.msra.mxu0 %v2341
        %2389 = vmatprep.subr.mxu0 0.0
        %2390 = vmatpush2.msra.mxu0 0.0
        %2391 = vmatprep.subr.mxu0 0.0
        %2392 = vmatpush2.msra.mxu0 0.0
        %2393 = vmatprep.subr.mxu0 0.0
        %2394 = vmatpush2.msra.mxu0 0.0
        %2395 = vmatprep.subr.mxu0 0.0
        %2396 = vmatpush2.msra.mxu0 0.0
        %2397 = vmatprep.subr.mxu0 0.0
        %2398 = vmatpush2.msra.mxu0 0.0
        %2399 = vmatprep.subr.mxu0 0.0
        %2400 = vmatpush2.msra.mxu0 0.0
        %2401 = vmatprep.subr.mxu0 0.0
        %2402 = vmatpush2.msra.mxu0 0.0
        %2403 = vmatprep.subr.mxu0 0.0
        %2404 = vmatpush2.msra.mxu0 0.0
        %2405 = vmatprep.subr.mxu0 0.0
        %2406 = vmatpush2.msra.mxu0 0.0
        %2407 = vmatprep.subr.mxu0 0.0
        %2408 = vmatpush2.msra.mxu0 0.0
        %2409 = vmatprep.subr.mxu0 0.0
        %2410 = vmatpush2.msra.mxu0 0.0
        %2411 = vmatprep.subr.mxu0 0.0
        %2412 = vmatpush2.msra.mxu0 0.0
        %2413 = vmatprep.subr.mxu0 0.0
        %2414 = vmatpush2.msra.mxu0 0.0
        %2415 = vmatprep.subr.mxu0 0.0
        %2416 = vmatpush2.msra.mxu0 0.0
        %2417 = vmatprep.subr.mxu0 0.0
        %2418 = vmatpush2.msra.mxu0 0.0
        %2419 = vmatprep.subr.mxu0 0.0
        %2420 = vmatpush2.msra.mxu0 0.0
        %2421 = vmatprep.mubr.f32.mxu0 0.0
        %2422 = vmatmul.mubr.f32.gmra.mxu0 %v2324
        %v2423 = vpop.f32.mrf.mxu0
        %v2424 = vadd.f32 0.0, %v2423
        %v2425 = vpop.f32.mrf.mxu0
        %2426 = vmatprep.mubr.f32.mxu0 0.0
        %2427 = vmatmul.mubr.f32.gmra.mxu0 %v2325
        %v2428 = vpop.f32.mrf.mxu0
        %v2429 = vadd.f32 0.0, %v2428
        %v2430 = vpop.f32.mrf.mxu0
        %2431 = vmatprep.mubr.f32.mxu0 0.0
        %2432 = vmatmul.mubr.f32.gmra.mxu0 %v2326
        %v2433 = vpop.f32.mrf.mxu0
        %v2434 = vadd.f32 0.0, %v2433
        %v2435 = vpop.f32.mrf.mxu0
        %2436 = vmatprep.mubr.f32.mxu0 0.0
        %2437 = vmatmul.mubr.f32.gmra.mxu0 %v2327
        %v2438 = vpop.f32.mrf.mxu0
        %v2439 = vadd.f32 0.0, %v2438
        %v2440 = vpop.f32.mrf.mxu0
        %2441 = vmatprep.mubr.f32.mxu0 0.0
        %2442 = vmatmul.mubr.f32.gmra.mxu0 %v2328
        %v2443 = vpop.f32.mrf.mxu0
        %v2444 = vadd.f32 0.0, %v2443
        %v2445 = vpop.f32.mrf.mxu0
        %2446 = vmatprep.mubr.f32.mxu0 0.0
        %2447 = vmatmul.mubr.f32.gmra.mxu0 %v2329
        %v2448 = vpop.f32.mrf.mxu0
        %v2449 = vadd.f32 0.0, %v2448
        %v2450 = vpop.f32.mrf.mxu0
        %2451 = vmatprep.mubr.f32.mxu0 0.0
        %2452 = vmatmul.mubr.f32.gmra.mxu0 %v2330
        %v2453 = vpop.f32.mrf.mxu0
        %v2454 = vadd.f32 0.0, %v2453
        %v2455 = vpop.f32.mrf.mxu0
        %2456 = vmatprep.mubr.f32.mxu0 0.0
        %2457 = vmatmul.mubr.f32.gmra.mxu0 %v2331
        %v2458 = vpop.f32.mrf.mxu0
        %v2459 = vadd.f32 0.0, %v2458
        %v2460 = vpop.f32.mrf.mxu0
        %2461 = vmatprep.mubr.f32.mxu0 0.0
        %2462 = vmatmul.mubr.f32.gmra.mxu0 %v2332
        %v2463 = vpop.f32.mrf.mxu0
        %v2464 = vadd.f32 0.0, %v2463
        %v2465 = vpop.f32.mrf.mxu0
        %2466 = vmatprep.mubr.f32.mxu0 0.0
        %2467 = vmatmul.mubr.f32.gmra.mxu0 %v2333
        %v2468 = vpop.f32.mrf.mxu0
        %v2469 = vadd.f32 0.0, %v2468
        %v2470 = vpop.f32.mrf.mxu0
        %2471 = vmatprep.mubr.f32.mxu0 0.0
        %2472 = vmatmul.mubr.f32.gmra.mxu0 %v2334
        %v2473 = vpop.f32.mrf.mxu0
        %v2474 = vadd.f32 0.0, %v2473
        %v2475 = vpop.f32.mrf.mxu0
        %2476 = vmatprep.mubr.f32.mxu0 0.0
        %2477 = vmatmul.mubr.f32.gmra.mxu0 %v2335
        %v2478 = vpop.f32.mrf.mxu0
        %v2479 = vadd.f32 0.0, %v2478
        %v2480 = vpop.f32.mrf.mxu0
        %2481 = vmatprep.mubr.f32.mxu0 0.0
        %2482 = vmatmul.mubr.f32.gmra.mxu0 %v2336
        %v2483 = vpop.f32.mrf.mxu0
        %v2484 = vadd.f32 0.0, %v2483
        %v2485 = vpop.f32.mrf.mxu0
        %2486 = vmatprep.mubr.f32.mxu0 0.0
        %2487 = vmatmul.mubr.f32.gmra.mxu0 %v2337
        %v2488 = vpop.f32.mrf.mxu0
        %v2489 = vadd.f32 0.0, %v2488
        %v2490 = vpop.f32.mrf.mxu0
        %2491 = vmatprep.mubr.f32.mxu0 0.0
        %2492 = vmatmul.mubr.f32.gmra.mxu0 %v2338
        %v2493 = vpop.f32.mrf.mxu0
        %v2494 = vadd.f32 0.0, %v2493
        %v2495 = vpop.f32.mrf.mxu0
        %2496 = vmatprep.mubr.f32.mxu0 0.0
        %2497 = vmatmul.mubr.f32.gmra.mxu0 %v2339
        %v2498 = vpop.f32.mrf.mxu0
        %v2499 = vadd.f32 0.0, %v2498
        %v2500 = vpop.f32.mrf.mxu0
        %2501 = vdwg.mxu0
        %v2502 = vadd.f32 %v2307, %v2424
        %v2503 = vadd.f32 %v2308, %v2429
        %v2504 = vadd.f32 %v2309, %v2434
        %v2505 = vadd.f32 %v2310, %v2439
        %v2506 = vadd.f32 %v2311, %v2444
        %v2507 = vadd.f32 %v2312, %v2449
        %v2508 = vadd.f32 %v2313, %v2454
        %v2509 = vadd.f32 %v2314, %v2459
        %v2510 = vadd.f32 %v2315, %v2464
        %v2511 = vadd.f32 %v2316, %v2469
        %v2512 = vadd.f32 %v2317, %v2474
        %v2513 = vadd.f32 %v2318, %v2479
        %v2514 = vadd.f32 %v2319, %v2484
        %v2515 = vadd.f32 %v2320, %v2489
        %v2516 = vadd.f32 %v2321, %v2494
        %v2517 = vadd.f32 %v2322, %v2499
        %s2518 = scalar_lea.vmem [#allocation2], 384
        %v2519 = vld [vmem:[%s2518] sm:$0xff]
        %v2520 = vld [vmem:[%s2518 + $0x8] sm:$0xff]
        %v2521 = vld [vmem:[%s2518 + $0x10] sm:$0xff]
        %v2522 = vld [vmem:[%s2518 + $0x18] sm:$0xff]
        %v2523 = vld [vmem:[%s2518 + $0x20] sm:$0xff]
        %v2524 = vld [vmem:[%s2518 + $0x28] sm:$0xff]
        %v2525 = vld [vmem:[%s2518 + $0x30] sm:$0xff]
        %v2526 = vld [vmem:[%s2518 + $0x38] sm:$0xff]
        %v2527 = vld [vmem:[%s2518 + $0x40] sm:$0xff]
        %v2528 = vld [vmem:[%s2518 + $0x48] sm:$0xff]
        %v2529 = vld [vmem:[%s2518 + $0x50] sm:$0xff]
        %v2530 = vld [vmem:[%s2518 + $0x58] sm:$0xff]
        %v2531 = vld [vmem:[%s2518 + $0x60] sm:$0xff]
        %v2532 = vld [vmem:[%s2518 + $0x68] sm:$0xff]
        %v2533 = vld [vmem:[%s2518 + $0x70] sm:$0xff]
        %v2534 = vld [vmem:[%s2518 + $0x78] sm:$0xff]
        %s2535 = scalar_lea.vmem %s7, 512
        %v2536 = vld [vmem:[%s2535] sm:$0xff]
        %v2537 = vld [vmem:[%s2535 + $0x8] sm:$0xff]
        %v2538 = vld [vmem:[%s2535 + $0x10] sm:$0xff]
        %v2539 = vld [vmem:[%s2535 + $0x18] sm:$0xff]
        %v2540 = vld [vmem:[%s2535 + $0x20] sm:$0xff]
        %v2541 = vld [vmem:[%s2535 + $0x28] sm:$0xff]
        %v2542 = vld [vmem:[%s2535 + $0x30] sm:$0xff]
        %v2543 = vld [vmem:[%s2535 + $0x38] sm:$0xff]
        %v2544 = vld [vmem:[%s2535 + $0x40] sm:$0xff]
        %v2545 = vld [vmem:[%s2535 + $0x48] sm:$0xff]
        %v2546 = vld [vmem:[%s2535 + $0x50] sm:$0xff]
        %v2547 = vld [vmem:[%s2535 + $0x58] sm:$0xff]
        %v2548 = vld [vmem:[%s2535 + $0x60] sm:$0xff]
        %v2549 = vld [vmem:[%s2535 + $0x68] sm:$0xff]
        %v2550 = vld [vmem:[%s2535 + $0x70] sm:$0xff]
        %v2551 = vld [vmem:[%s2535 + $0x78] sm:$0xff]
        %2552 = vmatprep.subr.mxu0 0.0
        %2553 = vmatpush1.msra.mxu0 %v2551
        %2554 = vmatprep.subr.mxu0 0.0
        %2555 = vmatpush1.msra.mxu0 %v2550
        %2556 = vmatprep.subr.mxu0 0.0
        %2557 = vmatpush1.msra.mxu0 %v2549
        %2558 = vmatprep.subr.mxu0 0.0
        %2559 = vmatpush1.msra.mxu0 %v2548
        %2560 = vmatprep.subr.mxu0 0.0
        %2561 = vmatpush1.msra.mxu0 %v2547
        %2562 = vmatprep.subr.mxu0 0.0
        %2563 = vmatpush1.msra.mxu0 %v2546
        %2564 = vmatprep.subr.mxu0 0.0
        %2565 = vmatpush1.msra.mxu0 %v2545
        %2566 = vmatprep.subr.mxu0 0.0
        %2567 = vmatpush1.msra.mxu0 %v2544
        %2568 = vmatprep.subr.mxu0 0.0
        %2569 = vmatpush1.msra.mxu0 %v2543
        %2570 = vmatprep.subr.mxu0 0.0
        %2571 = vmatpush1.msra.mxu0 %v2542
        %2572 = vmatprep.subr.mxu0 0.0
        %2573 = vmatpush1.msra.mxu0 %v2541
        %2574 = vmatprep.subr.mxu0 0.0
        %2575 = vmatpush1.msra.mxu0 %v2540
        %2576 = vmatprep.subr.mxu0 0.0
        %2577 = vmatpush1.msra.mxu0 %v2539
        %2578 = vmatprep.subr.mxu0 0.0
        %2579 = vmatpush1.msra.mxu0 %v2538
        %2580 = vmatprep.subr.mxu0 0.0
        %2581 = vmatpush1.msra.mxu0 %v2537
        %2582 = vmatprep.subr.mxu0 0.0
        %2583 = vmatpush1.msra.mxu0 %v2536
        %2584 = vmatprep.subr.mxu0 0.0
        %2585 = vmatpush2.msra.mxu0 0.0
        %2586 = vmatprep.subr.mxu0 0.0
        %2587 = vmatpush2.msra.mxu0 0.0
        %2588 = vmatprep.subr.mxu0 0.0
        %2589 = vmatpush2.msra.mxu0 0.0
        %2590 = vmatprep.subr.mxu0 0.0
        %2591 = vmatpush2.msra.mxu0 0.0
        %2592 = vmatprep.subr.mxu0 0.0
        %2593 = vmatpush2.msra.mxu0 0.0
        %2594 = vmatprep.subr.mxu0 0.0
        %2595 = vmatpush2.msra.mxu0 0.0
        %2596 = vmatprep.subr.mxu0 0.0
        %2597 = vmatpush2.msra.mxu0 0.0
        %2598 = vmatprep.subr.mxu0 0.0
        %2599 = vmatpush2.msra.mxu0 0.0
        %2600 = vmatprep.subr.mxu0 0.0
        %2601 = vmatpush2.msra.mxu0 0.0
        %2602 = vmatprep.subr.mxu0 0.0
        %2603 = vmatpush2.msra.mxu0 0.0
        %2604 = vmatprep.subr.mxu0 0.0
        %2605 = vmatpush2.msra.mxu0 0.0
        %2606 = vmatprep.subr.mxu0 0.0
        %2607 = vmatpush2.msra.mxu0 0.0
        %2608 = vmatprep.subr.mxu0 0.0
        %2609 = vmatpush2.msra.mxu0 0.0
        %2610 = vmatprep.subr.mxu0 0.0
        %2611 = vmatpush2.msra.mxu0 0.0
        %2612 = vmatprep.subr.mxu0 0.0
        %2613 = vmatpush2.msra.mxu0 0.0
        %2614 = vmatprep.subr.mxu0 0.0
        %2615 = vmatpush2.msra.mxu0 0.0
        %2616 = vmatprep.mubr.f32.mxu0 0.0
        %2617 = vmatmul.mubr.f32.gmra.mxu0 %v2519
        %v2618 = vpop.f32.mrf.mxu0
        %v2619 = vadd.f32 0.0, %v2618
        %v2620 = vpop.f32.mrf.mxu0
        %2621 = vmatprep.mubr.f32.mxu0 0.0
        %2622 = vmatmul.mubr.f32.gmra.mxu0 %v2520
        %v2623 = vpop.f32.mrf.mxu0
        %v2624 = vadd.f32 0.0, %v2623
        %v2625 = vpop.f32.mrf.mxu0
        %2626 = vmatprep.mubr.f32.mxu0 0.0
        %2627 = vmatmul.mubr.f32.gmra.mxu0 %v2521
        %v2628 = vpop.f32.mrf.mxu0
        %v2629 = vadd.f32 0.0, %v2628
        %v2630 = vpop.f32.mrf.mxu0
        %2631 = vmatprep.mubr.f32.mxu0 0.0
        %2632 = vmatmul.mubr.f32.gmra.mxu0 %v2522
        %v2633 = vpop.f32.mrf.mxu0
        %v2634 = vadd.f32 0.0, %v2633
        %v2635 = vpop.f32.mrf.mxu0
        %2636 = vmatprep.mubr.f32.mxu0 0.0
        %2637 = vmatmul.mubr.f32.gmra.mxu0 %v2523
        %v2638 = vpop.f32.mrf.mxu0
        %v2639 = vadd.f32 0.0, %v2638
        %v2640 = vpop.f32.mrf.mxu0
        %2641 = vmatprep.mubr.f32.mxu0 0.0
        %2642 = vmatmul.mubr.f32.gmra.mxu0 %v2524
        %v2643 = vpop.f32.mrf.mxu0
        %v2644 = vadd.f32 0.0, %v2643
        %v2645 = vpop.f32.mrf.mxu0
        %2646 = vmatprep.mubr.f32.mxu0 0.0
        %2647 = vmatmul.mubr.f32.gmra.mxu0 %v2525
        %v2648 = vpop.f32.mrf.mxu0
        %v2649 = vadd.f32 0.0, %v2648
        %v2650 = vpop.f32.mrf.mxu0
        %2651 = vmatprep.mubr.f32.mxu0 0.0
        %2652 = vmatmul.mubr.f32.gmra.mxu0 %v2526
        %v2653 = vpop.f32.mrf.mxu0
        %v2654 = vadd.f32 0.0, %v2653
        %v2655 = vpop.f32.mrf.mxu0
        %2656 = vmatprep.mubr.f32.mxu0 0.0
        %2657 = vmatmul.mubr.f32.gmra.mxu0 %v2527
        %v2658 = vpop.f32.mrf.mxu0
        %v2659 = vadd.f32 0.0, %v2658
        %v2660 = vpop.f32.mrf.mxu0
        %2661 = vmatprep.mubr.f32.mxu0 0.0
        %2662 = vmatmul.mubr.f32.gmra.mxu0 %v2528
        %v2663 = vpop.f32.mrf.mxu0
        %v2664 = vadd.f32 0.0, %v2663
        %v2665 = vpop.f32.mrf.mxu0
        %2666 = vmatprep.mubr.f32.mxu0 0.0
        %2667 = vmatmul.mubr.f32.gmra.mxu0 %v2529
        %v2668 = vpop.f32.mrf.mxu0
        %v2669 = vadd.f32 0.0, %v2668
        %v2670 = vpop.f32.mrf.mxu0
        %2671 = vmatprep.mubr.f32.mxu0 0.0
        %2672 = vmatmul.mubr.f32.gmra.mxu0 %v2530
        %v2673 = vpop.f32.mrf.mxu0
        %v2674 = vadd.f32 0.0, %v2673
        %v2675 = vpop.f32.mrf.mxu0
        %2676 = vmatprep.mubr.f32.mxu0 0.0
        %2677 = vmatmul.mubr.f32.gmra.mxu0 %v2531
        %v2678 = vpop.f32.mrf.mxu0
        %v2679 = vadd.f32 0.0, %v2678
        %v2680 = vpop.f32.mrf.mxu0
        %2681 = vmatprep.mubr.f32.mxu0 0.0
        %2682 = vmatmul.mubr.f32.gmra.mxu0 %v2532
        %v2683 = vpop.f32.mrf.mxu0
        %v2684 = vadd.f32 0.0, %v2683
        %v2685 = vpop.f32.mrf.mxu0
        %2686 = vmatprep.mubr.f32.mxu0 0.0
        %2687 = vmatmul.mubr.f32.gmra.mxu0 %v2533
        %v2688 = vpop.f32.mrf.mxu0
        %v2689 = vadd.f32 0.0, %v2688
        %v2690 = vpop.f32.mrf.mxu0
        %2691 = vmatprep.mubr.f32.mxu0 0.0
        %2692 = vmatmul.mubr.f32.gmra.mxu0 %v2534
        %v2693 = vpop.f32.mrf.mxu0
        %v2694 = vadd.f32 0.0, %v2693
        %v2695 = vpop.f32.mrf.mxu0
        %2696 = vdwg.mxu0
        %v2697 = vadd.f32 %v2502, %v2619
        %v2698 = vadd.f32 %v2503, %v2624
        %v2699 = vadd.f32 %v2504, %v2629
        %v2700 = vadd.f32 %v2505, %v2634
        %v2701 = vadd.f32 %v2506, %v2639
        %v2702 = vadd.f32 %v2507, %v2644
        %v2703 = vadd.f32 %v2508, %v2649
        %v2704 = vadd.f32 %v2509, %v2654
        %v2705 = vadd.f32 %v2510, %v2659
        %v2706 = vadd.f32 %v2511, %v2664
        %v2707 = vadd.f32 %v2512, %v2669
        %v2708 = vadd.f32 %v2513, %v2674
        %v2709 = vadd.f32 %v2514, %v2679
        %v2710 = vadd.f32 %v2515, %v2684
        %v2711 = vadd.f32 %v2516, %v2689
        %v2712 = vadd.f32 %v2517, %v2694
        %v2713 = vtanh.pop %v2697
        %v2714 = vtanh.pop %v2698
        %v2715 = vtanh.pop %v2699
        %v2716 = vtanh.pop %v2700
        %v2717 = vtanh.pop %v2701
        %v2718 = vtanh.pop %v2702
        %v2719 = vtanh.pop %v2703
        %v2720 = vtanh.pop %v2704
        %v2721 = vtanh.pop %v2705
        %v2722 = vtanh.pop %v2706
        %v2723 = vtanh.pop %v2707
        %v2724 = vtanh.pop %v2708
        %v2725 = vtanh.pop %v2709
        %v2726 = vtanh.pop %v2710
        %v2727 = vtanh.pop %v2711
        %v2728 = vtanh.pop %v2712
        %v2729 = vld [vmem:[%s9] sm:$0xff]
        %v2730 = vld [vmem:[%s9 + $0x8] sm:$0xff]
        %v2731 = vld [vmem:[%s9 + $0x10] sm:$0xff]
        %v2732 = vld [vmem:[%s9 + $0x18] sm:$0xff]
        %v2733 = vld [vmem:[%s9 + $0x20] sm:$0xff]
        %v2734 = vld [vmem:[%s9 + $0x28] sm:$0xff]
        %v2735 = vld [vmem:[%s9 + $0x30] sm:$0xff]
        %v2736 = vld [vmem:[%s9 + $0x38] sm:$0xff]
        %v2737 = vld [vmem:[%s9 + $0x40] sm:$0xff]
        %v2738 = vld [vmem:[%s9 + $0x48] sm:$0xff]
        %v2739 = vld [vmem:[%s9 + $0x50] sm:$0xff]
        %v2740 = vld [vmem:[%s9 + $0x58] sm:$0xff]
        %v2741 = vld [vmem:[%s9 + $0x60] sm:$0xff]
        %v2742 = vld [vmem:[%s9 + $0x68] sm:$0xff]
        %v2743 = vld [vmem:[%s9 + $0x70] sm:$0xff]
        %v2744 = vld [vmem:[%s9 + $0x78] sm:$0xff]
        %v2745 = vld [vmem:[%s10] sm:$0x1]
        %v2747 = vlaneseq
        %v2748 = vshrl.u32 %v2747, 7
        %v2749 = vsub.s32 0, %v2748
        %v2750 = vrot.slane %v2745, %v2749
        %2752 = vmatprep.subr.mxu0 0.0
        %2753 = vmatpush1.msra.mxu0 %v2744
        %2754 = vmatprep.subr.mxu0 0.0
        %2755 = vmatpush1.msra.mxu0 %v2743
        %2756 = vmatprep.subr.mxu0 0.0
        %2757 = vmatpush1.msra.mxu0 %v2742
        %2758 = vmatprep.subr.mxu0 0.0
        %2759 = vmatpush1.msra.mxu0 %v2741
        %2760 = vmatprep.subr.mxu0 0.0
        %2761 = vmatpush1.msra.mxu0 %v2740
        %2762 = vmatprep.subr.mxu0 0.0
        %2763 = vmatpush1.msra.mxu0 %v2739
        %2764 = vmatprep.subr.mxu0 0.0
        %2765 = vmatpush1.msra.mxu0 %v2738
        %2766 = vmatprep.subr.mxu0 0.0
        %2767 = vmatpush1.msra.mxu0 %v2737
        %2768 = vmatprep.subr.mxu0 0.0
        %2769 = vmatpush1.msra.mxu0 %v2736
        %2770 = vmatprep.subr.mxu0 0.0
        %2771 = vmatpush1.msra.mxu0 %v2735
        %2772 = vmatprep.subr.mxu0 0.0
        %2773 = vmatpush1.msra.mxu0 %v2734
        %2774 = vmatprep.subr.mxu0 0.0
        %2775 = vmatpush1.msra.mxu0 %v2733
        %2776 = vmatprep.subr.mxu0 0.0
        %2777 = vmatpush1.msra.mxu0 %v2732
        %2778 = vmatprep.subr.mxu0 0.0
        %2779 = vmatpush1.msra.mxu0 %v2731
        %2780 = vmatprep.subr.mxu0 0.0
        %2781 = vmatpush1.msra.mxu0 %v2730
        %2782 = vmatprep.subr.mxu0 0.0
        %2783 = vmatpush1.msra.mxu0 %v2729
        %2784 = vmatprep.subr.mxu0 0.0
        %2785 = vmatpush2.msra.mxu0 0.0
        %2786 = vmatprep.subr.mxu0 0.0
        %2787 = vmatpush2.msra.mxu0 0.0
        %2788 = vmatprep.subr.mxu0 0.0
        %2789 = vmatpush2.msra.mxu0 0.0
        %2790 = vmatprep.subr.mxu0 0.0
        %2791 = vmatpush2.msra.mxu0 0.0
        %2792 = vmatprep.subr.mxu0 0.0
        %2793 = vmatpush2.msra.mxu0 0.0
        %2794 = vmatprep.subr.mxu0 0.0
        %2795 = vmatpush2.msra.mxu0 0.0
        %2796 = vmatprep.subr.mxu0 0.0
        %2797 = vmatpush2.msra.mxu0 0.0
        %2798 = vmatprep.subr.mxu0 0.0
        %2799 = vmatpush2.msra.mxu0 0.0
        %2800 = vmatprep.subr.mxu0 0.0
        %2801 = vmatpush2.msra.mxu0 0.0
        %2802 = vmatprep.subr.mxu0 0.0
        %2803 = vmatpush2.msra.mxu0 0.0
        %2804 = vmatprep.subr.mxu0 0.0
        %2805 = vmatpush2.msra.mxu0 0.0
        %2806 = vmatprep.subr.mxu0 0.0
        %2807 = vmatpush2.msra.mxu0 0.0
        %2808 = vmatprep.subr.mxu0 0.0
        %2809 = vmatpush2.msra.mxu0 0.0
        %2810 = vmatprep.subr.mxu0 0.0
        %2811 = vmatpush2.msra.mxu0 0.0
        %2812 = vmatprep.subr.mxu0 0.0
        %2813 = vmatpush2.msra.mxu0 0.0
        %2814 = vmatprep.subr.mxu0 0.0
        %2815 = vmatpush2.msra.mxu0 0.0
        %2816 = vmatprep.mubr.f32.mxu0 0.0
        %2817 = vmatmul.mubr.f32.gmra.mxu0 %v2713
        %v2818 = vpop.f32.mrf.mxu0
        %v2819 = vadd.f32 %v2750, %v2818
        %v2820 = vpop.f32.mrf.mxu0
        %2821 = vmatprep.mubr.f32.mxu0 0.0
        %2822 = vmatmul.mubr.f32.gmra.mxu0 %v2714
        %v2823 = vpop.f32.mrf.mxu0
        %v2824 = vadd.f32 %v2750, %v2823
        %v2825 = vpop.f32.mrf.mxu0
        %2826 = vmatprep.mubr.f32.mxu0 0.0
        %2827 = vmatmul.mubr.f32.gmra.mxu0 %v2715
        %v2828 = vpop.f32.mrf.mxu0
        %v2829 = vadd.f32 %v2750, %v2828
        %v2830 = vpop.f32.mrf.mxu0
        %2831 = vmatprep.mubr.f32.mxu0 0.0
        %2832 = vmatmul.mubr.f32.gmra.mxu0 %v2716
        %v2833 = vpop.f32.mrf.mxu0
        %v2834 = vadd.f32 %v2750, %v2833
        %v2835 = vpop.f32.mrf.mxu0
        %2836 = vmatprep.mubr.f32.mxu0 0.0
        %2837 = vmatmul.mubr.f32.gmra.mxu0 %v2717
        %v2838 = vpop.f32.mrf.mxu0
        %v2839 = vadd.f32 %v2750, %v2838
        %v2840 = vpop.f32.mrf.mxu0
        %2841 = vmatprep.mubr.f32.mxu0 0.0
        %2842 = vmatmul.mubr.f32.gmra.mxu0 %v2718
        %v2843 = vpop.f32.mrf.mxu0
        %v2844 = vadd.f32 %v2750, %v2843
        %v2845 = vpop.f32.mrf.mxu0
        %2846 = vmatprep.mubr.f32.mxu0 0.0
        %2847 = vmatmul.mubr.f32.gmra.mxu0 %v2719
        %v2848 = vpop.f32.mrf.mxu0
        %v2849 = vadd.f32 %v2750, %v2848
        %v2850 = vpop.f32.mrf.mxu0
        %2851 = vmatprep.mubr.f32.mxu0 0.0
        %2852 = vmatmul.mubr.f32.gmra.mxu0 %v2720
        %v2853 = vpop.f32.mrf.mxu0
        %v2854 = vadd.f32 %v2750, %v2853
        %v2855 = vpop.f32.mrf.mxu0
        %2856 = vmatprep.mubr.f32.mxu0 0.0
        %2857 = vmatmul.mubr.f32.gmra.mxu0 %v2721
        %v2858 = vpop.f32.mrf.mxu0
        %v2859 = vadd.f32 %v2750, %v2858
        %v2860 = vpop.f32.mrf.mxu0
        %2861 = vmatprep.mubr.f32.mxu0 0.0
        %2862 = vmatmul.mubr.f32.gmra.mxu0 %v2722
        %v2863 = vpop.f32.mrf.mxu0
        %v2864 = vadd.f32 %v2750, %v2863
        %v2865 = vpop.f32.mrf.mxu0
        %2866 = vmatprep.mubr.f32.mxu0 0.0
        %2867 = vmatmul.mubr.f32.gmra.mxu0 %v2723
        %v2868 = vpop.f32.mrf.mxu0
        %v2869 = vadd.f32 %v2750, %v2868
        %v2870 = vpop.f32.mrf.mxu0
        %2871 = vmatprep.mubr.f32.mxu0 0.0
        %2872 = vmatmul.mubr.f32.gmra.mxu0 %v2724
        %v2873 = vpop.f32.mrf.mxu0
        %v2874 = vadd.f32 %v2750, %v2873
        %v2875 = vpop.f32.mrf.mxu0
        %2876 = vmatprep.mubr.f32.mxu0 0.0
        %2877 = vmatmul.mubr.f32.gmra.mxu0 %v2725
        %v2878 = vpop.f32.mrf.mxu0
        %v2879 = vadd.f32 %v2750, %v2878
        %v2880 = vpop.f32.mrf.mxu0
        %2881 = vmatprep.mubr.f32.mxu0 0.0
        %2882 = vmatmul.mubr.f32.gmra.mxu0 %v2726
        %v2883 = vpop.f32.mrf.mxu0
        %v2884 = vadd.f32 %v2750, %v2883
        %v2885 = vpop.f32.mrf.mxu0
        %2886 = vmatprep.mubr.f32.mxu0 0.0
        %2887 = vmatmul.mubr.f32.gmra.mxu0 %v2727
        %v2888 = vpop.f32.mrf.mxu0
        %v2889 = vadd.f32 %v2750, %v2888
        %v2890 = vpop.f32.mrf.mxu0
        %2891 = vmatprep.mubr.f32.mxu0 0.0
        %2892 = vmatmul.mubr.f32.gmra.mxu0 %v2728
        %v2893 = vpop.f32.mrf.mxu0
        %v2894 = vadd.f32 %v2750, %v2893
        %v2895 = vpop.f32.mrf.mxu0
        %2896 = vdwg.mxu0
        %2897 = vst [vmem:[%s11] sm:$0xff] %v2819
        %2898 = vst [vmem:[%s11 + $0x8] sm:$0xff] %v2824
        %2899 = vst [vmem:[%s11 + $0x10] sm:$0xff] %v2829
        %2900 = vst [vmem:[%s11 + $0x18] sm:$0xff] %v2834
        %2901 = vst [vmem:[%s11 + $0x20] sm:$0xff] %v2839
        %2902 = vst [vmem:[%s11 + $0x28] sm:$0xff] %v2844
        %2903 = vst [vmem:[%s11 + $0x30] sm:$0xff] %v2849
        %2904 = vst [vmem:[%s11 + $0x38] sm:$0xff] %v2854
        %2905 = vst [vmem:[%s11 + $0x40] sm:$0xff] %v2859
        %2906 = vst [vmem:[%s11 + $0x48] sm:$0xff] %v2864
        %2907 = vst [vmem:[%s11 + $0x50] sm:$0xff] %v2869
        %2908 = vst [vmem:[%s11 + $0x58] sm:$0xff] %v2874
        %2909 = vst [vmem:[%s11 + $0x60] sm:$0xff] %v2879
        %2910 = vst [vmem:[%s11 + $0x68] sm:$0xff] %v2884
        %2911 = vst [vmem:[%s11 + $0x70] sm:$0xff] %v2889
        %2912 = vst [vmem:[%s11 + $0x78] sm:$0xff] %v2894
      $region76: #{sigat_forward.1} parent=63 // pred_fallthru
        _
      // Predicated region
      $region77: #{sigat_forward.1} parent=63 // pred_check
        %p2913 = pneg %p307
      $region78: #{sigat_forward.1} parent=63 // pred_check_branch
        %2915 = sbr.rel (%p2913) target = $region80
      $region79: #{sigat_forward.1} parent=63 // pred_region
        _
      $region80: #{sigat_forward.1} parent=63 // pred_fallthru
        _
      // Predicated region
      $region81: #{sigat_forward.1} parent=63 // pred_check
        %p2916 = pneg %p307
      $region82: #{sigat_forward.1} parent=63 // pred_check_branch
        %2918 = sbr.rel (%p2916) target = $region84
      $region83: #{sigat_forward.1} parent=63 // pred_region
        _
      $region84: #{sigat_forward.1} parent=63 // pred_fallthru
        _
    $region64: #{sigat_forward.1} parent=5 // pred_fallthru
      _
    %p2919 = scmp.le.s32.totalorder 2, %s17
    // Predicated region
    $region85: #{sigat_forward.1} parent=5 // pred_check
      %p2920 = pneg %p2919
    $region86: #{sigat_forward.1} parent=5 // pred_check_branch
      %2922 = sbr.rel (%p2920) target = $region88
    $region87: #{sigat_forward.1} parent=5 // pred_region
      %s2923 = ssub.s32 %s17, 2
    $region88: #{sigat_forward.1} parent=5 // pred_fallthru
      _
  $region6: #{sigat_forward.1} parent=0 // loop_footer
    %s21 = sadd.s32 1, %s17
  $region7: #{sigat_forward.1} parent=0 // loop_footer_branch
    %16 = sbr.rel target = $region3
  $region8: #{sigat_forward.1} parent=0 // loop_exit
    _

</llo_original>
